<compile_context>
chip_gen: v6e
topology: v6e:2x2x1
jax: 0.10.0
libtpu: 0.0.40
codegen_flags: <defaults>
</compile_context>

<pallas_src>
import math
from functools import partial

import jax
import jax.numpy as jnp
from jax import lax
from jax.experimental import pallas as pl
from jax.experimental.pallas import tpu as pltpu


# ----------------------------- Pallas kernels ------------------------------

def _qkv_rope_cache_kernel(pos_ref, x_ref, anorm_ref, wq_ref, wk_ref, wv_ref,
                           pq_ref, pk_ref, cq_ref, sq_ref, ck_ref, sk_ref,
                           kc_in_ref, vc_in_ref,
                           q_out_ref, k_slot_ref, v_slot_ref, *, eps):
    # pos is consumed only by the index maps (cos/sin row, cache slot).
    del pos_ref, kc_in_ref, vc_in_ref

    x = x_ref[...].astype(jnp.float32)                       # (B, D)
    w = anorm_ref[...].astype(jnp.float32)                   # (1, D)
    xn = (x * lax.rsqrt(jnp.mean(x * x, axis=-1, keepdims=True) + eps)) * w
    xn_b = xn.astype(wq_ref.dtype)                           # bf16 for the MXU

    dn = (((1,), (0,)), ((), ()))                            # x @ W  (W is (Din, Dout))
    xq = lax.dot_general(xn_b, wq_ref[...], dn, preferred_element_type=jnp.float32)
    xk = lax.dot_general(xn_b, wk_ref[...], dn, preferred_element_type=jnp.float32)
    xv = lax.dot_general(xn_b, wv_ref[...], dn, preferred_element_type=jnp.float32)

    # Interleaved-pair RoPE: out = x*cos + (x @ P_swap) * sin_signed, where
    # P_swap swaps (2i, 2i+1) and sin_signed = (-sin_i, +sin_i) interleaved.
    cq = cq_ref[0]                                           # (1, NQ)
    sq = sq_ref[0]
    ck = ck_ref[0]                                           # (1, NK)
    sk = sk_ref[0]
    xq_sw = lax.dot_general(xq, pq_ref[...], dn, preferred_element_type=jnp.float32)
    xk_sw = lax.dot_general(xk, pk_ref[...], dn, preferred_element_type=jnp.float32)
    xq_rot = xq * cq + xq_sw * sq
    xk_rot = xk * ck + xk_sw * sk

    q_out_ref[...] = xq_rot.astype(q_out_ref.dtype)          # (B, NQ) lane-dense
    # Cache slot write: refs are the (1, max_batch, NK) block at position `pos`
    # of the aliased caches -> only this slot hits HBM.
    k_slot_ref[0] = xk_rot.astype(k_slot_ref.dtype)
    v_slot_ref[0] = xv.astype(v_slot_ref.dtype)


def _attn_ffn_kernel(pos_ref, x_ref, q_ref, kc_ref, vc_ref, wo_ref, fnorm_ref,
                     w1_ref, w3_ref, w2_ref, o_ref,
                     *, n_heads, n_kv_heads, head_dim, scale, eps):
    pos = pos_ref[0]
    x = x_ref[...].astype(jnp.float32)                       # (B, D)  residual input
    q = q_ref[...]                                           # (B, H*hd) f32
    k = kc_ref[...]                                          # (MS, MB * KVH*hd) f32
    v = vc_ref[...]
    wo = wo_ref[...]                                         # (H*hd, D) bf16

    batch = x.shape[0]
    max_seq = k.shape[0]
    nk = n_kv_heads * head_dim
    n_rep = n_heads // n_kv_heads
    valid = lax.broadcasted_iota(jnp.int32, (1, max_seq), 1) <= pos

    # GQA attention, fully unrolled over (batch, head); K/V are read once from
    # the un-repeated cache and sliced per KV group (no HBM repeat/transpose).
    rows = []
    for b in range(batch):
        acc = jnp.zeros((1, x.shape[1]), jnp.float32)
        for h in range(n_heads):
            g = h // n_rep
            qh = q[b:b + 1, h * head_dim:(h + 1) * head_dim]          # (1, hd)
            col = b * nk + g * head_dim
            kg = k[:, col:col + head_dim]                             # (MS, hd)
            vg = v[:, col:col + head_dim]
            s = lax.dot_general(qh, kg, (((1,), (1,)), ((), ())),
                                preferred_element_type=jnp.float32) * scale
            s = jnp.where(valid, s, -1e30)
            p = jnp.exp(s - jnp.max(s, axis=-1, keepdims=True))
            p = p * pl.reciprocal(jnp.sum(p, axis=-1, keepdims=True), approx=True)
            oh = lax.dot_general(p, vg, (((1,), (0,)), ((), ())),
                                 preferred_element_type=jnp.float32)  # (1, hd)
            wo_h = wo[h * head_dim:(h + 1) * head_dim, :]             # (hd, D)
            acc = acc + lax.dot_general(oh.astype(wo_h.dtype), wo_h,
                                        (((1,), (0,)), ((), ())),
                                        preferred_element_type=jnp.float32)
        rows.append(acc)
    h1 = x + jnp.concatenate(rows, axis=0)                            # (B, D)

    # Fused SwiGLU FFN with its RMSNorm and the second residual.
    fw = fnorm_ref[...].astype(jnp.float32)
    hn = (h1 * lax.rsqrt(jnp.mean(h1 * h1, axis=-1, keepdims=True) + eps)) * fw
    hn_b = hn.astype(w1_ref.dtype)
    dn = (((1,), (0,)), ((), ()))
    a1 = lax.dot_general(hn_b, w1_ref[...], dn, preferred_element_type=jnp.float32)
    a3 = lax.dot_general(hn_b, w3_ref[...], dn, preferred_element_type=jnp.float32)
    swish = a1 * pl.reciprocal(1.0 + jnp.exp(-a1), approx=True)       # silu
    act = (swish * a3).astype(w2_ref.dtype)
    ffn = lax.dot_general(act, w2_ref[...], dn, preferred_element_type=jnp.float32)
    o_ref[...] = (h1 + ffn).astype(o_ref.dtype)


def _final_norm_logits_kernel(x_ref, nw_ref, wout_ref, o_ref, *, eps):
    x = x_ref[...].astype(jnp.float32)
    w = nw_ref[...].astype(jnp.float32)
    xn = (x * lax.rsqrt(jnp.mean(x * x, axis=-1, keepdims=True) + eps)) * w
    o_ref[...] = lax.dot_general(xn.astype(wout_ref.dtype), wout_ref[...],
                                 (((1,), (0,)), ((), ())),
                                 preferred_element_type=jnp.float32)


# ----------------------------- Pallas wrappers ------------------------------

def qkv_rope_cache(pos, x, lp, rope, kc, vc, cfg):
    B, D = x.shape
    H, KVH = cfg["n_heads"], cfg["n_kv_heads"]
    hd = D // H
    NQ, NK = H * hd, KVH * hd
    MS, MB = cfg["max_seq_len"], cfg["max_batch_size"]
    eps = cfg["norm_eps"]

    grid_spec = pltpu.PrefetchScalarGridSpec(
        num_scalar_prefetch=1,
        grid=(1,),
        in_specs=[
            pl.BlockSpec((B, D), lambda i, p: (0, 0)),                 # x
            pl.BlockSpec((1, D), lambda i, p: (0, 0)),                 # attn norm
            pl.BlockSpec((D, NQ), lambda i, p: (0, 0)),                # wq (Din, Dout)
            pl.BlockSpec((D, NK), lambda i, p: (0, 0)),                # wk
            pl.BlockSpec((D, NK), lambda i, p: (0, 0)),                # wv
            pl.BlockSpec((NQ, NQ), lambda i, p: (0, 0)),               # pair-swap perm (q)
            pl.BlockSpec((NK, NK), lambda i, p: (0, 0)),               # pair-swap perm (k)
            pl.BlockSpec((1, 1, NQ), lambda i, p: (p[0], 0, 0)),       # cos row at pos
            pl.BlockSpec((1, 1, NQ), lambda i, p: (p[0], 0, 0)),       # sin row at pos
            pl.BlockSpec((1, 1, NK), lambda i, p: (p[0], 0, 0)),
            pl.BlockSpec((1, 1, NK), lambda i, p: (p[0], 0, 0)),
            pl.BlockSpec((1, MB, NK), lambda i, p: (p[0], 0, 0)),      # k cache slot (aliased)
            pl.BlockSpec((1, MB, NK), lambda i, p: (p[0], 0, 0)),      # v cache slot (aliased)
        ],
        out_specs=[
            pl.BlockSpec((B, NQ), lambda i, p: (0, 0)),                # rotated q
            pl.BlockSpec((1, MB, NK), lambda i, p: (p[0], 0, 0)),      # k cache (slot write)
            pl.BlockSpec((1, MB, NK), lambda i, p: (p[0], 0, 0)),      # v cache (slot write)
        ],
    )
    return pl.pallas_call(
        partial(_qkv_rope_cache_kernel, eps=eps),
        grid_spec=grid_spec,
        out_shape=(
            jax.ShapeDtypeStruct((B, NQ), jnp.float32),
            jax.ShapeDtypeStruct(kc.shape, kc.dtype),
            jax.ShapeDtypeStruct(vc.shape, vc.dtype),
        ),
        # Caches are updated in place (only the `pos` slot is written).
        input_output_aliases={12: 1, 13: 2},
    )(pos, x, lp["attn_norm"], lp["wq"], lp["wk"], lp["wv"],
      rope["perm_q"], rope["perm_k"],
      rope["cos_q"], rope["sin_q"], rope["cos_k"], rope["sin_k"],
      kc, vc)


def attn_ffn(pos, x, xq, k2, v2, lp, cfg):
    B, D = x.shape
    H, KVH = cfg["n_heads"], cfg["n_kv_heads"]
    hd = D // H
    NQ = H * hd
    MS = cfg["max_seq_len"]
    MBNK = k2.shape[1]
    Hid = lp["w1"].shape[1]
    eps = cfg["norm_eps"]
    scale = 1.0 / math.sqrt(hd)

    grid_spec = pltpu.PrefetchScalarGridSpec(
        num_scalar_prefetch=1,
        grid=(1,),
        in_specs=[
            pl.BlockSpec((B, D), lambda i, p: (0, 0)),        # residual input
            pl.BlockSpec((B, NQ), lambda i, p: (0, 0)),       # rotated q
            pl.BlockSpec((MS, MBNK), lambda i, p: (0, 0)),    # k cache (flat view)
            pl.BlockSpec((MS, MBNK), lambda i, p: (0, 0)),    # v cache (flat view)
            pl.BlockSpec((NQ, D), lambda i, p: (0, 0)),       # wo
            pl.BlockSpec((1, D), lambda i, p: (0, 0)),        # ffn norm
            pl.BlockSpec((D, Hid), lambda i, p: (0, 0)),      # w1
            pl.BlockSpec((D, Hid), lambda i, p: (0, 0)),      # w3
            pl.BlockSpec((Hid, D), lambda i, p: (0, 0)),      # w2
        ],
        out_specs=pl.BlockSpec((B, D), lambda i, p: (0, 0)),
    )
    return pl.pallas_call(
        partial(_attn_ffn_kernel, n_heads=H, n_kv_heads=KVH, head_dim=hd,
                scale=scale, eps=eps),
        grid_spec=grid_spec,
        out_shape=jax.ShapeDtypeStruct((B, D), x.dtype),
    )(pos, x, xq, k2, v2, lp["wo"], lp["ffn_norm"], lp["w1"], lp["w3"], lp["w2"])


def final_norm_logits(x, norm_w, wout, eps):
    B, D = x.shape
    V = wout.shape[1]
    return pl.pallas_call(
        partial(_final_norm_logits_kernel, eps=eps),
        out_shape=jax.ShapeDtypeStruct((B, V), jnp.float32),
        grid=(1,),
        in_specs=[pl.BlockSpec((B, D), lambda i: (0, 0)),
                  pl.BlockSpec((1, D), lambda i: (0, 0)),
                  pl.BlockSpec((D, V), lambda i: (0, 0))],
        out_specs=pl.BlockSpec((B, V), lambda i: (0, 0)),
    )(x, norm_w, wout)


# ------------------------------- forward ------------------------------------

def transformer_forward(params, tokens, pos, caches, cfg):
    B, S = tokens.shape
    # Token embedding gather kept in plain JAX (tiny one-token lookup).
    h = params["tok_emb"][tokens[:, 0]]                      # (B, D) f32
    rope = params["rope"]

    new_caches = []
    for lp, (kc, vc) in zip(params["layers"], caches):
        xq, kc, vc = qkv_rope_cache(pos, h, lp, rope, kc, vc, cfg)
        MS, MB, NK = kc.shape
        # Free HBM-level reshape: kernel 2 reads the cache as a lane-dense
        # (max_seq, max_batch * n_kv * head_dim) slab.
        h = attn_ffn(pos, h, xq,
                     kc.reshape(MS, MB * NK), vc.reshape(MS, MB * NK), lp, cfg)
        new_caches.append((kc, vc))

    logits = final_norm_logits(h, params["norm_w"], params["output_w"],
                               cfg["norm_eps"])
    return logits.reshape(B, 1, -1), new_caches


# ------------------------------ parameters ----------------------------------

def init_params(key, cfg):
    D, H, KVH = cfg["dim"], cfg["n_heads"], cfg["n_kv_heads"]
    hd = D // H
    NQ, NK = H * hd, KVH * hd
    V, Hid, MS = cfg["vocab_size"], cfg["hidden_dim"], cfg["max_seq_len"]

    def nrm(k, shape, scale=0.02, dtype=jnp.bfloat16):
        return (jax.random.normal(k, shape, jnp.float32) * scale).astype(dtype)

    keys = jax.random.split(key, 2 + cfg["n_layers"])

    # RoPE tables in "interleaved pair" form + pair-swap permutation matrices.
    inv = 1.0 / (10000.0 ** (jnp.arange(0, hd, 2, dtype=jnp.float32) / hd))
    m = jnp.arange(2 * MS, dtype=jnp.float32)
    freqs = jnp.outer(m, inv)                                # (2MS, hd//2)
    cos, sin = jnp.cos(freqs), jnp.sin(freqs)
    cos_pair = jnp.repeat(cos, 2, axis=-1)                   # (c0,c0,c1,c1,...)
    sin_pair = jnp.stack([-sin, sin], axis=-1).reshape(2 * MS, hd)  # (-s0,+s0,...)
    rope = {
        "cos_q": jnp.tile(cos_pair, (1, H)).reshape(2 * MS, 1, NQ),
        "sin_q": jnp.tile(sin_pair, (1, H)).reshape(2 * MS, 1, NQ),
        "cos_k": jnp.tile(cos_pair, (1, KVH)).reshape(2 * MS, 1, NK),
        "sin_k": jnp.tile(sin_pair, (1, KVH)).reshape(2 * MS, 1, NK),
        "perm_q": jnp.eye(NQ, dtype=jnp.float32)[jnp.bitwise_xor(jnp.arange(NQ), 1)],
        "perm_k": jnp.eye(NK, dtype=jnp.float32)[jnp.bitwise_xor(jnp.arange(NK), 1)],
    }

    params = {
        "tok_emb": jax.random.normal(keys[0], (V, D), jnp.float32),
        "output_w": nrm(keys[1], (D, V)),                    # pre-transposed, bf16
        "norm_w": jnp.ones((1, D), jnp.float32),
        "rope": rope,
        "layers": [],
    }
    for i in range(cfg["n_layers"]):
        lk = jax.random.split(keys[2 + i], 7)
        params["layers"].append({
            "wq": nrm(lk[0], (D, NQ)),
            "wk": nrm(lk[1], (D, NK)),
            "wv": nrm(lk[2], (D, NK)),
            "wo": nrm(lk[3], (NQ, D)),
            "w1": nrm(lk[4], (D, Hid)),
            "w2": nrm(lk[5], (Hid, D)),
            "w3": nrm(lk[6], (D, Hid)),
            "attn_norm": jnp.ones((1, D), jnp.float32),
            "ffn_norm": jnp.ones((1, D), jnp.float32),
        })
    return params


# --------------------------------- main --------------------------------------

if __name__ == "__main__":
    dim, n_heads, n_kv_heads = 64, 4, 2
    multiple_of = 32
    hidden_dim = 4 * dim
    hidden_dim = int(2 * hidden_dim / 3)
    hidden_dim = multiple_of * ((hidden_dim + multiple_of - 1) // multiple_of)  # 192

    batch = 2
    cfg = dict(
        dim=dim, n_layers=2, n_heads=n_heads, n_kv_heads=n_kv_heads,
        vocab_size=128, hidden_dim=hidden_dim, norm_eps=1e-5,
        max_batch_size=batch, max_seq_len=16,
    )
    head_dim = dim // n_heads
    NK = n_kv_heads * head_dim

    key = jax.random.PRNGKey(0)
    pkey, tkey = jax.random.split(key)
    params = init_params(pkey, cfg)

    tokens = jax.random.randint(tkey, (batch, 1), 0, cfg["vocab_size"])

    # KV caches, layout (max_seq, max_batch, n_kv_heads * head_dim).
    caches = [
        (jnp.zeros((cfg["max_seq_len"], cfg["max_batch_size"], NK), jnp.float32),
         jnp.zeros((cfg["max_seq_len"], cfg["max_batch_size"], NK), jnp.float32))
        for _ in range(cfg["n_layers"])
    ]

    fwd = jax.jit(partial(transformer_forward, cfg=cfg), donate_argnums=(3,))

    # Two decode steps reuse the same compiled program: `pos` is a traced (1,)
    # int32 and all cache/attention blocks have fixed max_seq shapes.
    logits = None
    for start_pos in (3, 4):
        pos = jnp.array([start_pos], dtype=jnp.int32)
        logits, caches = fwd(params, tokens, pos, caches)
    logits = jax.block_until_ready(logits)

    assert logits.shape == (batch, 1, cfg["vocab_size"])
    assert logits.dtype == jnp.float32
    assert bool(jnp.all(jnp.isfinite(logits)))
    print("KERNEL_OK")
</pallas_src>

<mosaic_0001>
module attributes {stable_mosaic.version = 11 : i64} {
  func.func @_qkv_rope_cache_kernel(%arg0: i32, %arg1: memref<1xi32, #tpu.memory_space<smem>>, %arg2: memref<2x64xf32, #tpu.memory_space<vmem>>, %arg3: memref<1x64xf32, #tpu.memory_space<vmem>>, %arg4: memref<64x64xbf16, #tpu.memory_space<vmem>>, %arg5: memref<64x32xbf16, #tpu.memory_space<vmem>>, %arg6: memref<64x32xbf16, #tpu.memory_space<vmem>>, %arg7: memref<64x64xf32, #tpu.memory_space<vmem>>, %arg8: memref<32x32xf32, #tpu.memory_space<vmem>>, %arg9: memref<1x1x64xf32, #tpu.memory_space<vmem>>, %arg10: memref<1x1x64xf32, #tpu.memory_space<vmem>>, %arg11: memref<1x1x32xf32, #tpu.memory_space<vmem>>, %arg12: memref<1x1x32xf32, #tpu.memory_space<vmem>>, %arg13: memref<1x2x32xf32, #tpu.memory_space<vmem>>, %arg14: memref<1x2x32xf32, #tpu.memory_space<vmem>>, %arg15: memref<2x64xf32, #tpu.memory_space<vmem>>, %arg16: memref<1x2x32xf32, #tpu.memory_space<vmem>>, %arg17: memref<1x2x32xf32, #tpu.memory_space<vmem>>) attributes {dimension_semantics = [#tpu.dimension_semantics<arbitrary>], iteration_bounds = array<i64: 1>, scalar_prefetch = 1 : i64, scratch_operands = 0 : i64, tpu.core_type = #tpu.core_type<tc>, window_params = [{pipeline_mode = #tpu.pipeline_mode<synchronous>, transform_indices = @transform_0, window_bounds = array<i64: 2, 64>}, {pipeline_mode = #tpu.pipeline_mode<synchronous>, transform_indices = @transform_1, window_bounds = array<i64: 1, 64>}, {pipeline_mode = #tpu.pipeline_mode<synchronous>, transform_indices = @transform_2, window_bounds = array<i64: 64, 64>}, {pipeline_mode = #tpu.pipeline_mode<synchronous>, transform_indices = @transform_3, window_bounds = array<i64: 64, 32>}, {pipeline_mode = #tpu.pipeline_mode<synchronous>, transform_indices = @transform_4, window_bounds = array<i64: 64, 32>}, {pipeline_mode = #tpu.pipeline_mode<synchronous>, transform_indices = @transform_5, window_bounds = array<i64: 64, 64>}, {pipeline_mode = #tpu.pipeline_mode<synchronous>, transform_indices = @transform_6, window_bounds = array<i64: 32, 32>}, {transform_indices = @transform_7, window_bounds = array<i64: 1, 1, 64>}, {transform_indices = @transform_8, window_bounds = array<i64: 1, 1, 64>}, {transform_indices = @transform_9, window_bounds = array<i64: 1, 1, 32>}, {transform_indices = @transform_10, window_bounds = array<i64: 1, 1, 32>}, {transform_indices = @transform_11, window_bounds = array<i64: 1, 2, 32>}, {transform_indices = @transform_12, window_bounds = array<i64: 1, 2, 32>}, {pipeline_mode = #tpu.pipeline_mode<synchronous>, transform_indices = @transform_13, window_bounds = array<i64: 2, 64>}, {transform_indices = @transform_14, window_bounds = array<i64: 1, 2, 32>}, {transform_indices = @transform_15, window_bounds = array<i64: 1, 2, 32>}]} {
    %c0 = arith.constant 0 : index
    %c0_0 = arith.constant 0 : index
    %0 = vector.load %arg2[%c0, %c0_0] : memref<2x64xf32, #tpu.memory_space<vmem>>, vector<2x64xf32>
    %c0_1 = arith.constant 0 : index
    %c0_2 = arith.constant 0 : index
    %1 = vector.load %arg3[%c0_1, %c0_2] : memref<1x64xf32, #tpu.memory_space<vmem>>, vector<1x64xf32>
    %2 = arith.mulf %0, %0 : vector<2x64xf32>
    %cst = arith.constant dense<0.000000e+00> : vector<2xf32>
    %3 = vector.multi_reduction <add>, %2, %cst [1] : vector<2x64xf32> to vector<2xf32>
    %4 = vector.shape_cast %3 : vector<2xf32> to vector<2x1xf32>
    %cst_3 = arith.constant 6.400000e+01 : f32
    %5 = vector.broadcast %cst_3 : f32 to vector<2x1xf32>
    %6 = arith.divf %4, %5 : vector<2x1xf32>
    %cst_4 = arith.constant 9.99999974E-6 : f32
    %7 = vector.broadcast %cst_4 : f32 to vector<2x1xf32>
    %8 = arith.addf %6, %7 : vector<2x1xf32>
    %9 = math.rsqrt %8 : vector<2x1xf32>
    %10 = vector.broadcast %9 : vector<2x1xf32> to vector<2x64xf32>
    %11 = arith.mulf %0, %10 : vector<2x64xf32>
    %12 = vector.broadcast %1 : vector<1x64xf32> to vector<2x64xf32>
    %13 = arith.mulf %11, %12 : vector<2x64xf32>
    %14 = arith.truncf %13 : vector<2x64xf32> to vector<2x64xbf16>
    %c0_5 = arith.constant 0 : index
    %c0_6 = arith.constant 0 : index
    %15 = vector.load %arg4[%c0_5, %c0_6] : memref<64x64xbf16, #tpu.memory_space<vmem>>, vector<64x64xbf16>
    %cst_7 = arith.constant dense<0.000000e+00> : vector<2x64xf32>
    %16 = tpu.matmul %14, %15, %cst_7 {dimension_numbers = #tpu.dot_dimension_numbers<[1], [0], [0], [1], [0, 0, 1, 1], [], []>} : vector<2x64xbf16>, vector<64x64xbf16>, vector<2x64xf32> -> vector<2x64xf32>
    %c0_8 = arith.constant 0 : index
    %c0_9 = arith.constant 0 : index
    %17 = vector.load %arg5[%c0_8, %c0_9] : memref<64x32xbf16, #tpu.memory_space<vmem>>, vector<64x32xbf16>
    %cst_10 = arith.constant dense<0.000000e+00> : vector<2x32xf32>
    %18 = tpu.matmul %14, %17, %cst_10 {dimension_numbers = #tpu.dot_dimension_numbers<[1], [0], [0], [1], [0, 0, 1, 1], [], []>} : vector<2x64xbf16>, vector<64x32xbf16>, vector<2x32xf32> -> vector<2x32xf32>
    %c0_11 = arith.constant 0 : index
    %c0_12 = arith.constant 0 : index
    %19 = vector.load %arg6[%c0_11, %c0_12] : memref<64x32xbf16, #tpu.memory_space<vmem>>, vector<64x32xbf16>
    %cst_13 = arith.constant dense<0.000000e+00> : vector<2x32xf32>
    %20 = tpu.matmul %14, %19, %cst_13 {dimension_numbers = #tpu.dot_dimension_numbers<[1], [0], [0], [1], [0, 0, 1, 1], [], []>} : vector<2x64xbf16>, vector<64x32xbf16>, vector<2x32xf32> -> vector<2x32xf32>
    %c0_14 = arith.constant 0 : index
    %c0_15 = arith.constant 0 : index
    %c0_16 = arith.constant 0 : index
    %21 = vector.load %arg9[%c0_14, %c0_15, %c0_16] : memref<1x1x64xf32, #tpu.memory_space<vmem>>, vector<1x1x64xf32>
    %22 = vector.shape_cast %21 : vector<1x1x64xf32> to vector<1x64xf32>
    %c0_17 = arith.constant 0 : index
    %c0_18 = arith.constant 0 : index
    %c0_19 = arith.constant 0 : index
    %23 = vector.load %arg10[%c0_17, %c0_18, %c0_19] : memref<1x1x64xf32, #tpu.memory_space<vmem>>, vector<1x1x64xf32>
    %24 = vector.shape_cast %23 : vector<1x1x64xf32> to vector<1x64xf32>
    %c0_20 = arith.constant 0 : index
    %c0_21 = arith.constant 0 : index
    %c0_22 = arith.constant 0 : index
    %25 = vector.load %arg11[%c0_20, %c0_21, %c0_22] : memref<1x1x32xf32, #tpu.memory_space<vmem>>, vector<1x1x32xf32>
    %26 = vector.shape_cast %25 : vector<1x1x32xf32> to vector<1x32xf32>
    %c0_23 = arith.constant 0 : index
    %c0_24 = arith.constant 0 : index
    %c0_25 = arith.constant 0 : index
    %27 = vector.load %arg12[%c0_23, %c0_24, %c0_25] : memref<1x1x32xf32, #tpu.memory_space<vmem>>, vector<1x1x32xf32>
    %28 = vector.shape_cast %27 : vector<1x1x32xf32> to vector<1x32xf32>
    %c0_26 = arith.constant 0 : index
    %c0_27 = arith.constant 0 : index
    %29 = vector.load %arg7[%c0_26, %c0_27] : memref<64x64xf32, #tpu.memory_space<vmem>>, vector<64x64xf32>
    %cst_28 = arith.constant dense<0.000000e+00> : vector<2x64xf32>
    %30 = tpu.matmul %16, %29, %cst_28 {dimension_numbers = #tpu.dot_dimension_numbers<[1], [0], [0], [1], [0, 0, 1, 1], [], []>} : vector<2x64xf32>, vector<64x64xf32>, vector<2x64xf32> -> vector<2x64xf32>
    %c0_29 = arith.constant 0 : index
    %c0_30 = arith.constant 0 : index
    %31 = vector.load %arg8[%c0_29, %c0_30] : memref<32x32xf32, #tpu.memory_space<vmem>>, vector<32x32xf32>
    %cst_31 = arith.constant dense<0.000000e+00> : vector<2x32xf32>
    %32 = tpu.matmul %18, %31, %cst_31 {dimension_numbers = #tpu.dot_dimension_numbers<[1], [0], [0], [1], [0, 0, 1, 1], [], []>} : vector<2x32xf32>, vector<32x32xf32>, vector<2x32xf32> -> vector<2x32xf32>
    %33 = vector.broadcast %22 : vector<1x64xf32> to vector<2x64xf32>
    %34 = arith.mulf %16, %33 : vector<2x64xf32>
    %35 = vector.broadcast %24 : vector<1x64xf32> to vector<2x64xf32>
    %36 = arith.mulf %30, %35 : vector<2x64xf32>
    %37 = arith.addf %34, %36 : vector<2x64xf32>
    %38 = vector.broadcast %26 : vector<1x32xf32> to vector<2x32xf32>
    %39 = arith.mulf %18, %38 : vector<2x32xf32>
    %40 = vector.broadcast %28 : vector<1x32xf32> to vector<2x32xf32>
    %41 = arith.mulf %32, %40 : vector<2x32xf32>
    %42 = arith.addf %39, %41 : vector<2x32xf32>
    %c0_32 = arith.constant 0 : index
    %c0_33 = arith.constant 0 : index
    %43 = vector.load %arg15[%c0_32, %c0_33] : memref<2x64xf32, #tpu.memory_space<vmem>>, vector<2x64xf32>
    tpu.vector_store %arg15[%c0_32, %c0_33], %37 {strides = array<i32>} : memref<2x64xf32, #tpu.memory_space<vmem>>, vector<2x64xf32>,
    %c0_34 = arith.constant 0 : index
    %c0_35 = arith.constant 0 : index
    %c0_36 = arith.constant 0 : index
    %44 = vector.load %arg16[%c0_34, %c0_35, %c0_36] : memref<1x2x32xf32, #tpu.memory_space<vmem>>, vector<1x2x32xf32>
    %45 = vector.shape_cast %44 : vector<1x2x32xf32> to vector<2x32xf32>
    %46 = vector.shape_cast %42 : vector<2x32xf32> to vector<1x2x32xf32>
    tpu.vector_store %arg16[%c0_34, %c0_35, %c0_36], %46 {strides = array<i32>} : memref<1x2x32xf32, #tpu.memory_space<vmem>>, vector<1x2x32xf32>,
    %c0_37 = arith.constant 0 : index
    %c0_38 = arith.constant 0 : index
    %c0_39 = arith.constant 0 : index
    %47 = vector.load %arg17[%c0_37, %c0_38, %c0_39] : memref<1x2x32xf32, #tpu.memory_space<vmem>>, vector<1x2x32xf32>
    %48 = vector.shape_cast %47 : vector<1x2x32xf32> to vector<2x32xf32>
    %49 = vector.shape_cast %20 : vector<2x32xf32> to vector<1x2x32xf32>
    tpu.vector_store %arg17[%c0_37, %c0_38, %c0_39], %49 {strides = array<i32>} : memref<1x2x32xf32, #tpu.memory_space<vmem>>, vector<1x2x32xf32>,
    return
  }
  func.func @transform_0(%arg0: i32, %arg1: memref<1xi32, #tpu.memory_space<smem>>) -> (i32, i32) {
    %c0_i32 = arith.constant 0 : i32
    %c0_i32_0 = arith.constant 0 : i32
    %c0_i32_1 = arith.constant 0 : i32
    return %c0_i32, %c0_i32_0 : i32, i32
  }
  func.func @transform_1(%arg0: i32, %arg1: memref<1xi32, #tpu.memory_space<smem>>) -> (i32, i32) {
    %c0_i32 = arith.constant 0 : i32
    %c0_i32_0 = arith.constant 0 : i32
    %c0_i32_1 = arith.constant 0 : i32
    return %c0_i32, %c0_i32_0 : i32, i32
  }
  func.func @transform_2(%arg0: i32, %arg1: memref<1xi32, #tpu.memory_space<smem>>) -> (i32, i32) {
    %c0_i32 = arith.constant 0 : i32
    %c0_i32_0 = arith.constant 0 : i32
    %c0_i32_1 = arith.constant 0 : i32
    return %c0_i32, %c0_i32_0 : i32, i32
  }
  func.func @transform_3(%arg0: i32, %arg1: memref<1xi32, #tpu.memory_space<smem>>) -> (i32, i32) {
    %c0_i32 = arith.constant 0 : i32
    %c0_i32_0 = arith.constant 0 : i32
    %c0_i32_1 = arith.constant 0 : i32
    return %c0_i32, %c0_i32_0 : i32, i32
  }
  func.func @transform_4(%arg0: i32, %arg1: memref<1xi32, #tpu.memory_space<smem>>) -> (i32, i32) {
    %c0_i32 = arith.constant 0 : i32
    %c0_i32_0 = arith.constant 0 : i32
    %c0_i32_1 = arith.constant 0 : i32
    return %c0_i32, %c0_i32_0 : i32, i32
  }
  func.func @transform_5(%arg0: i32, %arg1: memref<1xi32, #tpu.memory_space<smem>>) -> (i32, i32) {
    %c0_i32 = arith.constant 0 : i32
    %c0_i32_0 = arith.constant 0 : i32
    %c0_i32_1 = arith.constant 0 : i32
    return %c0_i32, %c0_i32_0 : i32, i32
  }
  func.func @transform_6(%arg0: i32, %arg1: memref<1xi32, #tpu.memory_space<smem>>) -> (i32, i32) {
    %c0_i32 = arith.constant 0 : i32
    %c0_i32_0 = arith.constant 0 : i32
    %c0_i32_1 = arith.constant 0 : i32
    return %c0_i32, %c0_i32_0 : i32, i32
  }
  func.func @transform_7(%arg0: i32, %arg1: memref<1xi32, #tpu.memory_space<smem>>) -> (i32, i32, i32) {
    %c0 = arith.constant 0 : index
    %0 = memref.load %arg1[%c0] : memref<1xi32, #tpu.memory_space<smem>>
    %c0_i32 = arith.constant 0 : i32
    %c0_i32_0 = arith.constant 0 : i32
    %c0_i32_1 = arith.constant 0 : i32
    return %0, %c0_i32, %c0_i32_0 : i32, i32, i32
  }
  func.func @transform_8(%arg0: i32, %arg1: memref<1xi32, #tpu.memory_space<smem>>) -> (i32, i32, i32) {
    %c0 = arith.constant 0 : index
    %0 = memref.load %arg1[%c0] : memref<1xi32, #tpu.memory_space<smem>>
    %c0_i32 = arith.constant 0 : i32
    %c0_i32_0 = arith.constant 0 : i32
    %c0_i32_1 = arith.constant 0 : i32
    return %0, %c0_i32, %c0_i32_0 : i32, i32, i32
  }
  func.func @transform_9(%arg0: i32, %arg1: memref<1xi32, #tpu.memory_space<smem>>) -> (i32, i32, i32) {
    %c0 = arith.constant 0 : index
    %0 = memref.load %arg1[%c0] : memref<1xi32, #tpu.memory_space<smem>>
    %c0_i32 = arith.constant 0 : i32
    %c0_i32_0 = arith.constant 0 : i32
    %c0_i32_1 = arith.constant 0 : i32
    return %0, %c0_i32, %c0_i32_0 : i32, i32, i32
  }
  func.func @transform_10(%arg0: i32, %arg1: memref<1xi32, #tpu.memory_space<smem>>) -> (i32, i32, i32) {
    %c0 = arith.constant 0 : index
    %0 = memref.load %arg1[%c0] : memref<1xi32, #tpu.memory_space<smem>>
    %c0_i32 = arith.constant 0 : i32
    %c0_i32_0 = arith.constant 0 : i32
    %c0_i32_1 = arith.constant 0 : i32
    return %0, %c0_i32, %c0_i32_0 : i32, i32, i32
  }
  func.func @transform_11(%arg0: i32, %arg1: memref<1xi32, #tpu.memory_space<smem>>) -> (i32, i32, i32) {
    %c0 = arith.constant 0 : index
    %0 = memref.load %arg1[%c0] : memref<1xi32, #tpu.memory_space<smem>>
    %c0_i32 = arith.constant 0 : i32
    %c0_i32_0 = arith.constant 0 : i32
    %c0_i32_1 = arith.constant 0 : i32
    return %0, %c0_i32, %c0_i32_0 : i32, i32, i32
  }
  func.func @transform_12(%arg0: i32, %arg1: memref<1xi32, #tpu.memory_space<smem>>) -> (i32, i32, i32) {
    %c0 = arith.constant 0 : index
    %0 = memref.load %arg1[%c0] : memref<1xi32, #tpu.memory_space<smem>>
    %c0_i32 = arith.constant 0 : i32
    %c0_i32_0 = arith.constant 0 : i32
    %c0_i32_1 = arith.constant 0 : i32
    return %0, %c0_i32, %c0_i32_0 : i32, i32, i32
  }
  func.func @transform_13(%arg0: i32, %arg1: memref<1xi32, #tpu.memory_space<smem>>) -> (i32, i32) {
    %c0_i32 = arith.constant 0 : i32
    %c0_i32_0 = arith.constant 0 : i32
    %c0_i32_1 = arith.constant 0 : i32
    return %c0_i32, %c0_i32_0 : i32, i32
  }
  func.func @transform_14(%arg0: i32, %arg1: memref<1xi32, #tpu.memory_space<smem>>) -> (i32, i32, i32) {
    %c0 = arith.constant 0 : index
    %0 = memref.load %arg1[%c0] : memref<1xi32, #tpu.memory_space<smem>>
    %c0_i32 = arith.constant 0 : i32
    %c0_i32_0 = arith.constant 0 : i32
    %c0_i32_1 = arith.constant 0 : i32
    return %0, %c0_i32, %c0_i32_0 : i32, i32, i32
  }
  func.func @transform_15(%arg0: i32, %arg1: memref<1xi32, #tpu.memory_space<smem>>) -> (i32, i32, i32) {
    %c0 = arith.constant 0 : index
    %0 = memref.load %arg1[%c0] : memref<1xi32, #tpu.memory_space<smem>>
    %c0_i32 = arith.constant 0 : i32
    %c0_i32_0 = arith.constant 0 : i32
    %c0_i32_1 = arith.constant 0 : i32
    return %0, %c0_i32, %c0_i32_0 : i32, i32, i32
  }
}

module attributes {stable_mosaic.version = 11 : i64} {
  func.func @_attn_ffn_kernel(%arg0: i32, %arg1: memref<1xi32, #tpu.memory_space<smem>>, %arg2: memref<2x64xf32, #tpu.memory_space<vmem>>, %arg3: memref<2x64xf32, #tpu.memory_space<vmem>>, %arg4: memref<16x64xf32, #tpu.memory_space<vmem>>, %arg5: memref<16x64xf32, #tpu.memory_space<vmem>>, %arg6: memref<64x64xbf16, #tpu.memory_space<vmem>>, %arg7: memref<1x64xf32, #tpu.memory_space<vmem>>, %arg8: memref<64x192xbf16, #tpu.memory_space<vmem>>, %arg9: memref<64x192xbf16, #tpu.memory_space<vmem>>, %arg10: memref<192x64xbf16, #tpu.memory_space<vmem>>, %arg11: memref<2x64xf32, #tpu.memory_space<vmem>>) attributes {dimension_semantics = [#tpu.dimension_semantics<arbitrary>], iteration_bounds = array<i64: 1>, scalar_prefetch = 1 : i64, scratch_operands = 0 : i64, tpu.core_type = #tpu.core_type<tc>, window_params = [{pipeline_mode = #tpu.pipeline_mode<synchronous>, transform_indices = @transform_0, window_bounds = array<i64: 2, 64>}, {pipeline_mode = #tpu.pipeline_mode<synchronous>, transform_indices = @transform_1, window_bounds = array<i64: 2, 64>}, {pipeline_mode = #tpu.pipeline_mode<synchronous>, transform_indices = @transform_2, window_bounds = array<i64: 16, 64>}, {pipeline_mode = #tpu.pipeline_mode<synchronous>, transform_indices = @transform_3, window_bounds = array<i64: 16, 64>}, {pipeline_mode = #tpu.pipeline_mode<synchronous>, transform_indices = @transform_4, window_bounds = array<i64: 64, 64>}, {pipeline_mode = #tpu.pipeline_mode<synchronous>, transform_indices = @transform_5, window_bounds = array<i64: 1, 64>}, {pipeline_mode = #tpu.pipeline_mode<synchronous>, transform_indices = @transform_6, window_bounds = array<i64: 64, 192>}, {pipeline_mode = #tpu.pipeline_mode<synchronous>, transform_indices = @transform_7, window_bounds = array<i64: 64, 192>}, {pipeline_mode = #tpu.pipeline_mode<synchronous>, transform_indices = @transform_8, window_bounds = array<i64: 192, 64>}, {pipeline_mode = #tpu.pipeline_mode<synchronous>, transform_indices = @transform_9, window_bounds = array<i64: 2, 64>}]} {
    %c0 = arith.constant 0 : index
    %0 = memref.load %arg1[%c0] : memref<1xi32, #tpu.memory_space<smem>>
    %c0_0 = arith.constant 0 : index
    %c0_1 = arith.constant 0 : index
    %1 = vector.load %arg2[%c0_0, %c0_1] : memref<2x64xf32, #tpu.memory_space<vmem>>, vector<2x64xf32>
    %c0_2 = arith.constant 0 : index
    %c0_3 = arith.constant 0 : index
    %2 = vector.load %arg3[%c0_2, %c0_3] : memref<2x64xf32, #tpu.memory_space<vmem>>, vector<2x64xf32>
    %c0_4 = arith.constant 0 : index
    %c0_5 = arith.constant 0 : index
    %3 = vector.load %arg4[%c0_4, %c0_5] : memref<16x64xf32, #tpu.memory_space<vmem>>, vector<16x64xf32>
    %c0_6 = arith.constant 0 : index
    %c0_7 = arith.constant 0 : index
    %4 = vector.load %arg5[%c0_6, %c0_7] : memref<16x64xf32, #tpu.memory_space<vmem>>, vector<16x64xf32>
    %c0_8 = arith.constant 0 : index
    %c0_9 = arith.constant 0 : index
    %5 = vector.load %arg6[%c0_8, %c0_9] : memref<64x64xbf16, #tpu.memory_space<vmem>>, vector<64x64xbf16>
    %6 = tpu.iota {dimensions = array<i32: 1>} : vector<1x16xi32>
    %7 = vector.broadcast %0 : i32 to vector<1x16xi32>
    %8 = arith.cmpi sle, %6, %7 : vector<1x16xi32>
    %cst = arith.constant 0.000000e+00 : f32
    %9 = vector.broadcast %cst : f32 to vector<1x64xf32>
    %10 = vector.extract_strided_slice %2 {offsets = [0, 0], sizes = [1, 16], strides = [1, 1]} : vector<2x64xf32> to vector<1x16xf32>
    %11 = vector.extract_strided_slice %3 {offsets = [0, 0], sizes = [16, 16], strides = [1, 1]} : vector<16x64xf32> to vector<16x16xf32>
    %12 = vector.extract_strided_slice %4 {offsets = [0, 0], sizes = [16, 16], strides = [1, 1]} : vector<16x64xf32> to vector<16x16xf32>
    %cst_10 = arith.constant dense<0.000000e+00> : vector<1x16xf32>
    %13 = tpu.matmul %10, %11, %cst_10 {dimension_numbers = #tpu.dot_dimension_numbers<[1], [1], [0], [0], [0, 0, 1, 0], [], []>} : vector<1x16xf32>, vector<16x16xf32>, vector<1x16xf32> -> vector<1x16xf32>
    %cst_11 = arith.constant 2.500000e-01 : f32
    %14 = vector.broadcast %cst_11 : f32 to vector<1x16xf32>
    %15 = arith.mulf %13, %14 : vector<1x16xf32>
    %cst_12 = arith.constant -1.000000e+30 : f32
    %16 = vector.broadcast %cst_12 : f32 to vector<1x16xf32>
    %17 = arith.select %8, %15, %16 : vector<1x16xi1>, vector<1x16xf32>
    %cst_13 = arith.constant dense<0xFF800000> : vector<1xf32>
    %18 = vector.multi_reduction <maximumf>, %17, %cst_13 [1] : vector<1x16xf32> to vector<1xf32>
    %19 = vector.shape_cast %18 : vector<1xf32> to vector<1x1xf32>
    %20 = vector.broadcast %19 : vector<1x1xf32> to vector<1x16xf32>
    %21 = arith.subf %17, %20 : vector<1x16xf32>
    %22 = math.exp %21 : vector<1x16xf32>
    %cst_14 = arith.constant dense<0.000000e+00> : vector<1xf32>
    %23 = vector.multi_reduction <add>, %22, %cst_14 [1] : vector<1x16xf32> to vector<1xf32>
    %24 = vector.shape_cast %23 : vector<1xf32> to vector<1x1xf32>
    %25 = tpu.reciprocal %24 {approx = true} : vector<1x1xf32> -> vector<1x1xf32>
    %26 = vector.broadcast %25 : vector<1x1xf32> to vector<1x16xf32>
    %27 = arith.mulf %22, %26 : vector<1x16xf32>
    %cst_15 = arith.constant dense<0.000000e+00> : vector<1x16xf32>
    %28 = tpu.matmul %27, %12, %cst_15 {dimension_numbers = #tpu.dot_dimension_numbers<[1], [0], [0], [1], [0, 0, 1, 1], [], []>} : vector<1x16xf32>, vector<16x16xf32>, vector<1x16xf32> -> vector<1x16xf32>
    %29 = vector.extract_strided_slice %5 {offsets = [0, 0], sizes = [16, 64], strides = [1, 1]} : vector<64x64xbf16> to vector<16x64xbf16>
    %30 = arith.truncf %28 : vector<1x16xf32> to vector<1x16xbf16>
    %cst_16 = arith.constant dense<0.000000e+00> : vector<1x64xf32>
    %31 = tpu.matmul %30, %29, %cst_16 {dimension_numbers = #tpu.dot_dimension_numbers<[1], [0], [0], [1], [0, 0, 1, 1], [], []>} : vector<1x16xbf16>, vector<16x64xbf16>, vector<1x64xf32> -> vector<1x64xf32>
    %32 = arith.addf %9, %31 : vector<1x64xf32>
    %33 = vector.extract_strided_slice %2 {offsets = [0, 16], sizes = [1, 16], strides = [1, 1]} : vector<2x64xf32> to vector<1x16xf32>
    %34 = vector.extract_strided_slice %3 {offsets = [0, 0], sizes = [16, 16], strides = [1, 1]} : vector<16x64xf32> to vector<16x16xf32>
    %35 = vector.extract_strided_slice %4 {offsets = [0, 0], sizes = [16, 16], strides = [1, 1]} : vector<16x64xf32> to vector<16x16xf32>
    %cst_17 = arith.constant dense<0.000000e+00> : vector<1x16xf32>
    %36 = tpu.matmul %33, %34, %cst_17 {dimension_numbers = #tpu.dot_dimension_numbers<[1], [1], [0], [0], [0, 0, 1, 0], [], []>} : vector<1x16xf32>, vector<16x16xf32>, vector<1x16xf32> -> vector<1x16xf32>
    %cst_18 = arith.constant 2.500000e-01 : f32
    %37 = vector.broadcast %cst_18 : f32 to vector<1x16xf32>
    %38 = arith.mulf %36, %37 : vector<1x16xf32>
    %cst_19 = arith.constant -1.000000e+30 : f32
    %39 = vector.broadcast %cst_19 : f32 to vector<1x16xf32>
    %40 = arith.select %8, %38, %39 : vector<1x16xi1>, vector<1x16xf32>
    %cst_20 = arith.constant dense<0xFF800000> : vector<1xf32>
    %41 = vector.multi_reduction <maximumf>, %40, %cst_20 [1] : vector<1x16xf32> to vector<1xf32>
    %42 = vector.shape_cast %41 : vector<1xf32> to vector<1x1xf32>
    %43 = vector.broadcast %42 : vector<1x1xf32> to vector<1x16xf32>
    %44 = arith.subf %40, %43 : vector<1x16xf32>
    %45 = math.exp %44 : vector<1x16xf32>
    %cst_21 = arith.constant dense<0.000000e+00> : vector<1xf32>
    %46 = vector.multi_reduction <add>, %45, %cst_21 [1] : vector<1x16xf32> to vector<1xf32>
    %47 = vector.shape_cast %46 : vector<1xf32> to vector<1x1xf32>
    %48 = tpu.reciprocal %47 {approx = true} : vector<1x1xf32> -> vector<1x1xf32>
    %49 = vector.broadcast %48 : vector<1x1xf32> to vector<1x16xf32>
    %50 = arith.mulf %45, %49 : vector<1x16xf32>
    %cst_22 = arith.constant dense<0.000000e+00> : vector<1x16xf32>
    %51 = tpu.matmul %50, %35, %cst_22 {dimension_numbers = #tpu.dot_dimension_numbers<[1], [0], [0], [1], [0, 0, 1, 1], [], []>} : vector<1x16xf32>, vector<16x16xf32>, vector<1x16xf32> -> vector<1x16xf32>
    %52 = vector.extract_strided_slice %5 {offsets = [16, 0], sizes = [16, 64], strides = [1, 1]} : vector<64x64xbf16> to vector<16x64xbf16>
    %53 = arith.truncf %51 : vector<1x16xf32> to vector<1x16xbf16>
    %cst_23 = arith.constant dense<0.000000e+00> : vector<1x64xf32>
    %54 = tpu.matmul %53, %52, %cst_23 {dimension_numbers = #tpu.dot_dimension_numbers<[1], [0], [0], [1], [0, 0, 1, 1], [], []>} : vector<1x16xbf16>, vector<16x64xbf16>, vector<1x64xf32> -> vector<1x64xf32>
    %55 = arith.addf %32, %54 : vector<1x64xf32>
    %56 = vector.extract_strided_slice %2 {offsets = [0, 32], sizes = [1, 16], strides = [1, 1]} : vector<2x64xf32> to vector<1x16xf32>
    %57 = vector.extract_strided_slice %3 {offsets = [0, 16], sizes = [16, 16], strides = [1, 1]} : vector<16x64xf32> to vector<16x16xf32>
    %58 = vector.extract_strided_slice %4 {offsets = [0, 16], sizes = [16, 16], strides = [1, 1]} : vector<16x64xf32> to vector<16x16xf32>
    %cst_24 = arith.constant dense<0.000000e+00> : vector<1x16xf32>
    %59 = tpu.matmul %56, %57, %cst_24 {dimension_numbers = #tpu.dot_dimension_numbers<[1], [1], [0], [0], [0, 0, 1, 0], [], []>} : vector<1x16xf32>, vector<16x16xf32>, vector<1x16xf32> -> vector<1x16xf32>
    %cst_25 = arith.constant 2.500000e-01 : f32
    %60 = vector.broadcast %cst_25 : f32 to vector<1x16xf32>
    %61 = arith.mulf %59, %60 : vector<1x16xf32>
    %cst_26 = arith.constant -1.000000e+30 : f32
    %62 = vector.broadcast %cst_26 : f32 to vector<1x16xf32>
    %63 = arith.select %8, %61, %62 : vector<1x16xi1>, vector<1x16xf32>
    %cst_27 = arith.constant dense<0xFF800000> : vector<1xf32>
    %64 = vector.multi_reduction <maximumf>, %63, %cst_27 [1] : vector<1x16xf32> to vector<1xf32>
    %65 = vector.shape_cast %64 : vector<1xf32> to vector<1x1xf32>
    %66 = vector.broadcast %65 : vector<1x1xf32> to vector<1x16xf32>
    %67 = arith.subf %63, %66 : vector<1x16xf32>
    %68 = math.exp %67 : vector<1x16xf32>
    %cst_28 = arith.constant dense<0.000000e+00> : vector<1xf32>
    %69 = vector.multi_reduction <add>, %68, %cst_28 [1] : vector<1x16xf32> to vector<1xf32>
    %70 = vector.shape_cast %69 : vector<1xf32> to vector<1x1xf32>
    %71 = tpu.reciprocal %70 {approx = true} : vector<1x1xf32> -> vector<1x1xf32>
    %72 = vector.broadcast %71 : vector<1x1xf32> to vector<1x16xf32>
    %73 = arith.mulf %68, %72 : vector<1x16xf32>
    %cst_29 = arith.constant dense<0.000000e+00> : vector<1x16xf32>
    %74 = tpu.matmul %73, %58, %cst_29 {dimension_numbers = #tpu.dot_dimension_numbers<[1], [0], [0], [1], [0, 0, 1, 1], [], []>} : vector<1x16xf32>, vector<16x16xf32>, vector<1x16xf32> -> vector<1x16xf32>
    %75 = vector.extract_strided_slice %5 {offsets = [32, 0], sizes = [16, 64], strides = [1, 1]} : vector<64x64xbf16> to vector<16x64xbf16>
    %76 = arith.truncf %74 : vector<1x16xf32> to vector<1x16xbf16>
    %cst_30 = arith.constant dense<0.000000e+00> : vector<1x64xf32>
    %77 = tpu.matmul %76, %75, %cst_30 {dimension_numbers = #tpu.dot_dimension_numbers<[1], [0], [0], [1], [0, 0, 1, 1], [], []>} : vector<1x16xbf16>, vector<16x64xbf16>, vector<1x64xf32> -> vector<1x64xf32>
    %78 = arith.addf %55, %77 : vector<1x64xf32>
    %79 = vector.extract_strided_slice %2 {offsets = [0, 48], sizes = [1, 16], strides = [1, 1]} : vector<2x64xf32> to vector<1x16xf32>
    %80 = vector.extract_strided_slice %3 {offsets = [0, 16], sizes = [16, 16], strides = [1, 1]} : vector<16x64xf32> to vector<16x16xf32>
    %81 = vector.extract_strided_slice %4 {offsets = [0, 16], sizes = [16, 16], strides = [1, 1]} : vector<16x64xf32> to vector<16x16xf32>
    %cst_31 = arith.constant dense<0.000000e+00> : vector<1x16xf32>
    %82 = tpu.matmul %79, %80, %cst_31 {dimension_numbers = #tpu.dot_dimension_numbers<[1], [1], [0], [0], [0, 0, 1, 0], [], []>} : vector<1x16xf32>, vector<16x16xf32>, vector<1x16xf32> -> vector<1x16xf32>
    %cst_32 = arith.constant 2.500000e-01 : f32
    %83 = vector.broadcast %cst_32 : f32 to vector<1x16xf32>
    %84 = arith.mulf %82, %83 : vector<1x16xf32>
    %cst_33 = arith.constant -1.000000e+30 : f32
    %85 = vector.broadcast %cst_33 : f32 to vector<1x16xf32>
    %86 = arith.select %8, %84, %85 : vector<1x16xi1>, vector<1x16xf32>
    %cst_34 = arith.constant dense<0xFF800000> : vector<1xf32>
    %87 = vector.multi_reduction <maximumf>, %86, %cst_34 [1] : vector<1x16xf32> to vector<1xf32>
    %88 = vector.shape_cast %87 : vector<1xf32> to vector<1x1xf32>
    %89 = vector.broadcast %88 : vector<1x1xf32> to vector<1x16xf32>
    %90 = arith.subf %86, %89 : vector<1x16xf32>
    %91 = math.exp %90 : vector<1x16xf32>
    %cst_35 = arith.constant dense<0.000000e+00> : vector<1xf32>
    %92 = vector.multi_reduction <add>, %91, %cst_35 [1] : vector<1x16xf32> to vector<1xf32>
    %93 = vector.shape_cast %92 : vector<1xf32> to vector<1x1xf32>
    %94 = tpu.reciprocal %93 {approx = true} : vector<1x1xf32> -> vector<1x1xf32>
    %95 = vector.broadcast %94 : vector<1x1xf32> to vector<1x16xf32>
    %96 = arith.mulf %91, %95 : vector<1x16xf32>
    %cst_36 = arith.constant dense<0.000000e+00> : vector<1x16xf32>
    %97 = tpu.matmul %96, %81, %cst_36 {dimension_numbers = #tpu.dot_dimension_numbers<[1], [0], [0], [1], [0, 0, 1, 1], [], []>} : vector<1x16xf32>, vector<16x16xf32>, vector<1x16xf32> -> vector<1x16xf32>
    %98 = vector.extract_strided_slice %5 {offsets = [48, 0], sizes = [16, 64], strides = [1, 1]} : vector<64x64xbf16> to vector<16x64xbf16>
    %99 = arith.truncf %97 : vector<1x16xf32> to vector<1x16xbf16>
    %cst_37 = arith.constant dense<0.000000e+00> : vector<1x64xf32>
    %100 = tpu.matmul %99, %98, %cst_37 {dimension_numbers = #tpu.dot_dimension_numbers<[1], [0], [0], [1], [0, 0, 1, 1], [], []>} : vector<1x16xbf16>, vector<16x64xbf16>, vector<1x64xf32> -> vector<1x64xf32>
    %101 = arith.addf %78, %100 : vector<1x64xf32>
    %cst_38 = arith.constant 0.000000e+00 : f32
    %102 = vector.broadcast %cst_38 : f32 to vector<1x64xf32>
    %103 = vector.extract_strided_slice %2 {offsets = [1, 0], sizes = [1, 16], strides = [1, 1]} : vector<2x64xf32> to vector<1x16xf32>
    %104 = vector.extract_strided_slice %3 {offsets = [0, 32], sizes = [16, 16], strides = [1, 1]} : vector<16x64xf32> to vector<16x16xf32>
    %105 = vector.extract_strided_slice %4 {offsets = [0, 32], sizes = [16, 16], strides = [1, 1]} : vector<16x64xf32> to vector<16x16xf32>
    %cst_39 = arith.constant dense<0.000000e+00> : vector<1x16xf32>
    %106 = tpu.matmul %103, %104, %cst_39 {dimension_numbers = #tpu.dot_dimension_numbers<[1], [1], [0], [0], [0, 0, 1, 0], [], []>} : vector<1x16xf32>, vector<16x16xf32>, vector<1x16xf32> -> vector<1x16xf32>
    %cst_40 = arith.constant 2.500000e-01 : f32
    %107 = vector.broadcast %cst_40 : f32 to vector<1x16xf32>
    %108 = arith.mulf %106, %107 : vector<1x16xf32>
    %cst_41 = arith.constant -1.000000e+30 : f32
    %109 = vector.broadcast %cst_41 : f32 to vector<1x16xf32>
    %110 = arith.select %8, %108, %109 : vector<1x16xi1>, vector<1x16xf32>
    %cst_42 = arith.constant dense<0xFF800000> : vector<1xf32>
    %111 = vector.multi_reduction <maximumf>, %110, %cst_42 [1] : vector<1x16xf32> to vector<1xf32>
    %112 = vector.shape_cast %111 : vector<1xf32> to vector<1x1xf32>
    %113 = vector.broadcast %112 : vector<1x1xf32> to vector<1x16xf32>
    %114 = arith.subf %110, %113 : vector<1x16xf32>
    %115 = math.exp %114 : vector<1x16xf32>
    %cst_43 = arith.constant dense<0.000000e+00> : vector<1xf32>
    %116 = vector.multi_reduction <add>, %115, %cst_43 [1] : vector<1x16xf32> to vector<1xf32>
    %117 = vector.shape_cast %116 : vector<1xf32> to vector<1x1xf32>
    %118 = tpu.reciprocal %117 {approx = true} : vector<1x1xf32> -> vector<1x1xf32>
    %119 = vector.broadcast %118 : vector<1x1xf32> to vector<1x16xf32>
    %120 = arith.mulf %115, %119 : vector<1x16xf32>
    %cst_44 = arith.constant dense<0.000000e+00> : vector<1x16xf32>
    %121 = tpu.matmul %120, %105, %cst_44 {dimension_numbers = #tpu.dot_dimension_numbers<[1], [0], [0], [1], [0, 0, 1, 1], [], []>} : vector<1x16xf32>, vector<16x16xf32>, vector<1x16xf32> -> vector<1x16xf32>
    %122 = vector.extract_strided_slice %5 {offsets = [0, 0], sizes = [16, 64], strides = [1, 1]} : vector<64x64xbf16> to vector<16x64xbf16>
    %123 = arith.truncf %121 : vector<1x16xf32> to vector<1x16xbf16>
    %cst_45 = arith.constant dense<0.000000e+00> : vector<1x64xf32>
    %124 = tpu.matmul %123, %122, %cst_45 {dimension_numbers = #tpu.dot_dimension_numbers<[1], [0], [0], [1], [0, 0, 1, 1], [], []>} : vector<1x16xbf16>, vector<16x64xbf16>, vector<1x64xf32> -> vector<1x64xf32>
    %125 = arith.addf %102, %124 : vector<1x64xf32>
    %126 = vector.extract_strided_slice %2 {offsets = [1, 16], sizes = [1, 16], strides = [1, 1]} : vector<2x64xf32> to vector<1x16xf32>
    %127 = vector.extract_strided_slice %3 {offsets = [0, 32], sizes = [16, 16], strides = [1, 1]} : vector<16x64xf32> to vector<16x16xf32>
    %128 = vector.extract_strided_slice %4 {offsets = [0, 32], sizes = [16, 16], strides = [1, 1]} : vector<16x64xf32> to vector<16x16xf32>
    %cst_46 = arith.constant dense<0.000000e+00> : vector<1x16xf32>
    %129 = tpu.matmul %126, %127, %cst_46 {dimension_numbers = #tpu.dot_dimension_numbers<[1], [1], [0], [0], [0, 0, 1, 0], [], []>} : vector<1x16xf32>, vector<16x16xf32>, vector<1x16xf32> -> vector<1x16xf32>
    %cst_47 = arith.constant 2.500000e-01 : f32
    %130 = vector.broadcast %cst_47 : f32 to vector<1x16xf32>
    %131 = arith.mulf %129, %130 : vector<1x16xf32>
    %cst_48 = arith.constant -1.000000e+30 : f32
    %132 = vector.broadcast %cst_48 : f32 to vector<1x16xf32>
    %133 = arith.select %8, %131, %132 : vector<1x16xi1>, vector<1x16xf32>
    %cst_49 = arith.constant dense<0xFF800000> : vector<1xf32>
    %134 = vector.multi_reduction <maximumf>, %133, %cst_49 [1] : vector<1x16xf32> to vector<1xf32>
    %135 = vector.shape_cast %134 : vector<1xf32> to vector<1x1xf32>
    %136 = vector.broadcast %135 : vector<1x1xf32> to vector<1x16xf32>
    %137 = arith.subf %133, %136 : vector<1x16xf32>
    %138 = math.exp %137 : vector<1x16xf32>
    %cst_50 = arith.constant dense<0.000000e+00> : vector<1xf32>
    %139 = vector.multi_reduction <add>, %138, %cst_50 [1] : vector<1x16xf32> to vector<1xf32>
    %140 = vector.shape_cast %139 : vector<1xf32> to vector<1x1xf32>
    %141 = tpu.reciprocal %140 {approx = true} : vector<1x1xf32> -> vector<1x1xf32>
    %142 = vector.broadcast %141 : vector<1x1xf32> to vector<1x16xf32>
    %143 = arith.mulf %138, %142 : vector<1x16xf32>
    %cst_51 = arith.constant dense<0.000000e+00> : vector<1x16xf32>
    %144 = tpu.matmul %143, %128, %cst_51 {dimension_numbers = #tpu.dot_dimension_numbers<[1], [0], [0], [1], [0, 0, 1, 1], [], []>} : vector<1x16xf32>, vector<16x16xf32>, vector<1x16xf32> -> vector<1x16xf32>
    %145 = vector.extract_strided_slice %5 {offsets = [16, 0], sizes = [16, 64], strides = [1, 1]} : vector<64x64xbf16> to vector<16x64xbf16>
    %146 = arith.truncf %144 : vector<1x16xf32> to vector<1x16xbf16>
    %cst_52 = arith.constant dense<0.000000e+00> : vector<1x64xf32>
    %147 = tpu.matmul %146, %145, %cst_52 {dimension_numbers = #tpu.dot_dimension_numbers<[1], [0], [0], [1], [0, 0, 1, 1], [], []>} : vector<1x16xbf16>, vector<16x64xbf16>, vector<1x64xf32> -> vector<1x64xf32>
    %148 = arith.addf %125, %147 : vector<1x64xf32>
    %149 = vector.extract_strided_slice %2 {offsets = [1, 32], sizes = [1, 16], strides = [1, 1]} : vector<2x64xf32> to vector<1x16xf32>
    %150 = vector.extract_strided_slice %3 {offsets = [0, 48], sizes = [16, 16], strides = [1, 1]} : vector<16x64xf32> to vector<16x16xf32>
    %151 = vector.extract_strided_slice %4 {offsets = [0, 48], sizes = [16, 16], strides = [1, 1]} : vector<16x64xf32> to vector<16x16xf32>
    %cst_53 = arith.constant dense<0.000000e+00> : vector<1x16xf32>
    %152 = tpu.matmul %149, %150, %cst_53 {dimension_numbers = #tpu.dot_dimension_numbers<[1], [1], [0], [0], [0, 0, 1, 0], [], []>} : vector<1x16xf32>, vector<16x16xf32>, vector<1x16xf32> -> vector<1x16xf32>
    %cst_54 = arith.constant 2.500000e-01 : f32
    %153 = vector.broadcast %cst_54 : f32 to vector<1x16xf32>
    %154 = arith.mulf %152, %153 : vector<1x16xf32>
    %cst_55 = arith.constant -1.000000e+30 : f32
    %155 = vector.broadcast %cst_55 : f32 to vector<1x16xf32>
    %156 = arith.select %8, %154, %155 : vector<1x16xi1>, vector<1x16xf32>
    %cst_56 = arith.constant dense<0xFF800000> : vector<1xf32>
    %157 = vector.multi_reduction <maximumf>, %156, %cst_56 [1] : vector<1x16xf32> to vector<1xf32>
    %158 = vector.shape_cast %157 : vector<1xf32> to vector<1x1xf32>
    %159 = vector.broadcast %158 : vector<1x1xf32> to vector<1x16xf32>
    %160 = arith.subf %156, %159 : vector<1x16xf32>
    %161 = math.exp %160 : vector<1x16xf32>
    %cst_57 = arith.constant dense<0.000000e+00> : vector<1xf32>
    %162 = vector.multi_reduction <add>, %161, %cst_57 [1] : vector<1x16xf32> to vector<1xf32>
    %163 = vector.shape_cast %162 : vector<1xf32> to vector<1x1xf32>
    %164 = tpu.reciprocal %163 {approx = true} : vector<1x1xf32> -> vector<1x1xf32>
    %165 = vector.broadcast %164 : vector<1x1xf32> to vector<1x16xf32>
    %166 = arith.mulf %161, %165 : vector<1x16xf32>
    %cst_58 = arith.constant dense<0.000000e+00> : vector<1x16xf32>
    %167 = tpu.matmul %166, %151, %cst_58 {dimension_numbers = #tpu.dot_dimension_numbers<[1], [0], [0], [1], [0, 0, 1, 1], [], []>} : vector<1x16xf32>, vector<16x16xf32>, vector<1x16xf32> -> vector<1x16xf32>
    %168 = vector.extract_strided_slice %5 {offsets = [32, 0], sizes = [16, 64], strides = [1, 1]} : vector<64x64xbf16> to vector<16x64xbf16>
    %169 = arith.truncf %167 : vector<1x16xf32> to vector<1x16xbf16>
    %cst_59 = arith.constant dense<0.000000e+00> : vector<1x64xf32>
    %170 = tpu.matmul %169, %168, %cst_59 {dimension_numbers = #tpu.dot_dimension_numbers<[1], [0], [0], [1], [0, 0, 1, 1], [], []>} : vector<1x16xbf16>, vector<16x64xbf16>, vector<1x64xf32> -> vector<1x64xf32>
    %171 = arith.addf %148, %170 : vector<1x64xf32>
    %172 = vector.extract_strided_slice %2 {offsets = [1, 48], sizes = [1, 16], strides = [1, 1]} : vector<2x64xf32> to vector<1x16xf32>
    %173 = vector.extract_strided_slice %3 {offsets = [0, 48], sizes = [16, 16], strides = [1, 1]} : vector<16x64xf32> to vector<16x16xf32>
    %174 = vector.extract_strided_slice %4 {offsets = [0, 48], sizes = [16, 16], strides = [1, 1]} : vector<16x64xf32> to vector<16x16xf32>
    %cst_60 = arith.constant dense<0.000000e+00> : vector<1x16xf32>
    %175 = tpu.matmul %172, %173, %cst_60 {dimension_numbers = #tpu.dot_dimension_numbers<[1], [1], [0], [0], [0, 0, 1, 0], [], []>} : vector<1x16xf32>, vector<16x16xf32>, vector<1x16xf32> -> vector<1x16xf32>
    %cst_61 = arith.constant 2.500000e-01 : f32
    %176 = vector.broadcast %cst_61 : f32 to vector<1x16xf32>
    %177 = arith.mulf %175, %176 : vector<1x16xf32>
    %cst_62 = arith.constant -1.000000e+30 : f32
    %178 = vector.broadcast %cst_62 : f32 to vector<1x16xf32>
    %179 = arith.select %8, %177, %178 : vector<1x16xi1>, vector<1x16xf32>
    %cst_63 = arith.constant dense<0xFF800000> : vector<1xf32>
    %180 = vector.multi_reduction <maximumf>, %179, %cst_63 [1] : vector<1x16xf32> to vector<1xf32>
    %181 = vector.shape_cast %180 : vector<1xf32> to vector<1x1xf32>
    %182 = vector.broadcast %181 : vector<1x1xf32> to vector<1x16xf32>
    %183 = arith.subf %179, %182 : vector<1x16xf32>
    %184 = math.exp %183 : vector<1x16xf32>
    %cst_64 = arith.constant dense<0.000000e+00> : vector<1xf32>
    %185 = vector.multi_reduction <add>, %184, %cst_64 [1] : vector<1x16xf32> to vector<1xf32>
    %186 = vector.shape_cast %185 : vector<1xf32> to vector<1x1xf32>
    %187 = tpu.reciprocal %186 {approx = true} : vector<1x1xf32> -> vector<1x1xf32>
    %188 = vector.broadcast %187 : vector<1x1xf32> to vector<1x16xf32>
    %189 = arith.mulf %184, %188 : vector<1x16xf32>
    %cst_65 = arith.constant dense<0.000000e+00> : vector<1x16xf32>
    %190 = tpu.matmul %189, %174, %cst_65 {dimension_numbers = #tpu.dot_dimension_numbers<[1], [0], [0], [1], [0, 0, 1, 1], [], []>} : vector<1x16xf32>, vector<16x16xf32>, vector<1x16xf32> -> vector<1x16xf32>
    %191 = vector.extract_strided_slice %5 {offsets = [48, 0], sizes = [16, 64], strides = [1, 1]} : vector<64x64xbf16> to vector<16x64xbf16>
    %192 = arith.truncf %190 : vector<1x16xf32> to vector<1x16xbf16>
    %cst_66 = arith.constant dense<0.000000e+00> : vector<1x64xf32>
    %193 = tpu.matmul %192, %191, %cst_66 {dimension_numbers = #tpu.dot_dimension_numbers<[1], [0], [0], [1], [0, 0, 1, 1], [], []>} : vector<1x16xbf16>, vector<16x64xbf16>, vector<1x64xf32> -> vector<1x64xf32>
    %194 = arith.addf %171, %193 : vector<1x64xf32>
    %195 = tpu.concatenate %101, %194 in 0 : vector<1x64xf32>, vector<1x64xf32> -> vector<2x64xf32>
    %196 = arith.addf %1, %195 : vector<2x64xf32>
    %c0_67 = arith.constant 0 : index
    %c0_68 = arith.constant 0 : index
    %197 = vector.load %arg7[%c0_67, %c0_68] : memref<1x64xf32, #tpu.memory_space<vmem>>, vector<1x64xf32>
    %198 = arith.mulf %196, %196 : vector<2x64xf32>
    %cst_69 = arith.constant dense<0.000000e+00> : vector<2xf32>
    %199 = vector.multi_reduction <add>, %198, %cst_69 [1] : vector<2x64xf32> to vector<2xf32>
    %200 = vector.shape_cast %199 : vector<2xf32> to vector<2x1xf32>
    %cst_70 = arith.constant 6.400000e+01 : f32
    %201 = vector.broadcast %cst_70 : f32 to vector<2x1xf32>
    %202 = arith.divf %200, %201 : vector<2x1xf32>
    %cst_71 = arith.constant 9.99999974E-6 : f32
    %203 = vector.broadcast %cst_71 : f32 to vector<2x1xf32>
    %204 = arith.addf %202, %203 : vector<2x1xf32>
    %205 = math.rsqrt %204 : vector<2x1xf32>
    %206 = vector.broadcast %205 : vector<2x1xf32> to vector<2x64xf32>
    %207 = arith.mulf %196, %206 : vector<2x64xf32>
    %208 = vector.broadcast %197 : vector<1x64xf32> to vector<2x64xf32>
    %209 = arith.mulf %207, %208 : vector<2x64xf32>
    %210 = arith.truncf %209 : vector<2x64xf32> to vector<2x64xbf16>
    %c0_72 = arith.constant 0 : index
    %c0_73 = arith.constant 0 : index
    %211 = vector.load %arg8[%c0_72, %c0_73] : memref<64x192xbf16, #tpu.memory_space<vmem>>, vector<64x192xbf16>
    %cst_74 = arith.constant dense<0.000000e+00> : vector<2x192xf32>
    %212 = tpu.matmul %210, %211, %cst_74 {dimension_numbers = #tpu.dot_dimension_numbers<[1], [0], [0], [1], [0, 0, 1, 1], [], []>} : vector<2x64xbf16>, vector<64x192xbf16>, vector<2x192xf32> -> vector<2x192xf32>
    %c0_75 = arith.constant 0 : index
    %c0_76 = arith.constant 0 : index
    %213 = vector.load %arg9[%c0_75, %c0_76] : memref<64x192xbf16, #tpu.memory_space<vmem>>, vector<64x192xbf16>
    %cst_77 = arith.constant dense<0.000000e+00> : vector<2x192xf32>
    %214 = tpu.matmul %210, %213, %cst_77 {dimension_numbers = #tpu.dot_dimension_numbers<[1], [0], [0], [1], [0, 0, 1, 1], [], []>} : vector<2x64xbf16>, vector<64x192xbf16>, vector<2x192xf32> -> vector<2x192xf32>
    %cst_78 = arith.constant 0.000000e+00 : f32
    %215 = vector.broadcast %cst_78 : f32 to vector<2x192xf32>
    %216 = arith.subf %215, %212 : vector<2x192xf32>
    %217 = math.exp %216 : vector<2x192xf32>
    %cst_79 = arith.constant 1.000000e+00 : f32
    %218 = vector.broadcast %cst_79 : f32 to vector<2x192xf32>
    %219 = arith.addf %218, %217 : vector<2x192xf32>
    %220 = tpu.reciprocal %219 {approx = true} : vector<2x192xf32> -> vector<2x192xf32>
    %221 = arith.mulf %212, %220 : vector<2x192xf32>
    %222 = arith.mulf %221, %214 : vector<2x192xf32>
    %223 = arith.truncf %222 : vector<2x192xf32> to vector<2x192xbf16>
    %c0_80 = arith.constant 0 : index
    %c0_81 = arith.constant 0 : index
    %224 = vector.load %arg10[%c0_80, %c0_81] : memref<192x64xbf16, #tpu.memory_space<vmem>>, vector<192x64xbf16>
    %cst_82 = arith.constant dense<0.000000e+00> : vector<2x64xf32>
    %225 = tpu.matmul %223, %224, %cst_82 {dimension_numbers = #tpu.dot_dimension_numbers<[1], [0], [0], [1], [0, 0, 1, 1], [], []>} : vector<2x192xbf16>, vector<192x64xbf16>, vector<2x64xf32> -> vector<2x64xf32>
    %226 = arith.addf %196, %225 : vector<2x64xf32>
    %c0_83 = arith.constant 0 : index
    %c0_84 = arith.constant 0 : index
    %227 = vector.load %arg11[%c0_83, %c0_84] : memref<2x64xf32, #tpu.memory_space<vmem>>, vector<2x64xf32>
    tpu.vector_store %arg11[%c0_83, %c0_84], %226 {strides = array<i32>} : memref<2x64xf32, #tpu.memory_space<vmem>>, vector<2x64xf32>,
    return
  }
  func.func @transform_0(%arg0: i32, %arg1: memref<1xi32, #tpu.memory_space<smem>>) -> (i32, i32) {
    %c0_i32 = arith.constant 0 : i32
    %c0_i32_0 = arith.constant 0 : i32
    %c0_i32_1 = arith.constant 0 : i32
    return %c0_i32, %c0_i32_0 : i32, i32
  }
  func.func @transform_1(%arg0: i32, %arg1: memref<1xi32, #tpu.memory_space<smem>>) -> (i32, i32) {
    %c0_i32 = arith.constant 0 : i32
    %c0_i32_0 = arith.constant 0 : i32
    %c0_i32_1 = arith.constant 0 : i32
    return %c0_i32, %c0_i32_0 : i32, i32
  }
  func.func @transform_2(%arg0: i32, %arg1: memref<1xi32, #tpu.memory_space<smem>>) -> (i32, i32) {
    %c0_i32 = arith.constant 0 : i32
    %c0_i32_0 = arith.constant 0 : i32
    %c0_i32_1 = arith.constant 0 : i32
    return %c0_i32, %c0_i32_0 : i32, i32
  }
  func.func @transform_3(%arg0: i32, %arg1: memref<1xi32, #tpu.memory_space<smem>>) -> (i32, i32) {
    %c0_i32 = arith.constant 0 : i32
    %c0_i32_0 = arith.constant 0 : i32
    %c0_i32_1 = arith.constant 0 : i32
    return %c0_i32, %c0_i32_0 : i32, i32
  }
  func.func @transform_4(%arg0: i32, %arg1: memref<1xi32, #tpu.memory_space<smem>>) -> (i32, i32) {
    %c0_i32 = arith.constant 0 : i32
    %c0_i32_0 = arith.constant 0 : i32
    %c0_i32_1 = arith.constant 0 : i32
    return %c0_i32, %c0_i32_0 : i32, i32
  }
  func.func @transform_5(%arg0: i32, %arg1: memref<1xi32, #tpu.memory_space<smem>>) -> (i32, i32) {
    %c0_i32 = arith.constant 0 : i32
    %c0_i32_0 = arith.constant 0 : i32
    %c0_i32_1 = arith.constant 0 : i32
    return %c0_i32, %c0_i32_0 : i32, i32
  }
  func.func @transform_6(%arg0: i32, %arg1: memref<1xi32, #tpu.memory_space<smem>>) -> (i32, i32) {
    %c0_i32 = arith.constant 0 : i32
    %c0_i32_0 = arith.constant 0 : i32
    %c0_i32_1 = arith.constant 0 : i32
    return %c0_i32, %c0_i32_0 : i32, i32
  }
  func.func @transform_7(%arg0: i32, %arg1: memref<1xi32, #tpu.memory_space<smem>>) -> (i32, i32) {
    %c0_i32 = arith.constant 0 : i32
    %c0_i32_0 = arith.constant 0 : i32
    %c0_i32_1 = arith.constant 0 : i32
    return %c0_i32, %c0_i32_0 : i32, i32
  }
  func.func @transform_8(%arg0: i32, %arg1: memref<1xi32, #tpu.memory_space<smem>>) -> (i32, i32) {
    %c0_i32 = arith.constant 0 : i32
    %c0_i32_0 = arith.constant 0 : i32
    %c0_i32_1 = arith.constant 0 : i32
    return %c0_i32, %c0_i32_0 : i32, i32
  }
  func.func @transform_9(%arg0: i32, %arg1: memref<1xi32, #tpu.memory_space<smem>>) -> (i32, i32) {
    %c0_i32 = arith.constant 0 : i32
    %c0_i32_0 = arith.constant 0 : i32
    %c0_i32_1 = arith.constant 0 : i32
    return %c0_i32, %c0_i32_0 : i32, i32
  }
}

module attributes {stable_mosaic.version = 11 : i64} {
  func.func @_final_norm_logits_kernel(%arg0: i32, %arg1: memref<2x64xf32, #tpu.memory_space<vmem>>, %arg2: memref<1x64xf32, #tpu.memory_space<vmem>>, %arg3: memref<64x128xbf16, #tpu.memory_space<vmem>>, %arg4: memref<2x128xf32, #tpu.memory_space<vmem>>) attributes {dimension_semantics = [#tpu.dimension_semantics<arbitrary>], iteration_bounds = array<i64: 1>, scalar_prefetch = 0 : i64, scratch_operands = 0 : i64, tpu.core_type = #tpu.core_type<tc>, window_params = [{pipeline_mode = #tpu.pipeline_mode<synchronous>, transform_indices = @transform_0, window_bounds = array<i64: 2, 64>}, {pipeline_mode = #tpu.pipeline_mode<synchronous>, transform_indices = @transform_1, window_bounds = array<i64: 1, 64>}, {pipeline_mode = #tpu.pipeline_mode<synchronous>, transform_indices = @transform_2, window_bounds = array<i64: 64, 128>}, {pipeline_mode = #tpu.pipeline_mode<synchronous>, transform_indices = @transform_3, window_bounds = array<i64: 2, 128>}]} {
    %c0 = arith.constant 0 : index
    %c0_0 = arith.constant 0 : index
    %0 = vector.load %arg1[%c0, %c0_0] : memref<2x64xf32, #tpu.memory_space<vmem>>, vector<2x64xf32>
    %c0_1 = arith.constant 0 : index
    %c0_2 = arith.constant 0 : index
    %1 = vector.load %arg2[%c0_1, %c0_2] : memref<1x64xf32, #tpu.memory_space<vmem>>, vector<1x64xf32>
    %2 = arith.mulf %0, %0 : vector<2x64xf32>
    %cst = arith.constant dense<0.000000e+00> : vector<2xf32>
    %3 = vector.multi_reduction <add>, %2, %cst [1] : vector<2x64xf32> to vector<2xf32>
    %4 = vector.shape_cast %3 : vector<2xf32> to vector<2x1xf32>
    %cst_3 = arith.constant 6.400000e+01 : f32
    %5 = vector.broadcast %cst_3 : f32 to vector<2x1xf32>
    %6 = arith.divf %4, %5 : vector<2x1xf32>
    %cst_4 = arith.constant 9.99999974E-6 : f32
    %7 = vector.broadcast %cst_4 : f32 to vector<2x1xf32>
    %8 = arith.addf %6, %7 : vector<2x1xf32>
    %9 = math.rsqrt %8 : vector<2x1xf32>
    %10 = vector.broadcast %9 : vector<2x1xf32> to vector<2x64xf32>
    %11 = arith.mulf %0, %10 : vector<2x64xf32>
    %12 = vector.broadcast %1 : vector<1x64xf32> to vector<2x64xf32>
    %13 = arith.mulf %11, %12 : vector<2x64xf32>
    %14 = arith.truncf %13 : vector<2x64xf32> to vector<2x64xbf16>
    %c0_5 = arith.constant 0 : index
    %c0_6 = arith.constant 0 : index
    %15 = vector.load %arg3[%c0_5, %c0_6] : memref<64x128xbf16, #tpu.memory_space<vmem>>, vector<64x128xbf16>
    %cst_7 = arith.constant dense<0.000000e+00> : vector<2x128xf32>
    %16 = tpu.matmul %14, %15, %cst_7 {dimension_numbers = #tpu.dot_dimension_numbers<[1], [0], [0], [1], [0, 0, 1, 1], [], []>} : vector<2x64xbf16>, vector<64x128xbf16>, vector<2x128xf32> -> vector<2x128xf32>
    %c0_8 = arith.constant 0 : index
    %c0_9 = arith.constant 0 : index
    %17 = vector.load %arg4[%c0_8, %c0_9] : memref<2x128xf32, #tpu.memory_space<vmem>>, vector<2x128xf32>
    tpu.vector_store %arg4[%c0_8, %c0_9], %16 {strides = array<i32>} : memref<2x128xf32, #tpu.memory_space<vmem>>, vector<2x128xf32>,
    return
  }
  func.func @transform_0(%arg0: i32) -> (i32, i32) {
    %c0_i32 = arith.constant 0 : i32
    %c0_i32_0 = arith.constant 0 : i32
    %c0_i32_1 = arith.constant 0 : i32
    return %c0_i32, %c0_i32_0 : i32, i32
  }
  func.func @transform_1(%arg0: i32) -> (i32, i32) {
    %c0_i32 = arith.constant 0 : i32
    %c0_i32_0 = arith.constant 0 : i32
    %c0_i32_1 = arith.constant 0 : i32
    return %c0_i32, %c0_i32_0 : i32, i32
  }
  func.func @transform_2(%arg0: i32) -> (i32, i32) {
    %c0_i32 = arith.constant 0 : i32
    %c0_i32_0 = arith.constant 0 : i32
    %c0_i32_1 = arith.constant 0 : i32
    return %c0_i32, %c0_i32_0 : i32, i32
  }
  func.func @transform_3(%arg0: i32) -> (i32, i32) {
    %c0_i32 = arith.constant 0 : i32
    %c0_i32_0 = arith.constant 0 : i32
    %c0_i32_1 = arith.constant 0 : i32
    return %c0_i32, %c0_i32_0 : i32, i32
  }
}

</mosaic_0001>

<llo_original>
// kernel: transformer_forward.9
$region0: #{transformer_forward.9}
  #allocation0 [shape = 'u32[]', space=smem, size = 0x4, offset = 0x4, fixed_abs, tag = 'smem constant byte address 0x4 - core index']
  #allocation1 [shape = 'u32[144,128]{1,0:T(1,128)}', space=vmem, size = 0x12000, scoped, tag = 'internal scratch']
  %s0 = inlined_call_operand.vmem [shape: f32[2,64], index: 0, kind: input, shape index: {}]
  %s1 = inlined_call_operand.vmem [shape: f32[1,64], index: 1, kind: input, shape index: {}]
  %s2 = inlined_call_operand.vmem [shape: bf16[64,128], index: 2, kind: input, shape index: {}]
  %s3 = inlined_call_operand.hbm [shape: f32[2,128], index: 3, kind: output, shape index: {}]
  %s4 = sld [smem:[#allocation0]]
  $region22: #{transformer_forward.9} parent=0
    _
  %s6 = ssub.s32 1, %s4
  %s7 = scalar_select 0, %s6, %s4
  $region1: #{transformer_forward.9} parent=0
    #allocation2 [shape = 'u8[1024]{0}', space=vmem, size = 0x400, scoped, tag = 'output window, operand 0, single buffered']
    #allocation3 [shape = 's32[1]{0}', space=sflag, size = 0x4, scoped, tag = 'scoped memory for transformer_forward.9']
    %8 = vsyncpa [#allocation3], 0
    // Predicated region
    $region2: #{transformer_forward.9} parent=1 // pred_check
      _
    $region3: #{transformer_forward.9} parent=1 // pred_check_branch
      %10 = sbr.rel (0) target = $region5
    $region4: #{transformer_forward.9} parent=1 // pred_region
      _
    $region5: #{transformer_forward.9} parent=1 // pred_fallthru
      _
    // Predicated region
    $region6: #{transformer_forward.9} parent=1 // pred_check
      _
    $region7: #{transformer_forward.9} parent=1 // pred_check_branch
      %12 = sbr.rel (0) target = $region9
    $region8: #{transformer_forward.9} parent=1 // pred_region
      _
    $region9: #{transformer_forward.9} parent=1 // pred_fallthru
      _
    // Predicated region
    $region10: #{transformer_forward.9} parent=1 // pred_check
      _
    $region11: #{transformer_forward.9} parent=1 // pred_check_branch
      %14 = sbr.rel (0) target = $region13
    $region12: #{transformer_forward.9} parent=1 // pred_region
      _
    $region13: #{transformer_forward.9} parent=1 // pred_fallthru
      _
    %v16 = vld [vmem:[%s0] sm:$0x3]
    %v17 = vld [vmem:[%s1] sm:$0x1]
    %v18 = vmul.f32 %v16, %v16
    %vm19 = vcmask 517120
    %v20 = vsel %vm19, %v18, 0.0
    %21 = vadd.xlane.f32.xlu0 %v20
    %v22 = vpop.xlane.xlu0 %21
    %v23 = vrcp.pop 64.0
    %v24 = vmul.f32 %v22, %v23
    %v25 = vadd.f32 %v24, 1e-05
    %v26 = vrsqrt.pop %v25
    %v27 = vmul.f32 %v16, %v26
    %v29 = vlaneseq
    %v30 = vshrl.u32 %v29, 7
    %v31 = vsub.s32 0, %v30
    %v32 = vrot.slane %v17, %v31
    %v34 = vmul.f32 %v27, %v32
    %v35 = vpack.c.bf16 %v34, %v34
    %v36 = vld [vmem:[%s2] sm:$0xf]
    %v37 = vld [vmem:[%s2 + $0x4] sm:$0xf]
    %v38 = vld [vmem:[%s2 + $0x8] sm:$0xf]
    %v39 = vld [vmem:[%s2 + $0xc] sm:$0xf]
    %v40 = vld [vmem:[%s2 + $0x10] sm:$0xf]
    %v41 = vld [vmem:[%s2 + $0x14] sm:$0xf]
    %v42 = vld [vmem:[%s2 + $0x18] sm:$0xf]
    %v43 = vld [vmem:[%s2 + $0x1c] sm:$0xf]
    %v52 = vunpack.c.l.b16 %v36
    %v53 = vunpack.c.l.b16 %v37
    %v54 = vunpack.c.l.b16 %v38
    %v55 = vunpack.c.l.b16 %v39
    %v56 = vunpack.c.l.b16 %v40
    %v57 = vunpack.c.l.b16 %v41
    %v58 = vunpack.c.l.b16 %v42
    %v59 = vunpack.c.l.b16 %v43
    %v60 = vpack.c.b16 %v53, %v52
    %v61 = vpack.c.b16 %v55, %v54
    %v62 = vpack.c.b16 %v57, %v56
    %v63 = vpack.c.b16 %v59, %v58
    %vm68 = vcmask 523264
    %v70 = vsel %vm68, %v35, 0
    %72 = vmatprep.subr.bf16.mxu0 0
    %73 = vmatpush1.bf16.msra.mxu0 0
    %74 = vmatprep.subr.bf16.mxu0 0
    %75 = vmatpush1.bf16.msra.mxu0 0
    %76 = vmatprep.subr.bf16.mxu0 0
    %77 = vmatpush1.bf16.msra.mxu0 0
    %78 = vmatprep.subr.bf16.mxu0 0
    %79 = vmatpush1.bf16.msra.mxu0 0
    %80 = vmatprep.subr.bf16.mxu0 0
    %81 = vmatpush1.bf16.msra.mxu0 %v63
    %82 = vmatprep.subr.bf16.mxu0 0
    %83 = vmatpush1.bf16.msra.mxu0 %v62
    %84 = vmatprep.subr.bf16.mxu0 0
    %85 = vmatpush1.bf16.msra.mxu0 %v61
    %86 = vmatprep.subr.bf16.mxu0 0
    %87 = vmatpush1.bf16.msra.mxu0 %v60
    %88 = vmatprep.subr.bf16.mxu0 0
    %89 = vmatpush2.bf16.msra.mxu0 0
    %90 = vmatprep.subr.bf16.mxu0 0
    %91 = vmatpush2.bf16.msra.mxu0 0
    %92 = vmatprep.subr.bf16.mxu0 0
    %93 = vmatpush2.bf16.msra.mxu0 0
    %94 = vmatprep.subr.bf16.mxu0 0
    %95 = vmatpush2.bf16.msra.mxu0 0
    %96 = vmatprep.subr.bf16.mxu0 0
    %97 = vmatpush2.bf16.msra.mxu0 0
    %98 = vmatprep.subr.bf16.mxu0 0
    %99 = vmatpush2.bf16.msra.mxu0 0
    %100 = vmatprep.subr.bf16.mxu0 0
    %101 = vmatpush2.bf16.msra.mxu0 0
    %102 = vmatprep.subr.bf16.mxu0 0
    %103 = vmatpush2.bf16.msra.mxu0 0
    %104 = vmatprep.mubr.bf16.mxu0 0
    %105 = vmatmul.mubr.bf16.gmra.mxu0 %v70
    %v106 = vpop.f32.mrf.mxu0
    %v107 = vadd.f32 0.0, %v106
    %v108 = vpop.f32.mrf.mxu0
    %v109 = vpop.f32.mrf.mxu0
    %v110 = vpop.f32.mrf.mxu0
    %111 = vdwg.mxu0
    %112 = vst [vmem:[#allocation2] sm:$0x3] %v107
    // Predicated region
    $region14: #{transformer_forward.9} parent=1 // pred_check
      _
    $region15: #{transformer_forward.9} parent=1 // pred_check_branch
      %114 = sbr.rel (0) target = $region17
    $region16: #{transformer_forward.9} parent=1 // pred_region
      %s116 = ssub.s32 32, 32
      %117 = vsyncadd [#allocation3], %s116
      %s119 = sshll.u32 [#allocation2], 4
      %s120 = int_to_ptr.vmem [resolvable:$true] %s119
      %122 = dma.vmem_to_hbm [thread:$0]  %s120, 32, %s3, [#allocation3]
    $region17: #{transformer_forward.9} parent=1 // pred_fallthru
      _
    // Predicated region
    $region18: #{transformer_forward.9} parent=1 // pred_check
      _
    $region19: #{transformer_forward.9} parent=1 // pred_check_branch
      %124 = sbr.rel (0) target = $region21
    $region20: #{transformer_forward.9} parent=1 // pred_region
      %125 = dma.done [#allocation3], 32
    $region21: #{transformer_forward.9} parent=1 // pred_fallthru
      _
    %126 = vsyncpa [#allocation3], 1

// kernel: transformer_forward.5
$region0: #{transformer_forward.5}
  #allocation0 [shape = 'u32[]', space=smem, size = 0x4, offset = 0x4, fixed_abs, tag = 'smem constant byte address 0x4 - core index']
  #allocation1 [shape = 'u32[144,128]{1,0:T(1,128)}', space=vmem, size = 0x12000, scoped, tag = 'internal scratch']
  #allocation2 [shape = 's32[1]{0}', space=sflag, size = 0x4, scoped, tag = 'scoped memory for transformer_forward.5']
  #allocation3 [shape = 's32[1]{0:T(128)S(6)}', space=smem, size = 0x200, scoped, tag = 'prefetched SMEM operand 0']
  %s0 = inlined_call_operand.<no memory space> [shape: s32[1], index: 0, kind: input, shape index: {}]
  %s1 = inlined_call_operand.vmem [shape: f32[2,64], index: 1, kind: input, shape index: {}]
  %s2 = inlined_call_operand.vmem [shape: f32[1,64], index: 2, kind: input, shape index: {}]
  %s3 = inlined_call_operand.vmem [shape: bf16[64,64], index: 3, kind: input, shape index: {}]
  %s4 = inlined_call_operand.vmem [shape: bf16[64,32], index: 4, kind: input, shape index: {}]
  %s5 = inlined_call_operand.vmem [shape: bf16[64,32], index: 5, kind: input, shape index: {}]
  %s6 = inlined_call_operand.vmem [shape: f32[64,64], index: 6, kind: input, shape index: {}]
  %s7 = inlined_call_operand.vmem [shape: f32[32,32], index: 7, kind: input, shape index: {}]
  %s8 = inlined_call_operand.vmem [shape: f32[32,1,64], index: 8, kind: input, shape index: {}]
  %s9 = inlined_call_operand.vmem [shape: f32[32,1,64], index: 9, kind: input, shape index: {}]
  %s10 = inlined_call_operand.vmem [shape: f32[32,1,32], index: 10, kind: input, shape index: {}]
  %s11 = inlined_call_operand.vmem [shape: f32[32,1,32], index: 11, kind: input, shape index: {}]
  %s12 = inlined_call_operand.vmem [shape: f32[16,2,32], index: 12, kind: input, shape index: {}, may-alias: {12,15}]
  %s13 = inlined_call_operand.vmem [shape: f32[16,2,32], index: 13, kind: input, shape index: {}, may-alias: {13,16}]
  %s14 = inlined_call_operand.vmem [shape: f32[2,64], index: 14, kind: output, shape index: {0}]
  %s15 = inlined_call_operand.vmem [shape: f32[16,2,32], index: 15, kind: output, shape index: {1}, may-alias: {12,15}]
  %s16 = inlined_call_operand.vmem [shape: f32[16,2,32], index: 16, kind: output, shape index: {2}, may-alias: {13,16}]
  %17 = xla_tuple %s14, %s15, %s16
  %s18 = sld [smem:[#allocation0]]
  $region78: #{transformer_forward.5} parent=0
    _
  %s20 = ssub.s32 1, %s18
  %s21 = scalar_select 0, %s20, %s18
  %22 = sst [smem:[#allocation3]] %s0
  // Predicated region
  $region2: #{transformer_forward.5} parent=0 // pred_check
    _
  $region3: #{transformer_forward.5} parent=0 // pred_check_branch
    %24 = sbr.rel (0) target = $region5
  $region4: #{transformer_forward.5} parent=0 // pred_region
    _
  $region5: #{transformer_forward.5} parent=0 // pred_fallthru
    _
  // Predicated region
  $region6: #{transformer_forward.5} parent=0 // pred_check
    _
  $region7: #{transformer_forward.5} parent=0 // pred_check_branch
    %26 = sbr.rel (0) target = $region9
  $region8: #{transformer_forward.5} parent=0 // pred_region
    _
  $region9: #{transformer_forward.5} parent=0 // pred_fallthru
    _
  // Predicated region
  $region10: #{transformer_forward.5} parent=0 // pred_check
    _
  $region11: #{transformer_forward.5} parent=0 // pred_check_branch
    %28 = sbr.rel (0) target = $region13
  $region12: #{transformer_forward.5} parent=0 // pred_region
    _
  $region13: #{transformer_forward.5} parent=0 // pred_fallthru
    _
  // Predicated region
  $region14: #{transformer_forward.5} parent=0 // pred_check
    _
  $region15: #{transformer_forward.5} parent=0 // pred_check_branch
    %30 = sbr.rel (0) target = $region17
  $region16: #{transformer_forward.5} parent=0 // pred_region
    _
  $region17: #{transformer_forward.5} parent=0 // pred_fallthru
    _
  // Predicated region
  $region18: #{transformer_forward.5} parent=0 // pred_check
    _
  $region19: #{transformer_forward.5} parent=0 // pred_check_branch
    %32 = sbr.rel (0) target = $region21
  $region20: #{transformer_forward.5} parent=0 // pred_region
    _
  $region21: #{transformer_forward.5} parent=0 // pred_fallthru
    _
  // Predicated region
  $region22: #{transformer_forward.5} parent=0 // pred_check
    _
  $region23: #{transformer_forward.5} parent=0 // pred_check_branch
    %34 = sbr.rel (0) target = $region25
  $region24: #{transformer_forward.5} parent=0 // pred_region
    _
  $region25: #{transformer_forward.5} parent=0 // pred_fallthru
    _
  // Predicated region
  $region26: #{transformer_forward.5} parent=0 // pred_check
    _
  $region27: #{transformer_forward.5} parent=0 // pred_check_branch
    %36 = sbr.rel (0) target = $region29
  $region28: #{transformer_forward.5} parent=0 // pred_region
    _
  $region29: #{transformer_forward.5} parent=0 // pred_fallthru
    _
  // Predicated region
  $region30: #{transformer_forward.5} parent=0 // pred_check
    _
  $region31: #{transformer_forward.5} parent=0 // pred_check_branch
    %38 = sbr.rel (0) target = $region33
  $region32: #{transformer_forward.5} parent=0 // pred_region
    %s39 = sld [smem:[#allocation3]]
    %p40 = scmp.lt.s32.totalorder %s39, 31
    %s41 = scalar_select %p40, %s39, 31
    %s42 = scalar_lea.vmem %s8, %s41
    %s43 = sld [smem:[#allocation3]]
  $region33: #{transformer_forward.5} parent=0 // pred_fallthru
    _
  // Predicated region
  $region34: #{transformer_forward.5} parent=0 // pred_check
    _
  $region35: #{transformer_forward.5} parent=0 // pred_check_branch
    %45 = sbr.rel (0) target = $region37
  $region36: #{transformer_forward.5} parent=0 // pred_region
    %s46 = sld [smem:[#allocation3]]
    %p47 = scmp.lt.s32.totalorder %s46, 31
    %s48 = scalar_select %p47, %s46, 31
    %s49 = scalar_lea.vmem %s9, %s48
    %s50 = sld [smem:[#allocation3]]
  $region37: #{transformer_forward.5} parent=0 // pred_fallthru
    _
  // Predicated region
  $region38: #{transformer_forward.5} parent=0 // pred_check
    _
  $region39: #{transformer_forward.5} parent=0 // pred_check_branch
    %52 = sbr.rel (0) target = $region41
  $region40: #{transformer_forward.5} parent=0 // pred_region
    %s53 = sld [smem:[#allocation3]]
    %p54 = scmp.lt.s32.totalorder %s53, 31
    %s55 = scalar_select %p54, %s53, 31
    %s56 = scalar_lea.vmem %s10, %s55
    %s57 = sld [smem:[#allocation3]]
  $region41: #{transformer_forward.5} parent=0 // pred_fallthru
    _
  // Predicated region
  $region42: #{transformer_forward.5} parent=0 // pred_check
    _
  $region43: #{transformer_forward.5} parent=0 // pred_check_branch
    %59 = sbr.rel (0) target = $region45
  $region44: #{transformer_forward.5} parent=0 // pred_region
    %s60 = sld [smem:[#allocation3]]
    %p61 = scmp.lt.s32.totalorder %s60, 31
    %s62 = scalar_select %p61, %s60, 31
    %s63 = scalar_lea.vmem %s11, %s62
    %s64 = sld [smem:[#allocation3]]
  $region45: #{transformer_forward.5} parent=0 // pred_fallthru
    _
  // Predicated region
  $region46: #{transformer_forward.5} parent=0 // pred_check
    _
  $region47: #{transformer_forward.5} parent=0 // pred_check_branch
    %66 = sbr.rel (0) target = $region49
  $region48: #{transformer_forward.5} parent=0 // pred_region
    %s67 = sld [smem:[#allocation3]]
    %p68 = scmp.lt.s32.totalorder %s67, 15
    %s69 = scalar_select %p68, %s67, 15
    %s70 = smul.addr %s69, 2
    %s71 = scalar_lea.vmem %s12, %s70
    %s72 = sld [smem:[#allocation3]]
  $region49: #{transformer_forward.5} parent=0 // pred_fallthru
    _
  // Predicated region
  $region50: #{transformer_forward.5} parent=0 // pred_check
    _
  $region51: #{transformer_forward.5} parent=0 // pred_check_branch
    %74 = sbr.rel (0) target = $region53
  $region52: #{transformer_forward.5} parent=0 // pred_region
    %s75 = sld [smem:[#allocation3]]
    %p76 = scmp.lt.s32.totalorder %s75, 15
    %s77 = scalar_select %p76, %s75, 15
    %s78 = smul.addr %s77, 2
    %s79 = scalar_lea.vmem %s13, %s78
    %s80 = sld [smem:[#allocation3]]
  $region53: #{transformer_forward.5} parent=0 // pred_fallthru
    _
  %s81 = sld [smem:[#allocation3]]
  %p82 = scmp.lt.s32.totalorder %s81, 31
  %s83 = scalar_select %p82, %s81, 31
  %s84 = scalar_lea.vmem %s8, %s83
  %s85 = sld [smem:[#allocation3]]
  %p86 = scmp.lt.s32.totalorder %s85, 31
  %s87 = scalar_select %p86, %s85, 31
  %s88 = scalar_lea.vmem %s9, %s87
  %s89 = sld [smem:[#allocation3]]
  %p90 = scmp.lt.s32.totalorder %s89, 31
  %s91 = scalar_select %p90, %s89, 31
  %s92 = scalar_lea.vmem %s10, %s91
  %s93 = sld [smem:[#allocation3]]
  %p94 = scmp.lt.s32.totalorder %s93, 31
  %s95 = scalar_select %p94, %s93, 31
  %s96 = scalar_lea.vmem %s11, %s95
  %s97 = sld [smem:[#allocation3]]
  %p98 = scmp.lt.s32.totalorder %s97, 15
  %s99 = scalar_select %p98, %s97, 15
  %s100 = smul.addr %s99, 2
  %s101 = scalar_lea.vmem %s12, %s100
  %s102 = sld [smem:[#allocation3]]
  %p103 = scmp.lt.s32.totalorder %s102, 15
  %s104 = scalar_select %p103, %s102, 15
  %s105 = smul.addr %s104, 2
  %s106 = scalar_lea.vmem %s13, %s105
  %s107 = sld [smem:[#allocation3]]
  %p108 = scmp.lt.s32.totalorder %s107, 15
  %s109 = scalar_select %p108, %s107, 15
  %s110 = smul.addr %s109, 2
  %s111 = scalar_lea.vmem %s15, %s110
  %s112 = sld [smem:[#allocation3]]
  %p113 = scmp.lt.s32.totalorder %s112, 15
  %s114 = scalar_select %p113, %s112, 15
  %s115 = smul.addr %s114, 2
  %s116 = scalar_lea.vmem %s16, %s115
  %s117 = sld [smem:[#allocation3]]
  %p118 = scmp.lt.s32.totalorder %s117, 31
  %s119 = scalar_select %p118, %s117, 31
  %s120 = scalar_lea.vmem %s8, %s119
  %s121 = sld [smem:[#allocation3]]
  %s122 = sld [smem:[#allocation3]]
  %p123 = scmp.lt.s32.totalorder %s122, 31
  %s124 = scalar_select %p123, %s122, 31
  %s125 = scalar_lea.vmem %s9, %s124
  %s126 = sld [smem:[#allocation3]]
  %s127 = sld [smem:[#allocation3]]
  %p128 = scmp.lt.s32.totalorder %s127, 31
  %s129 = scalar_select %p128, %s127, 31
  %s130 = scalar_lea.vmem %s10, %s129
  %s131 = sld [smem:[#allocation3]]
  %s132 = sld [smem:[#allocation3]]
  %p133 = scmp.lt.s32.totalorder %s132, 31
  %s134 = scalar_select %p133, %s132, 31
  %s135 = scalar_lea.vmem %s11, %s134
  %s136 = sld [smem:[#allocation3]]
  %s137 = sld [smem:[#allocation3]]
  %p138 = scmp.lt.s32.totalorder %s137, 15
  %s139 = scalar_select %p138, %s137, 15
  %s140 = smul.addr %s139, 2
  %s141 = scalar_lea.vmem %s12, %s140
  %s142 = sld [smem:[#allocation3]]
  %s143 = sld [smem:[#allocation3]]
  %p144 = scmp.lt.s32.totalorder %s143, 15
  %s145 = scalar_select %p144, %s143, 15
  %s146 = smul.addr %s145, 2
  %s147 = scalar_lea.vmem %s13, %s146
  %s148 = sld [smem:[#allocation3]]
  %s149 = sld [smem:[#allocation3]]
  %p150 = scmp.lt.s32.totalorder %s149, 15
  %s151 = scalar_select %p150, %s149, 15
  %s152 = smul.addr %s151, 2
  %s153 = scalar_lea.vmem %s15, %s152
  %s154 = sld [smem:[#allocation3]]
  %s155 = sld [smem:[#allocation3]]
  %p156 = scmp.lt.s32.totalorder %s155, 15
  %s157 = scalar_select %p156, %s155, 15
  %s158 = smul.addr %s157, 2
  %s159 = scalar_lea.vmem %s16, %s158
  %s160 = sld [smem:[#allocation3]]
  %v162 = vld [vmem:[%s1] sm:$0x3]
  %v163 = vld [vmem:[%s2] sm:$0x1]
  %v164 = vmul.f32 %v162, %v162
  %vm165 = vcmask 517120
  %v166 = vsel %vm165, %v164, 0.0
  %167 = vadd.xlane.f32.xlu0 %v166
  %v168 = vpop.xlane.xlu0 %167
  %v169 = vrcp.pop 64.0
  %v170 = vmul.f32 %v168, %v169
  %v171 = vadd.f32 %v170, 1e-05
  %v172 = vrsqrt.pop %v171
  %v173 = vmul.f32 %v162, %v172
  %v175 = vlaneseq
  %v176 = vshrl.u32 %v175, 7
  %v177 = vsub.s32 0, %v176
  %v178 = vrot.slane %v163, %v177
  %v180 = vmul.f32 %v173, %v178
  %v181 = vpack.c.bf16 %v180, %v180
  %v182 = vld [vmem:[%s3] sm:$0xf]
  %v183 = vld [vmem:[%s3 + $0x4] sm:$0xf]
  %v184 = vld [vmem:[%s3 + $0x8] sm:$0xf]
  %v185 = vld [vmem:[%s3 + $0xc] sm:$0xf]
  %v186 = vld [vmem:[%s3 + $0x10] sm:$0xf]
  %v187 = vld [vmem:[%s3 + $0x14] sm:$0xf]
  %v188 = vld [vmem:[%s3 + $0x18] sm:$0xf]
  %v189 = vld [vmem:[%s3 + $0x1c] sm:$0xf]
  %v198 = vunpack.c.l.b16 %v182
  %v199 = vunpack.c.l.b16 %v183
  %v200 = vunpack.c.l.b16 %v184
  %v201 = vunpack.c.l.b16 %v185
  %v202 = vunpack.c.l.b16 %v186
  %v203 = vunpack.c.l.b16 %v187
  %v204 = vunpack.c.l.b16 %v188
  %v205 = vunpack.c.l.b16 %v189
  %v206 = vpack.c.b16 %v199, %v198
  %v207 = vpack.c.b16 %v201, %v200
  %v208 = vpack.c.b16 %v203, %v202
  %v209 = vpack.c.b16 %v205, %v204
  %vm214 = vcmask 523264
  %v216 = vsel %vm214, %v181, 0
  %218 = vmatprep.subr.bf16.mxu0 0
  %219 = vmatpush1.bf16.msra.mxu0 0
  %220 = vmatprep.subr.bf16.mxu0 0
  %221 = vmatpush1.bf16.msra.mxu0 0
  %222 = vmatprep.subr.bf16.mxu0 0
  %223 = vmatpush1.bf16.msra.mxu0 0
  %224 = vmatprep.subr.bf16.mxu0 0
  %225 = vmatpush1.bf16.msra.mxu0 0
  %226 = vmatprep.subr.bf16.mxu0 0
  %227 = vmatpush1.bf16.msra.mxu0 %v209
  %228 = vmatprep.subr.bf16.mxu0 0
  %229 = vmatpush1.bf16.msra.mxu0 %v208
  %230 = vmatprep.subr.bf16.mxu0 0
  %231 = vmatpush1.bf16.msra.mxu0 %v207
  %232 = vmatprep.subr.bf16.mxu0 0
  %233 = vmatpush1.bf16.msra.mxu0 %v206
  %234 = vmatprep.subr.bf16.mxu0 0
  %235 = vmatpush2.bf16.msra.mxu0 0
  %236 = vmatprep.subr.bf16.mxu0 0
  %237 = vmatpush2.bf16.msra.mxu0 0
  %238 = vmatprep.subr.bf16.mxu0 0
  %239 = vmatpush2.bf16.msra.mxu0 0
  %240 = vmatprep.subr.bf16.mxu0 0
  %241 = vmatpush2.bf16.msra.mxu0 0
  %242 = vmatprep.subr.bf16.mxu0 0
  %243 = vmatpush2.bf16.msra.mxu0 0
  %244 = vmatprep.subr.bf16.mxu0 0
  %245 = vmatpush2.bf16.msra.mxu0 0
  %246 = vmatprep.subr.bf16.mxu0 0
  %247 = vmatpush2.bf16.msra.mxu0 0
  %248 = vmatprep.subr.bf16.mxu0 0
  %249 = vmatpush2.bf16.msra.mxu0 0
  %250 = vmatprep.mubr.bf16.mxu0 0
  %251 = vmatmul.mubr.bf16.gmra.mxu0 %v216
  %v252 = vpop.f32.mrf.mxu0
  %v253 = vadd.f32 0.0, %v252
  %v254 = vpop.f32.mrf.mxu0
  %v255 = vpop.f32.mrf.mxu0
  %v256 = vpop.f32.mrf.mxu0
  %257 = vdwg.mxu0
  %v258 = vld [vmem:[%s4] sm:$0xf]
  %v259 = vld [vmem:[%s4 + $0x4] sm:$0xf]
  %v260 = vld [vmem:[%s4 + $0x8] sm:$0xf]
  %v261 = vld [vmem:[%s4 + $0xc] sm:$0xf]
  %v262 = vld [vmem:[%s4 + $0x10] sm:$0xf]
  %v263 = vld [vmem:[%s4 + $0x14] sm:$0xf]
  %v264 = vld [vmem:[%s4 + $0x18] sm:$0xf]
  %v265 = vld [vmem:[%s4 + $0x1c] sm:$0xf]
  %v274 = vunpack.c.l.b16 %v258
  %v275 = vunpack.c.l.b16 %v259
  %v276 = vunpack.c.l.b16 %v260
  %v277 = vunpack.c.l.b16 %v261
  %v278 = vunpack.c.l.b16 %v262
  %v279 = vunpack.c.l.b16 %v263
  %v280 = vunpack.c.l.b16 %v264
  %v281 = vunpack.c.l.b16 %v265
  %v282 = vpack.c.b16 %v275, %v274
  %v283 = vpack.c.b16 %v277, %v276
  %v284 = vpack.c.b16 %v279, %v278
  %v285 = vpack.c.b16 %v281, %v280
  %290 = vmatprep.subr.bf16.mxu0 0
  %291 = vmatpush1.bf16.msra.mxu0 0
  %292 = vmatprep.subr.bf16.mxu0 0
  %293 = vmatpush1.bf16.msra.mxu0 0
  %294 = vmatprep.subr.bf16.mxu0 0
  %295 = vmatpush1.bf16.msra.mxu0 0
  %296 = vmatprep.subr.bf16.mxu0 0
  %297 = vmatpush1.bf16.msra.mxu0 0
  %298 = vmatprep.subr.bf16.mxu0 0
  %299 = vmatpush1.bf16.msra.mxu0 %v285
  %300 = vmatprep.subr.bf16.mxu0 0
  %301 = vmatpush1.bf16.msra.mxu0 %v284
  %302 = vmatprep.subr.bf16.mxu0 0
  %303 = vmatpush1.bf16.msra.mxu0 %v283
  %304 = vmatprep.subr.bf16.mxu0 0
  %305 = vmatpush1.bf16.msra.mxu0 %v282
  %306 = vmatprep.subr.bf16.mxu0 0
  %307 = vmatpush2.bf16.msra.mxu0 0
  %308 = vmatprep.subr.bf16.mxu0 0
  %309 = vmatpush2.bf16.msra.mxu0 0
  %310 = vmatprep.subr.bf16.mxu0 0
  %311 = vmatpush2.bf16.msra.mxu0 0
  %312 = vmatprep.subr.bf16.mxu0 0
  %313 = vmatpush2.bf16.msra.mxu0 0
  %314 = vmatprep.subr.bf16.mxu0 0
  %315 = vmatpush2.bf16.msra.mxu0 0
  %316 = vmatprep.subr.bf16.mxu0 0
  %317 = vmatpush2.bf16.msra.mxu0 0
  %318 = vmatprep.subr.bf16.mxu0 0
  %319 = vmatpush2.bf16.msra.mxu0 0
  %320 = vmatprep.subr.bf16.mxu0 0
  %321 = vmatpush2.bf16.msra.mxu0 0
  %322 = vmatprep.mubr.bf16.mxu0 0
  %323 = vmatmul.mubr.bf16.gmra.mxu0 %v216
  %v324 = vpop.f32.mrf.mxu0
  %v325 = vadd.f32 0.0, %v324
  %v326 = vpop.f32.mrf.mxu0
  %v327 = vpop.f32.mrf.mxu0
  %v328 = vpop.f32.mrf.mxu0
  %329 = vdwg.mxu0
  %v330 = vld [vmem:[%s5] sm:$0xf]
  %v331 = vld [vmem:[%s5 + $0x4] sm:$0xf]
  %v332 = vld [vmem:[%s5 + $0x8] sm:$0xf]
  %v333 = vld [vmem:[%s5 + $0xc] sm:$0xf]
  %v334 = vld [vmem:[%s5 + $0x10] sm:$0xf]
  %v335 = vld [vmem:[%s5 + $0x14] sm:$0xf]
  %v336 = vld [vmem:[%s5 + $0x18] sm:$0xf]
  %v337 = vld [vmem:[%s5 + $0x1c] sm:$0xf]
  %v346 = vunpack.c.l.b16 %v330
  %v347 = vunpack.c.l.b16 %v331
  %v348 = vunpack.c.l.b16 %v332
  %v349 = vunpack.c.l.b16 %v333
  %v350 = vunpack.c.l.b16 %v334
  %v351 = vunpack.c.l.b16 %v335
  %v352 = vunpack.c.l.b16 %v336
  %v353 = vunpack.c.l.b16 %v337
  %v354 = vpack.c.b16 %v347, %v346
  %v355 = vpack.c.b16 %v349, %v348
  %v356 = vpack.c.b16 %v351, %v350
  %v357 = vpack.c.b16 %v353, %v352
  %362 = vmatprep.subr.bf16.mxu0 0
  %363 = vmatpush1.bf16.msra.mxu0 0
  %364 = vmatprep.subr.bf16.mxu0 0
  %365 = vmatpush1.bf16.msra.mxu0 0
  %366 = vmatprep.subr.bf16.mxu0 0
  %367 = vmatpush1.bf16.msra.mxu0 0
  %368 = vmatprep.subr.bf16.mxu0 0
  %369 = vmatpush1.bf16.msra.mxu0 0
  %370 = vmatprep.subr.bf16.mxu0 0
  %371 = vmatpush1.bf16.msra.mxu0 %v357
  %372 = vmatprep.subr.bf16.mxu0 0
  %373 = vmatpush1.bf16.msra.mxu0 %v356
  %374 = vmatprep.subr.bf16.mxu0 0
  %375 = vmatpush1.bf16.msra.mxu0 %v355
  %376 = vmatprep.subr.bf16.mxu0 0
  %377 = vmatpush1.bf16.msra.mxu0 %v354
  %378 = vmatprep.subr.bf16.mxu0 0
  %379 = vmatpush2.bf16.msra.mxu0 0
  %380 = vmatprep.subr.bf16.mxu0 0
  %381 = vmatpush2.bf16.msra.mxu0 0
  %382 = vmatprep.subr.bf16.mxu0 0
  %383 = vmatpush2.bf16.msra.mxu0 0
  %384 = vmatprep.subr.bf16.mxu0 0
  %385 = vmatpush2.bf16.msra.mxu0 0
  %386 = vmatprep.subr.bf16.mxu0 0
  %387 = vmatpush2.bf16.msra.mxu0 0
  %388 = vmatprep.subr.bf16.mxu0 0
  %389 = vmatpush2.bf16.msra.mxu0 0
  %390 = vmatprep.subr.bf16.mxu0 0
  %391 = vmatpush2.bf16.msra.mxu0 0
  %392 = vmatprep.subr.bf16.mxu0 0
  %393 = vmatpush2.bf16.msra.mxu0 0
  %394 = vmatprep.mubr.bf16.mxu0 0
  %395 = vmatmul.mubr.bf16.gmra.mxu0 %v216
  %v396 = vpop.f32.mrf.mxu0
  %v397 = vadd.f32 0.0, %v396
  %v398 = vpop.f32.mrf.mxu0
  %v399 = vpop.f32.mrf.mxu0
  %v400 = vpop.f32.mrf.mxu0
  %401 = vdwg.mxu0
  %v402 = vld [vmem:[%s120] sm:$0x1]
  %v403 = vld [vmem:[%s125] sm:$0x1]
  %v404 = vld [vmem:[%s130] sm:$0x1]
  %v405 = vld [vmem:[%s135] sm:$0x1]
  %v406 = vld [vmem:[%s6] sm:$0xff]
  %v407 = vld [vmem:[%s6 + $0x8] sm:$0xff]
  %v408 = vld [vmem:[%s6 + $0x10] sm:$0xff]
  %v409 = vld [vmem:[%s6 + $0x18] sm:$0xff]
  %v410 = vld [vmem:[%s6 + $0x20] sm:$0xff]
  %v411 = vld [vmem:[%s6 + $0x28] sm:$0xff]
  %v412 = vld [vmem:[%s6 + $0x30] sm:$0xff]
  %v413 = vld [vmem:[%s6 + $0x38] sm:$0xff]
  %v415 = vsel %vm214, %v253, 0
  %417 = vmatprep.subr.mxu0 0.0
  %418 = vmatpush1.msra.mxu0 0.0
  %419 = vmatprep.subr.mxu0 0.0
  %420 = vmatpush1.msra.mxu0 0.0
  %421 = vmatprep.subr.mxu0 0.0
  %422 = vmatpush1.msra.mxu0 0.0
  %423 = vmatprep.subr.mxu0 0.0
  %424 = vmatpush1.msra.mxu0 0.0
  %425 = vmatprep.subr.mxu0 0.0
  %426 = vmatpush1.msra.mxu0 0.0
  %427 = vmatprep.subr.mxu0 0.0
  %428 = vmatpush1.msra.mxu0 0.0
  %429 = vmatprep.subr.mxu0 0.0
  %430 = vmatpush1.msra.mxu0 0.0
  %431 = vmatprep.subr.mxu0 0.0
  %432 = vmatpush1.msra.mxu0 0.0
  %433 = vmatprep.subr.mxu0 0.0
  %434 = vmatpush1.msra.mxu0 %v413
  %435 = vmatprep.subr.mxu0 0.0
  %436 = vmatpush1.msra.mxu0 %v412
  %437 = vmatprep.subr.mxu0 0.0
  %438 = vmatpush1.msra.mxu0 %v411
  %439 = vmatprep.subr.mxu0 0.0
  %440 = vmatpush1.msra.mxu0 %v410
  %441 = vmatprep.subr.mxu0 0.0
  %442 = vmatpush1.msra.mxu0 %v409
  %443 = vmatprep.subr.mxu0 0.0
  %444 = vmatpush1.msra.mxu0 %v408
  %445 = vmatprep.subr.mxu0 0.0
  %446 = vmatpush1.msra.mxu0 %v407
  %447 = vmatprep.subr.mxu0 0.0
  %448 = vmatpush1.msra.mxu0 %v406
  %449 = vmatprep.subr.mxu0 0.0
  %450 = vmatpush2.msra.mxu0 0.0
  %451 = vmatprep.subr.mxu0 0.0
  %452 = vmatpush2.msra.mxu0 0.0
  %453 = vmatprep.subr.mxu0 0.0
  %454 = vmatpush2.msra.mxu0 0.0
  %455 = vmatprep.subr.mxu0 0.0
  %456 = vmatpush2.msra.mxu0 0.0
  %457 = vmatprep.subr.mxu0 0.0
  %458 = vmatpush2.msra.mxu0 0.0
  %459 = vmatprep.subr.mxu0 0.0
  %460 = vmatpush2.msra.mxu0 0.0
  %461 = vmatprep.subr.mxu0 0.0
  %462 = vmatpush2.msra.mxu0 0.0
  %463 = vmatprep.subr.mxu0 0.0
  %464 = vmatpush2.msra.mxu0 0.0
  %465 = vmatprep.subr.mxu0 0.0
  %466 = vmatpush2.msra.mxu0 0.0
  %467 = vmatprep.subr.mxu0 0.0
  %468 = vmatpush2.msra.mxu0 0.0
  %469 = vmatprep.subr.mxu0 0.0
  %470 = vmatpush2.msra.mxu0 0.0
  %471 = vmatprep.subr.mxu0 0.0
  %472 = vmatpush2.msra.mxu0 0.0
  %473 = vmatprep.subr.mxu0 0.0
  %474 = vmatpush2.msra.mxu0 0.0
  %475 = vmatprep.subr.mxu0 0.0
  %476 = vmatpush2.msra.mxu0 0.0
  %477 = vmatprep.subr.mxu0 0.0
  %478 = vmatpush2.msra.mxu0 0.0
  %479 = vmatprep.subr.mxu0 0.0
  %480 = vmatpush2.msra.mxu0 0.0
  %481 = vmatprep.mubr.f32.mxu0 0.0
  %482 = vmatmul.mubr.f32.gmra.mxu0 %v415
  %v483 = vpop.f32.mrf.mxu0
  %v484 = vadd.f32 0.0, %v483
  %v485 = vpop.f32.mrf.mxu0
  %486 = vdwg.mxu0
  %v487 = vld [vmem:[%s7] sm:$0xff]
  %v488 = vld [vmem:[%s7 + $0x8] sm:$0xff]
  %v489 = vld [vmem:[%s7 + $0x10] sm:$0xff]
  %v490 = vld [vmem:[%s7 + $0x18] sm:$0xff]
  %vm491 = vcmask 261120
  %v493 = vsel %vm491, %v325, 0
  %495 = vmatprep.subr.mxu0 0.0
  %496 = vmatpush1.msra.mxu0 0.0
  %497 = vmatprep.subr.mxu0 0.0
  %498 = vmatpush1.msra.mxu0 0.0
  %499 = vmatprep.subr.mxu0 0.0
  %500 = vmatpush1.msra.mxu0 0.0
  %501 = vmatprep.subr.mxu0 0.0
  %502 = vmatpush1.msra.mxu0 0.0
  %503 = vmatprep.subr.mxu0 0.0
  %504 = vmatpush1.msra.mxu0 0.0
  %505 = vmatprep.subr.mxu0 0.0
  %506 = vmatpush1.msra.mxu0 0.0
  %507 = vmatprep.subr.mxu0 0.0
  %508 = vmatpush1.msra.mxu0 0.0
  %509 = vmatprep.subr.mxu0 0.0
  %510 = vmatpush1.msra.mxu0 0.0
  %511 = vmatprep.subr.mxu0 0.0
  %512 = vmatpush1.msra.mxu0 0.0
  %513 = vmatprep.subr.mxu0 0.0
  %514 = vmatpush1.msra.mxu0 0.0
  %515 = vmatprep.subr.mxu0 0.0
  %516 = vmatpush1.msra.mxu0 0.0
  %517 = vmatprep.subr.mxu0 0.0
  %518 = vmatpush1.msra.mxu0 0.0
  %519 = vmatprep.subr.mxu0 0.0
  %520 = vmatpush1.msra.mxu0 %v490
  %521 = vmatprep.subr.mxu0 0.0
  %522 = vmatpush1.msra.mxu0 %v489
  %523 = vmatprep.subr.mxu0 0.0
  %524 = vmatpush1.msra.mxu0 %v488
  %525 = vmatprep.subr.mxu0 0.0
  %526 = vmatpush1.msra.mxu0 %v487
  %527 = vmatprep.subr.mxu0 0.0
  %528 = vmatpush2.msra.mxu0 0.0
  %529 = vmatprep.subr.mxu0 0.0
  %530 = vmatpush2.msra.mxu0 0.0
  %531 = vmatprep.subr.mxu0 0.0
  %532 = vmatpush2.msra.mxu0 0.0
  %533 = vmatprep.subr.mxu0 0.0
  %534 = vmatpush2.msra.mxu0 0.0
  %535 = vmatprep.subr.mxu0 0.0
  %536 = vmatpush2.msra.mxu0 0.0
  %537 = vmatprep.subr.mxu0 0.0
  %538 = vmatpush2.msra.mxu0 0.0
  %539 = vmatprep.subr.mxu0 0.0
  %540 = vmatpush2.msra.mxu0 0.0
  %541 = vmatprep.subr.mxu0 0.0
  %542 = vmatpush2.msra.mxu0 0.0
  %543 = vmatprep.subr.mxu0 0.0
  %544 = vmatpush2.msra.mxu0 0.0
  %545 = vmatprep.subr.mxu0 0.0
  %546 = vmatpush2.msra.mxu0 0.0
  %547 = vmatprep.subr.mxu0 0.0
  %548 = vmatpush2.msra.mxu0 0.0
  %549 = vmatprep.subr.mxu0 0.0
  %550 = vmatpush2.msra.mxu0 0.0
  %551 = vmatprep.subr.mxu0 0.0
  %552 = vmatpush2.msra.mxu0 0.0
  %553 = vmatprep.subr.mxu0 0.0
  %554 = vmatpush2.msra.mxu0 0.0
  %555 = vmatprep.subr.mxu0 0.0
  %556 = vmatpush2.msra.mxu0 0.0
  %557 = vmatprep.subr.mxu0 0.0
  %558 = vmatpush2.msra.mxu0 0.0
  %559 = vmatprep.mubr.f32.mxu0 0.0
  %560 = vmatmul.mubr.f32.gmra.mxu0 %v493
  %v561 = vpop.f32.mrf.mxu0
  %v562 = vadd.f32 0.0, %v561
  %v563 = vpop.f32.mrf.mxu0
  %564 = vdwg.mxu0
  %v566 = vlaneseq
  %v567 = vshrl.u32 %v566, 7
  %v568 = vsub.s32 0, %v567
  %v569 = vrot.slane %v402, %v568
  %v571 = vmul.f32 %v253, %v569
  %v573 = vlaneseq
  %v574 = vshrl.u32 %v573, 7
  %v575 = vsub.s32 0, %v574
  %v576 = vrot.slane %v403, %v575
  %v578 = vmul.f32 %v484, %v576
  %v579 = vadd.f32 %v571, %v578
  %v581 = vlaneseq
  %v582 = vshrl.u32 %v581, 7
  %v583 = vsub.s32 0, %v582
  %v584 = vrot.slane %v404, %v583
  %v586 = vmul.f32 %v325, %v584
  %v588 = vlaneseq
  %v589 = vshrl.u32 %v588, 7
  %v590 = vsub.s32 0, %v589
  %v591 = vrot.slane %v405, %v590
  %v593 = vmul.f32 %v562, %v591
  %v594 = vadd.f32 %v586, %v593
  %595 = vst.msk [vmem:[%s14] sm:$0x3] %vm165, %v579
  %vm596 = vcmask 254976
  %597 = vst.msk [vmem:[%s153] sm:$0x3] %vm596, %v594
  %598 = vst.msk [vmem:[%s159] sm:$0x3] %vm596, %v397
  %s599 = sld [smem:[#allocation3]]
  %p600 = scmp.lt.s32.totalorder %s599, 15
  %s601 = scalar_select %p600, %s599, 15
  %s602 = smul.addr %s601, 2
  %s603 = scalar_lea.vmem %s15, %s602
  %s604 = sld [smem:[#allocation3]]
  %p605 = scmp.lt.s32.totalorder %s604, 15
  %s606 = scalar_select %p605, %s604, 15
  %s607 = smul.addr %s606, 2
  %s608 = scalar_lea.vmem %s16, %s607
  // Predicated region
  $region54: #{transformer_forward.5} parent=0 // pred_check
    _
  $region55: #{transformer_forward.5} parent=0 // pred_check_branch
    %610 = sbr.rel (0) target = $region57
  $region56: #{transformer_forward.5} parent=0 // pred_region
    _
  $region57: #{transformer_forward.5} parent=0 // pred_fallthru
    _
  // Predicated region
  $region58: #{transformer_forward.5} parent=0 // pred_check
    _
  $region59: #{transformer_forward.5} parent=0 // pred_check_branch
    %612 = sbr.rel (0) target = $region61
  $region60: #{transformer_forward.5} parent=0 // pred_region
    %s613 = sld [smem:[#allocation3]]
  $region61: #{transformer_forward.5} parent=0 // pred_fallthru
    _
  // Predicated region
  $region62: #{transformer_forward.5} parent=0 // pred_check
    _
  $region63: #{transformer_forward.5} parent=0 // pred_check_branch
    %615 = sbr.rel (0) target = $region65
  $region64: #{transformer_forward.5} parent=0 // pred_region
    %s616 = sld [smem:[#allocation3]]
  $region65: #{transformer_forward.5} parent=0 // pred_fallthru
    _
  // Predicated region
  $region66: #{transformer_forward.5} parent=0 // pred_check
    _
  $region67: #{transformer_forward.5} parent=0 // pred_check_branch
    %618 = sbr.rel (0) target = $region69
  $region68: #{transformer_forward.5} parent=0 // pred_region
    _
  $region69: #{transformer_forward.5} parent=0 // pred_fallthru
    _
  // Predicated region
  $region70: #{transformer_forward.5} parent=0 // pred_check
    _
  $region71: #{transformer_forward.5} parent=0 // pred_check_branch
    %620 = sbr.rel (0) target = $region73
  $region72: #{transformer_forward.5} parent=0 // pred_region
    %s621 = sld [smem:[#allocation3]]
    %p622 = scmp.lt.s32.totalorder %s621, 15
    %s623 = scalar_select %p622, %s621, 15
    %s624 = smul.addr %s623, 2
    %s625 = scalar_lea.vmem %s15, %s624
  $region73: #{transformer_forward.5} parent=0 // pred_fallthru
    _
  // Predicated region
  $region74: #{transformer_forward.5} parent=0 // pred_check
    _
  $region75: #{transformer_forward.5} parent=0 // pred_check_branch
    %627 = sbr.rel (0) target = $region77
  $region76: #{transformer_forward.5} parent=0 // pred_region
    %s628 = sld [smem:[#allocation3]]
    %p629 = scmp.lt.s32.totalorder %s628, 15
    %s630 = scalar_select %p629, %s628, 15
    %s631 = smul.addr %s630, 2
    %s632 = scalar_lea.vmem %s16, %s631
  $region77: #{transformer_forward.5} parent=0 // pred_fallthru
    _

// kernel: transformer_forward.6
$region0: #{transformer_forward.6}
  #allocation0 [shape = 'u32[]', space=smem, size = 0x4, offset = 0x4, fixed_abs, tag = 'smem constant byte address 0x4 - core index']
  #allocation1 [shape = 'u32[144,128]{1,0:T(1,128)}', space=vmem, size = 0x12000, scoped, tag = 'internal scratch']
  #allocation2 [shape = 's32[1]{0}', space=sflag, size = 0x4, scoped, tag = 'scoped memory for transformer_forward.6']
  #allocation3 [shape = 's32[1]{0:T(128)S(6)}', space=smem, size = 0x200, scoped, tag = 'prefetched SMEM operand 0']
  %s0 = inlined_call_operand.<no memory space> [shape: s32[1], index: 0, kind: input, shape index: {}]
  %s1 = inlined_call_operand.vmem [shape: f32[2,64], index: 1, kind: input, shape index: {}]
  %s2 = inlined_call_operand.vmem [shape: f32[2,64], index: 2, kind: input, shape index: {}]
  %s3 = inlined_call_operand.vmem [shape: f32[16,64], index: 3, kind: input, shape index: {}]
  %s4 = inlined_call_operand.vmem [shape: f32[16,64], index: 4, kind: input, shape index: {}]
  %s5 = inlined_call_operand.vmem [shape: bf16[64,64], index: 5, kind: input, shape index: {}]
  %s6 = inlined_call_operand.vmem [shape: f32[1,64], index: 6, kind: input, shape index: {}]
  %s7 = inlined_call_operand.vmem [shape: bf16[64,192], index: 7, kind: input, shape index: {}]
  %s8 = inlined_call_operand.vmem [shape: bf16[64,192], index: 8, kind: input, shape index: {}]
  %s9 = inlined_call_operand.vmem [shape: bf16[192,64], index: 9, kind: input, shape index: {}]
  %s10 = inlined_call_operand.vmem [shape: f32[2,64], index: 10, kind: output, shape index: {}]
  %s11 = sld [smem:[#allocation0]]
  $region46: #{transformer_forward.6} parent=0
    _
  %s13 = ssub.s32 1, %s11
  %s14 = scalar_select 0, %s13, %s11
  %15 = sst [smem:[#allocation3]] %s0
  // Predicated region
  $region2: #{transformer_forward.6} parent=0 // pred_check
    _
  $region3: #{transformer_forward.6} parent=0 // pred_check_branch
    %17 = sbr.rel (0) target = $region5
  $region4: #{transformer_forward.6} parent=0 // pred_region
    _
  $region5: #{transformer_forward.6} parent=0 // pred_fallthru
    _
  // Predicated region
  $region6: #{transformer_forward.6} parent=0 // pred_check
    _
  $region7: #{transformer_forward.6} parent=0 // pred_check_branch
    %19 = sbr.rel (0) target = $region9
  $region8: #{transformer_forward.6} parent=0 // pred_region
    _
  $region9: #{transformer_forward.6} parent=0 // pred_fallthru
    _
  // Predicated region
  $region10: #{transformer_forward.6} parent=0 // pred_check
    _
  $region11: #{transformer_forward.6} parent=0 // pred_check_branch
    %21 = sbr.rel (0) target = $region13
  $region12: #{transformer_forward.6} parent=0 // pred_region
    _
  $region13: #{transformer_forward.6} parent=0 // pred_fallthru
    _
  // Predicated region
  $region14: #{transformer_forward.6} parent=0 // pred_check
    _
  $region15: #{transformer_forward.6} parent=0 // pred_check_branch
    %23 = sbr.rel (0) target = $region17
  $region16: #{transformer_forward.6} parent=0 // pred_region
    _
  $region17: #{transformer_forward.6} parent=0 // pred_fallthru
    _
  // Predicated region
  $region18: #{transformer_forward.6} parent=0 // pred_check
    _
  $region19: #{transformer_forward.6} parent=0 // pred_check_branch
    %25 = sbr.rel (0) target = $region21
  $region20: #{transformer_forward.6} parent=0 // pred_region
    _
  $region21: #{transformer_forward.6} parent=0 // pred_fallthru
    _
  // Predicated region
  $region22: #{transformer_forward.6} parent=0 // pred_check
    _
  $region23: #{transformer_forward.6} parent=0 // pred_check_branch
    %27 = sbr.rel (0) target = $region25
  $region24: #{transformer_forward.6} parent=0 // pred_region
    _
  $region25: #{transformer_forward.6} parent=0 // pred_fallthru
    _
  // Predicated region
  $region26: #{transformer_forward.6} parent=0 // pred_check
    _
  $region27: #{transformer_forward.6} parent=0 // pred_check_branch
    %29 = sbr.rel (0) target = $region29
  $region28: #{transformer_forward.6} parent=0 // pred_region
    _
  $region29: #{transformer_forward.6} parent=0 // pred_fallthru
    _
  // Predicated region
  $region30: #{transformer_forward.6} parent=0 // pred_check
    _
  $region31: #{transformer_forward.6} parent=0 // pred_check_branch
    %31 = sbr.rel (0) target = $region33
  $region32: #{transformer_forward.6} parent=0 // pred_region
    _
  $region33: #{transformer_forward.6} parent=0 // pred_fallthru
    _
  // Predicated region
  $region34: #{transformer_forward.6} parent=0 // pred_check
    _
  $region35: #{transformer_forward.6} parent=0 // pred_check_branch
    %33 = sbr.rel (0) target = $region37
  $region36: #{transformer_forward.6} parent=0 // pred_region
    _
  $region37: #{transformer_forward.6} parent=0 // pred_fallthru
    _
  %s35 = sld [smem:[#allocation3]]
  %v36 = vld [vmem:[%s1] sm:$0x3]
  %v37 = vld [vmem:[%s2] sm:$0x3]
  %v38 = vld [vmem:[%s3] sm:$0xff]
  %v39 = vld [vmem:[%s3 + $0x8] sm:$0xff]
  %v40 = vld [vmem:[%s4] sm:$0xff]
  %v41 = vld [vmem:[%s4 + $0x8] sm:$0xff]
  %v42 = vld [vmem:[%s5] sm:$0xf]
  %v43 = vld [vmem:[%s5 + $0x4] sm:$0xf]
  %v44 = vld [vmem:[%s5 + $0x8] sm:$0xf]
  %v45 = vld [vmem:[%s5 + $0xc] sm:$0xf]
  %v46 = vld [vmem:[%s5 + $0x10] sm:$0xf]
  %v47 = vld [vmem:[%s5 + $0x14] sm:$0xf]
  %v48 = vld [vmem:[%s5 + $0x18] sm:$0xf]
  %v49 = vld [vmem:[%s5 + $0x1c] sm:$0xf]
  %v50 = vlaneseq
  %v51 = vand.u32 %v50, 127
  %v52 = vstv %s35
  %vm53 = vcmp.le.s32.totalorder %v51, %v52
  %vm54 = vcmask 130048
  %v56 = vsel %vm54, %v37, 0
  %v59 = vsel %vm54, %v38, 0
  %v62 = vsel %vm54, %v39, 0
  %64 = vmatprep.subr.mxu0 0.0
  %65 = vmatpush1.xpose.msra.mxu0 0.0
  %66 = vmatprep.subr.mxu0 0.0
  %67 = vmatpush1.xpose.msra.mxu0 0.0
  %68 = vmatprep.subr.mxu0 0.0
  %69 = vmatpush1.xpose.msra.mxu0 0.0
  %70 = vmatprep.subr.mxu0 0.0
  %71 = vmatpush1.xpose.msra.mxu0 0.0
  %72 = vmatprep.subr.mxu0 0.0
  %73 = vmatpush1.xpose.msra.mxu0 0.0
  %74 = vmatprep.subr.mxu0 0.0
  %75 = vmatpush1.xpose.msra.mxu0 0.0
  %76 = vmatprep.subr.mxu0 0.0
  %77 = vmatpush1.xpose.msra.mxu0 0.0
  %78 = vmatprep.subr.mxu0 0.0
  %79 = vmatpush1.xpose.msra.mxu0 0.0
  %80 = vmatprep.subr.mxu0 0.0
  %81 = vmatpush1.xpose.msra.mxu0 0.0
  %82 = vmatprep.subr.mxu0 0.0
  %83 = vmatpush1.xpose.msra.mxu0 0.0
  %84 = vmatprep.subr.mxu0 0.0
  %85 = vmatpush1.xpose.msra.mxu0 0.0
  %86 = vmatprep.subr.mxu0 0.0
  %87 = vmatpush1.xpose.msra.mxu0 0.0
  %88 = vmatprep.subr.mxu0 0.0
  %89 = vmatpush1.xpose.msra.mxu0 0.0
  %90 = vmatprep.subr.mxu0 0.0
  %91 = vmatpush1.xpose.msra.mxu0 0.0
  %92 = vmatprep.subr.mxu0 0.0
  %93 = vmatpush1.xpose.msra.mxu0 %v62
  %94 = vmatprep.subr.mxu0 0.0
  %95 = vmatpush1.xpose.msra.mxu0 %v59
  %96 = vmatprep.subr.mxu0 0.0
  %97 = vmatpush2.xpose.msra.mxu0 0.0
  %98 = vmatprep.subr.mxu0 0.0
  %99 = vmatpush2.xpose.msra.mxu0 0.0
  %100 = vmatprep.subr.mxu0 0.0
  %101 = vmatpush2.xpose.msra.mxu0 0.0
  %102 = vmatprep.subr.mxu0 0.0
  %103 = vmatpush2.xpose.msra.mxu0 0.0
  %104 = vmatprep.subr.mxu0 0.0
  %105 = vmatpush2.xpose.msra.mxu0 0.0
  %106 = vmatprep.subr.mxu0 0.0
  %107 = vmatpush2.xpose.msra.mxu0 0.0
  %108 = vmatprep.subr.mxu0 0.0
  %109 = vmatpush2.xpose.msra.mxu0 0.0
  %110 = vmatprep.subr.mxu0 0.0
  %111 = vmatpush2.xpose.msra.mxu0 0.0
  %112 = vmatprep.subr.mxu0 0.0
  %113 = vmatpush2.xpose.msra.mxu0 0.0
  %114 = vmatprep.subr.mxu0 0.0
  %115 = vmatpush2.xpose.msra.mxu0 0.0
  %116 = vmatprep.subr.mxu0 0.0
  %117 = vmatpush2.xpose.msra.mxu0 0.0
  %118 = vmatprep.subr.mxu0 0.0
  %119 = vmatpush2.xpose.msra.mxu0 0.0
  %120 = vmatprep.subr.mxu0 0.0
  %121 = vmatpush2.xpose.msra.mxu0 0.0
  %122 = vmatprep.subr.mxu0 0.0
  %123 = vmatpush2.xpose.msra.mxu0 0.0
  %124 = vmatprep.subr.mxu0 0.0
  %125 = vmatpush2.xpose.msra.mxu0 0.0
  %126 = vmatprep.subr.mxu0 0.0
  %127 = vmatpush2.xpose.msra.mxu0 0.0
  %128 = vmatprep.mubr.f32.mxu0 0.0
  %129 = vmatmul.mubr.f32.gmra.mxu0 %v56
  %v130 = vpop.f32.mrf.mxu0
  %v131 = vadd.f32 0.0, %v130
  %v132 = vpop.f32.mrf.mxu0
  %133 = vdwg.mxu0
  %v134 = vmul.f32 %v131, 0.25
  %v135 = vsel %vm53, %v134, -1e+30
  %vm136 = vcmask 122880
  %v137 = vsel %vm136, %v135, -inf
  %138 = vmax.xlane.f32.xlu0 %v137
  %v139 = vpop.xlane.xlu0 %138
  %v140 = vsub.f32 %v135, %v139
  %v141 = vmul.f32 %v140, 1.442695
  %v142 = vpow.pop %v141
  %v143 = vsel %vm136, %v142, 0.0
  %144 = vadd.xlane.f32.xlu0 %v143
  %v145 = vpop.xlane.xlu0 %144
  %v146 = vrcp.pop %v145
  %v147 = vmul.f32 %v142, %v146
  %v149 = vsel %vm54, %v147, 0
  %151 = vmatprep.subr.mxu0 0.0
  %152 = vmatpush1.msra.mxu0 0.0
  %153 = vmatprep.subr.mxu0 0.0
  %154 = vmatpush1.msra.mxu0 0.0
  %155 = vmatprep.subr.mxu0 0.0
  %156 = vmatpush1.msra.mxu0 0.0
  %157 = vmatprep.subr.mxu0 0.0
  %158 = vmatpush1.msra.mxu0 0.0
  %159 = vmatprep.subr.mxu0 0.0
  %160 = vmatpush1.msra.mxu0 0.0
  %161 = vmatprep.subr.mxu0 0.0
  %162 = vmatpush1.msra.mxu0 0.0
  %163 = vmatprep.subr.mxu0 0.0
  %164 = vmatpush1.msra.mxu0 0.0
  %165 = vmatprep.subr.mxu0 0.0
  %166 = vmatpush1.msra.mxu0 0.0
  %167 = vmatprep.subr.mxu0 0.0
  %168 = vmatpush1.msra.mxu0 0.0
  %169 = vmatprep.subr.mxu0 0.0
  %170 = vmatpush1.msra.mxu0 0.0
  %171 = vmatprep.subr.mxu0 0.0
  %172 = vmatpush1.msra.mxu0 0.0
  %173 = vmatprep.subr.mxu0 0.0
  %174 = vmatpush1.msra.mxu0 0.0
  %175 = vmatprep.subr.mxu0 0.0
  %176 = vmatpush1.msra.mxu0 0.0
  %177 = vmatprep.subr.mxu0 0.0
  %178 = vmatpush1.msra.mxu0 0.0
  %179 = vmatprep.subr.mxu0 0.0
  %180 = vmatpush1.msra.mxu0 %v41
  %181 = vmatprep.subr.mxu0 0.0
  %182 = vmatpush1.msra.mxu0 %v40
  %183 = vmatprep.subr.mxu0 0.0
  %184 = vmatpush2.msra.mxu0 0.0
  %185 = vmatprep.subr.mxu0 0.0
  %186 = vmatpush2.msra.mxu0 0.0
  %187 = vmatprep.subr.mxu0 0.0
  %188 = vmatpush2.msra.mxu0 0.0
  %189 = vmatprep.subr.mxu0 0.0
  %190 = vmatpush2.msra.mxu0 0.0
  %191 = vmatprep.subr.mxu0 0.0
  %192 = vmatpush2.msra.mxu0 0.0
  %193 = vmatprep.subr.mxu0 0.0
  %194 = vmatpush2.msra.mxu0 0.0
  %195 = vmatprep.subr.mxu0 0.0
  %196 = vmatpush2.msra.mxu0 0.0
  %197 = vmatprep.subr.mxu0 0.0
  %198 = vmatpush2.msra.mxu0 0.0
  %199 = vmatprep.subr.mxu0 0.0
  %200 = vmatpush2.msra.mxu0 0.0
  %201 = vmatprep.subr.mxu0 0.0
  %202 = vmatpush2.msra.mxu0 0.0
  %203 = vmatprep.subr.mxu0 0.0
  %204 = vmatpush2.msra.mxu0 0.0
  %205 = vmatprep.subr.mxu0 0.0
  %206 = vmatpush2.msra.mxu0 0.0
  %207 = vmatprep.subr.mxu0 0.0
  %208 = vmatpush2.msra.mxu0 0.0
  %209 = vmatprep.subr.mxu0 0.0
  %210 = vmatpush2.msra.mxu0 0.0
  %211 = vmatprep.subr.mxu0 0.0
  %212 = vmatpush2.msra.mxu0 0.0
  %213 = vmatprep.subr.mxu0 0.0
  %214 = vmatpush2.msra.mxu0 0.0
  %215 = vmatprep.mubr.f32.mxu0 0.0
  %216 = vmatmul.mubr.f32.gmra.mxu0 %v149
  %v217 = vpop.f32.mrf.mxu0
  %v218 = vadd.f32 0.0, %v217
  %v219 = vpop.f32.mrf.mxu0
  %220 = vdwg.mxu0
  %v221 = vpack.c.bf16 %v218, %v218
  %222 = vrot.lane.b32.xlu0 %v37, 112
  %v223 = vpop.permute.xlu0 %222
  %v224 = vsel %vm54, %v223, 0
  %226 = vmatprep.subr.mxu0 0.0
  %227 = vmatpush1.xpose.msra.mxu0 0.0
  %228 = vmatprep.subr.mxu0 0.0
  %229 = vmatpush1.xpose.msra.mxu0 0.0
  %230 = vmatprep.subr.mxu0 0.0
  %231 = vmatpush1.xpose.msra.mxu0 0.0
  %232 = vmatprep.subr.mxu0 0.0
  %233 = vmatpush1.xpose.msra.mxu0 0.0
  %234 = vmatprep.subr.mxu0 0.0
  %235 = vmatpush1.xpose.msra.mxu0 0.0
  %236 = vmatprep.subr.mxu0 0.0
  %237 = vmatpush1.xpose.msra.mxu0 0.0
  %238 = vmatprep.subr.mxu0 0.0
  %239 = vmatpush1.xpose.msra.mxu0 0.0
  %240 = vmatprep.subr.mxu0 0.0
  %241 = vmatpush1.xpose.msra.mxu0 0.0
  %242 = vmatprep.subr.mxu0 0.0
  %243 = vmatpush1.xpose.msra.mxu0 0.0
  %244 = vmatprep.subr.mxu0 0.0
  %245 = vmatpush1.xpose.msra.mxu0 0.0
  %246 = vmatprep.subr.mxu0 0.0
  %247 = vmatpush1.xpose.msra.mxu0 0.0
  %248 = vmatprep.subr.mxu0 0.0
  %249 = vmatpush1.xpose.msra.mxu0 0.0
  %250 = vmatprep.subr.mxu0 0.0
  %251 = vmatpush1.xpose.msra.mxu0 0.0
  %252 = vmatprep.subr.mxu0 0.0
  %253 = vmatpush1.xpose.msra.mxu0 0.0
  %254 = vmatprep.subr.mxu0 0.0
  %255 = vmatpush1.xpose.msra.mxu0 %v62
  %256 = vmatprep.subr.mxu0 0.0
  %257 = vmatpush1.xpose.msra.mxu0 %v59
  %258 = vmatprep.subr.mxu0 0.0
  %259 = vmatpush2.xpose.msra.mxu0 0.0
  %260 = vmatprep.subr.mxu0 0.0
  %261 = vmatpush2.xpose.msra.mxu0 0.0
  %262 = vmatprep.subr.mxu0 0.0
  %263 = vmatpush2.xpose.msra.mxu0 0.0
  %264 = vmatprep.subr.mxu0 0.0
  %265 = vmatpush2.xpose.msra.mxu0 0.0
  %266 = vmatprep.subr.mxu0 0.0
  %267 = vmatpush2.xpose.msra.mxu0 0.0
  %268 = vmatprep.subr.mxu0 0.0
  %269 = vmatpush2.xpose.msra.mxu0 0.0
  %270 = vmatprep.subr.mxu0 0.0
  %271 = vmatpush2.xpose.msra.mxu0 0.0
  %272 = vmatprep.subr.mxu0 0.0
  %273 = vmatpush2.xpose.msra.mxu0 0.0
  %274 = vmatprep.subr.mxu0 0.0
  %275 = vmatpush2.xpose.msra.mxu0 0.0
  %276 = vmatprep.subr.mxu0 0.0
  %277 = vmatpush2.xpose.msra.mxu0 0.0
  %278 = vmatprep.subr.mxu0 0.0
  %279 = vmatpush2.xpose.msra.mxu0 0.0
  %280 = vmatprep.subr.mxu0 0.0
  %281 = vmatpush2.xpose.msra.mxu0 0.0
  %282 = vmatprep.subr.mxu0 0.0
  %283 = vmatpush2.xpose.msra.mxu0 0.0
  %284 = vmatprep.subr.mxu0 0.0
  %285 = vmatpush2.xpose.msra.mxu0 0.0
  %286 = vmatprep.subr.mxu0 0.0
  %287 = vmatpush2.xpose.msra.mxu0 0.0
  %288 = vmatprep.subr.mxu0 0.0
  %289 = vmatpush2.xpose.msra.mxu0 0.0
  %290 = vmatprep.mubr.f32.mxu0 0.0
  %291 = vmatmul.mubr.f32.gmra.mxu0 %v224
  %v292 = vpop.f32.mrf.mxu0
  %v293 = vadd.f32 0.0, %v292
  %v294 = vpop.f32.mrf.mxu0
  %295 = vdwg.mxu0
  %v296 = vmul.f32 %v293, 0.25
  %v297 = vsel %vm53, %v296, -1e+30
  %v298 = vsel %vm136, %v297, -inf
  %299 = vmax.xlane.f32.xlu0 %v298
  %v300 = vpop.xlane.xlu0 %299
  %v301 = vsub.f32 %v297, %v300
  %v302 = vmul.f32 %v301, 1.442695
  %v303 = vpow.pop %v302
  %v304 = vsel %vm136, %v303, 0.0
  %305 = vadd.xlane.f32.xlu0 %v304
  %v306 = vpop.xlane.xlu0 %305
  %v307 = vrcp.pop %v306
  %v308 = vmul.f32 %v303, %v307
  %v310 = vsel %vm54, %v308, 0
  %312 = vmatprep.subr.mxu0 0.0
  %313 = vmatpush1.msra.mxu0 0.0
  %314 = vmatprep.subr.mxu0 0.0
  %315 = vmatpush1.msra.mxu0 0.0
  %316 = vmatprep.subr.mxu0 0.0
  %317 = vmatpush1.msra.mxu0 0.0
  %318 = vmatprep.subr.mxu0 0.0
  %319 = vmatpush1.msra.mxu0 0.0
  %320 = vmatprep.subr.mxu0 0.0
  %321 = vmatpush1.msra.mxu0 0.0
  %322 = vmatprep.subr.mxu0 0.0
  %323 = vmatpush1.msra.mxu0 0.0
  %324 = vmatprep.subr.mxu0 0.0
  %325 = vmatpush1.msra.mxu0 0.0
  %326 = vmatprep.subr.mxu0 0.0
  %327 = vmatpush1.msra.mxu0 0.0
  %328 = vmatprep.subr.mxu0 0.0
  %329 = vmatpush1.msra.mxu0 0.0
  %330 = vmatprep.subr.mxu0 0.0
  %331 = vmatpush1.msra.mxu0 0.0
  %332 = vmatprep.subr.mxu0 0.0
  %333 = vmatpush1.msra.mxu0 0.0
  %334 = vmatprep.subr.mxu0 0.0
  %335 = vmatpush1.msra.mxu0 0.0
  %336 = vmatprep.subr.mxu0 0.0
  %337 = vmatpush1.msra.mxu0 0.0
  %338 = vmatprep.subr.mxu0 0.0
  %339 = vmatpush1.msra.mxu0 0.0
  %340 = vmatprep.subr.mxu0 0.0
  %341 = vmatpush1.msra.mxu0 %v41
  %342 = vmatprep.subr.mxu0 0.0
  %343 = vmatpush1.msra.mxu0 %v40
  %344 = vmatprep.subr.mxu0 0.0
  %345 = vmatpush2.msra.mxu0 0.0
  %346 = vmatprep.subr.mxu0 0.0
  %347 = vmatpush2.msra.mxu0 0.0
  %348 = vmatprep.subr.mxu0 0.0
  %349 = vmatpush2.msra.mxu0 0.0
  %350 = vmatprep.subr.mxu0 0.0
  %351 = vmatpush2.msra.mxu0 0.0
  %352 = vmatprep.subr.mxu0 0.0
  %353 = vmatpush2.msra.mxu0 0.0
  %354 = vmatprep.subr.mxu0 0.0
  %355 = vmatpush2.msra.mxu0 0.0
  %356 = vmatprep.subr.mxu0 0.0
  %357 = vmatpush2.msra.mxu0 0.0
  %358 = vmatprep.subr.mxu0 0.0
  %359 = vmatpush2.msra.mxu0 0.0
  %360 = vmatprep.subr.mxu0 0.0
  %361 = vmatpush2.msra.mxu0 0.0
  %362 = vmatprep.subr.mxu0 0.0
  %363 = vmatpush2.msra.mxu0 0.0
  %364 = vmatprep.subr.mxu0 0.0
  %365 = vmatpush2.msra.mxu0 0.0
  %366 = vmatprep.subr.mxu0 0.0
  %367 = vmatpush2.msra.mxu0 0.0
  %368 = vmatprep.subr.mxu0 0.0
  %369 = vmatpush2.msra.mxu0 0.0
  %370 = vmatprep.subr.mxu0 0.0
  %371 = vmatpush2.msra.mxu0 0.0
  %372 = vmatprep.subr.mxu0 0.0
  %373 = vmatpush2.msra.mxu0 0.0
  %374 = vmatprep.subr.mxu0 0.0
  %375 = vmatpush2.msra.mxu0 0.0
  %376 = vmatprep.mubr.f32.mxu0 0.0
  %377 = vmatmul.mubr.f32.gmra.mxu0 %v310
  %v378 = vpop.f32.mrf.mxu0
  %v379 = vadd.f32 0.0, %v378
  %v380 = vpop.f32.mrf.mxu0
  %381 = vdwg.mxu0
  %v382 = vpack.c.bf16 %v379, %v379
  %v385 = vunpack.c.l.b16 %v44
  %v386 = vunpack.c.l.b16 %v45
  %v387 = vpack.c.b16 %v386, %v385
  %v390 = vsel %vm54, %v382, 0
  %392 = vmatprep.subr.bf16.mxu0 0
  %393 = vmatpush1.bf16.msra.mxu0 0
  %394 = vmatprep.subr.bf16.mxu0 0
  %395 = vmatpush1.bf16.msra.mxu0 0
  %396 = vmatprep.subr.bf16.mxu0 0
  %397 = vmatpush1.bf16.msra.mxu0 0
  %398 = vmatprep.subr.bf16.mxu0 0
  %399 = vmatpush1.bf16.msra.mxu0 0
  %400 = vmatprep.subr.bf16.mxu0 0
  %401 = vmatpush1.bf16.msra.mxu0 0
  %402 = vmatprep.subr.bf16.mxu0 0
  %403 = vmatpush1.bf16.msra.mxu0 0
  %404 = vmatprep.subr.bf16.mxu0 0
  %405 = vmatpush1.bf16.msra.mxu0 0
  %406 = vmatprep.subr.bf16.mxu0 0
  %407 = vmatpush1.bf16.msra.mxu0 %v387
  %408 = vmatprep.subr.bf16.mxu0 0
  %409 = vmatpush2.bf16.msra.mxu0 0
  %410 = vmatprep.subr.bf16.mxu0 0
  %411 = vmatpush2.bf16.msra.mxu0 0
  %412 = vmatprep.subr.bf16.mxu0 0
  %413 = vmatpush2.bf16.msra.mxu0 0
  %414 = vmatprep.subr.bf16.mxu0 0
  %415 = vmatpush2.bf16.msra.mxu0 0
  %416 = vmatprep.subr.bf16.mxu0 0
  %417 = vmatpush2.bf16.msra.mxu0 0
  %418 = vmatprep.subr.bf16.mxu0 0
  %419 = vmatpush2.bf16.msra.mxu0 0
  %420 = vmatprep.subr.bf16.mxu0 0
  %421 = vmatpush2.bf16.msra.mxu0 0
  %422 = vmatprep.subr.bf16.mxu0 0
  %423 = vmatpush2.bf16.msra.mxu0 0
  %424 = vmatprep.mubr.bf16.mxu0 0
  %425 = vmatmul.mubr.bf16.gmra.mxu0 %v390
  %v426 = vpop.f32.mrf.mxu0
  %v427 = vadd.f32 0.0, %v426
  %v428 = vpop.f32.mrf.mxu0
  %v429 = vpop.f32.mrf.mxu0
  %v430 = vpop.f32.mrf.mxu0
  %431 = vdwg.mxu0
  %v434 = vunpack.c.l.b16 %v42
  %v435 = vunpack.c.l.b16 %v43
  %v436 = vpack.c.b16 %v435, %v434
  %v439 = vsel %vm54, %v221, 0
  %441 = vmatprep.subr.bf16.mxu0 0
  %442 = vmatpush1.bf16.msra.mxu0 0
  %443 = vmatprep.subr.bf16.mxu0 0
  %444 = vmatpush1.bf16.msra.mxu0 0
  %445 = vmatprep.subr.bf16.mxu0 0
  %446 = vmatpush1.bf16.msra.mxu0 0
  %447 = vmatprep.subr.bf16.mxu0 0
  %448 = vmatpush1.bf16.msra.mxu0 0
  %449 = vmatprep.subr.bf16.mxu0 0
  %450 = vmatpush1.bf16.msra.mxu0 0
  %451 = vmatprep.subr.bf16.mxu0 0
  %452 = vmatpush1.bf16.msra.mxu0 0
  %453 = vmatprep.subr.bf16.mxu0 0
  %454 = vmatpush1.bf16.msra.mxu0 0
  %455 = vmatprep.subr.bf16.mxu0 0
  %456 = vmatpush1.bf16.msra.mxu0 %v436
  %457 = vmatprep.subr.bf16.mxu0 0
  %458 = vmatpush2.bf16.msra.mxu0 0
  %459 = vmatprep.subr.bf16.mxu0 0
  %460 = vmatpush2.bf16.msra.mxu0 0
  %461 = vmatprep.subr.bf16.mxu0 0
  %462 = vmatpush2.bf16.msra.mxu0 0
  %463 = vmatprep.subr.bf16.mxu0 0
  %464 = vmatpush2.bf16.msra.mxu0 0
  %465 = vmatprep.subr.bf16.mxu0 0
  %466 = vmatpush2.bf16.msra.mxu0 0
  %467 = vmatprep.subr.bf16.mxu0 0
  %468 = vmatpush2.bf16.msra.mxu0 0
  %469 = vmatprep.subr.bf16.mxu0 0
  %470 = vmatpush2.bf16.msra.mxu0 0
  %471 = vmatprep.subr.bf16.mxu0 0
  %472 = vmatpush2.bf16.msra.mxu0 0
  %473 = vmatprep.mubr.bf16.mxu0 0
  %474 = vmatmul.mubr.bf16.gmra.mxu0 %v439
  %v475 = vpop.f32.mrf.mxu0
  %v476 = vadd.f32 %v427, %v475
  %v477 = vpop.f32.mrf.mxu0
  %v478 = vpop.f32.mrf.mxu0
  %v479 = vpop.f32.mrf.mxu0
  %480 = vdwg.mxu0
  %481 = vrot.lane.b32.xlu0 %v37, 96
  %v482 = vpop.permute.xlu0 %481
  %483 = vrot.lane.b32.xlu0 %v38, 112
  %v484 = vpop.permute.xlu0 %483
  %485 = vrot.lane.b32.xlu0 %v39, 112
  %v486 = vpop.permute.xlu0 %485
  %v487 = vsel %vm54, %v482, 0
  %v489 = vsel %vm54, %v484, 0
  %v491 = vsel %vm54, %v486, 0
  %493 = vmatprep.subr.mxu0 0.0
  %494 = vmatpush1.xpose.msra.mxu0 0.0
  %495 = vmatprep.subr.mxu0 0.0
  %496 = vmatpush1.xpose.msra.mxu0 0.0
  %497 = vmatprep.subr.mxu0 0.0
  %498 = vmatpush1.xpose.msra.mxu0 0.0
  %499 = vmatprep.subr.mxu0 0.0
  %500 = vmatpush1.xpose.msra.mxu0 0.0
  %501 = vmatprep.subr.mxu0 0.0
  %502 = vmatpush1.xpose.msra.mxu0 0.0
  %503 = vmatprep.subr.mxu0 0.0
  %504 = vmatpush1.xpose.msra.mxu0 0.0
  %505 = vmatprep.subr.mxu0 0.0
  %506 = vmatpush1.xpose.msra.mxu0 0.0
  %507 = vmatprep.subr.mxu0 0.0
  %508 = vmatpush1.xpose.msra.mxu0 0.0
  %509 = vmatprep.subr.mxu0 0.0
  %510 = vmatpush1.xpose.msra.mxu0 0.0
  %511 = vmatprep.subr.mxu0 0.0
  %512 = vmatpush1.xpose.msra.mxu0 0.0
  %513 = vmatprep.subr.mxu0 0.0
  %514 = vmatpush1.xpose.msra.mxu0 0.0
  %515 = vmatprep.subr.mxu0 0.0
  %516 = vmatpush1.xpose.msra.mxu0 0.0
  %517 = vmatprep.subr.mxu0 0.0
  %518 = vmatpush1.xpose.msra.mxu0 0.0
  %519 = vmatprep.subr.mxu0 0.0
  %520 = vmatpush1.xpose.msra.mxu0 0.0
  %521 = vmatprep.subr.mxu0 0.0
  %522 = vmatpush1.xpose.msra.mxu0 %v491
  %523 = vmatprep.subr.mxu0 0.0
  %524 = vmatpush1.xpose.msra.mxu0 %v489
  %525 = vmatprep.subr.mxu0 0.0
  %526 = vmatpush2.xpose.msra.mxu0 0.0
  %527 = vmatprep.subr.mxu0 0.0
  %528 = vmatpush2.xpose.msra.mxu0 0.0
  %529 = vmatprep.subr.mxu0 0.0
  %530 = vmatpush2.xpose.msra.mxu0 0.0
  %531 = vmatprep.subr.mxu0 0.0
  %532 = vmatpush2.xpose.msra.mxu0 0.0
  %533 = vmatprep.subr.mxu0 0.0
  %534 = vmatpush2.xpose.msra.mxu0 0.0
  %535 = vmatprep.subr.mxu0 0.0
  %536 = vmatpush2.xpose.msra.mxu0 0.0
  %537 = vmatprep.subr.mxu0 0.0
  %538 = vmatpush2.xpose.msra.mxu0 0.0
  %539 = vmatprep.subr.mxu0 0.0
  %540 = vmatpush2.xpose.msra.mxu0 0.0
  %541 = vmatprep.subr.mxu0 0.0
  %542 = vmatpush2.xpose.msra.mxu0 0.0
  %543 = vmatprep.subr.mxu0 0.0
  %544 = vmatpush2.xpose.msra.mxu0 0.0
  %545 = vmatprep.subr.mxu0 0.0
  %546 = vmatpush2.xpose.msra.mxu0 0.0
  %547 = vmatprep.subr.mxu0 0.0
  %548 = vmatpush2.xpose.msra.mxu0 0.0
  %549 = vmatprep.subr.mxu0 0.0
  %550 = vmatpush2.xpose.msra.mxu0 0.0
  %551 = vmatprep.subr.mxu0 0.0
  %552 = vmatpush2.xpose.msra.mxu0 0.0
  %553 = vmatprep.subr.mxu0 0.0
  %554 = vmatpush2.xpose.msra.mxu0 0.0
  %555 = vmatprep.subr.mxu0 0.0
  %556 = vmatpush2.xpose.msra.mxu0 0.0
  %557 = vmatprep.mubr.f32.mxu0 0.0
  %558 = vmatmul.mubr.f32.gmra.mxu0 %v487
  %v559 = vpop.f32.mrf.mxu0
  %v560 = vadd.f32 0.0, %v559
  %v561 = vpop.f32.mrf.mxu0
  %562 = vdwg.mxu0
  %v563 = vmul.f32 %v560, 0.25
  %v564 = vsel %vm53, %v563, -1e+30
  %v565 = vsel %vm136, %v564, -inf
  %566 = vmax.xlane.f32.xlu0 %v565
  %v567 = vpop.xlane.xlu0 %566
  %v568 = vsub.f32 %v564, %v567
  %v569 = vmul.f32 %v568, 1.442695
  %v570 = vpow.pop %v569
  %v571 = vsel %vm136, %v570, 0.0
  %572 = vadd.xlane.f32.xlu0 %v571
  %v573 = vpop.xlane.xlu0 %572
  %v574 = vrcp.pop %v573
  %v575 = vmul.f32 %v570, %v574
  %578 = vrot.lane.b32.xlu0 %v40, 112
  %v579 = vpop.permute.xlu0 %578
  %580 = vrot.lane.b32.xlu0 %v41, 112
  %v581 = vpop.permute.xlu0 %580
  %v585 = vsel %vm54, %v575, 0
  %587 = vmatprep.subr.mxu0 0.0
  %588 = vmatpush1.msra.mxu0 0.0
  %589 = vmatprep.subr.mxu0 0.0
  %590 = vmatpush1.msra.mxu0 0.0
  %591 = vmatprep.subr.mxu0 0.0
  %592 = vmatpush1.msra.mxu0 0.0
  %593 = vmatprep.subr.mxu0 0.0
  %594 = vmatpush1.msra.mxu0 0.0
  %595 = vmatprep.subr.mxu0 0.0
  %596 = vmatpush1.msra.mxu0 0.0
  %597 = vmatprep.subr.mxu0 0.0
  %598 = vmatpush1.msra.mxu0 0.0
  %599 = vmatprep.subr.mxu0 0.0
  %600 = vmatpush1.msra.mxu0 0.0
  %601 = vmatprep.subr.mxu0 0.0
  %602 = vmatpush1.msra.mxu0 0.0
  %603 = vmatprep.subr.mxu0 0.0
  %604 = vmatpush1.msra.mxu0 0.0
  %605 = vmatprep.subr.mxu0 0.0
  %606 = vmatpush1.msra.mxu0 0.0
  %607 = vmatprep.subr.mxu0 0.0
  %608 = vmatpush1.msra.mxu0 0.0
  %609 = vmatprep.subr.mxu0 0.0
  %610 = vmatpush1.msra.mxu0 0.0
  %611 = vmatprep.subr.mxu0 0.0
  %612 = vmatpush1.msra.mxu0 0.0
  %613 = vmatprep.subr.mxu0 0.0
  %614 = vmatpush1.msra.mxu0 0.0
  %615 = vmatprep.subr.mxu0 0.0
  %616 = vmatpush1.msra.mxu0 %v581
  %617 = vmatprep.subr.mxu0 0.0
  %618 = vmatpush1.msra.mxu0 %v579
  %619 = vmatprep.subr.mxu0 0.0
  %620 = vmatpush2.msra.mxu0 0.0
  %621 = vmatprep.subr.mxu0 0.0
  %622 = vmatpush2.msra.mxu0 0.0
  %623 = vmatprep.subr.mxu0 0.0
  %624 = vmatpush2.msra.mxu0 0.0
  %625 = vmatprep.subr.mxu0 0.0
  %626 = vmatpush2.msra.mxu0 0.0
  %627 = vmatprep.subr.mxu0 0.0
  %628 = vmatpush2.msra.mxu0 0.0
  %629 = vmatprep.subr.mxu0 0.0
  %630 = vmatpush2.msra.mxu0 0.0
  %631 = vmatprep.subr.mxu0 0.0
  %632 = vmatpush2.msra.mxu0 0.0
  %633 = vmatprep.subr.mxu0 0.0
  %634 = vmatpush2.msra.mxu0 0.0
  %635 = vmatprep.subr.mxu0 0.0
  %636 = vmatpush2.msra.mxu0 0.0
  %637 = vmatprep.subr.mxu0 0.0
  %638 = vmatpush2.msra.mxu0 0.0
  %639 = vmatprep.subr.mxu0 0.0
  %640 = vmatpush2.msra.mxu0 0.0
  %641 = vmatprep.subr.mxu0 0.0
  %642 = vmatpush2.msra.mxu0 0.0
  %643 = vmatprep.subr.mxu0 0.0
  %644 = vmatpush2.msra.mxu0 0.0
  %645 = vmatprep.subr.mxu0 0.0
  %646 = vmatpush2.msra.mxu0 0.0
  %647 = vmatprep.subr.mxu0 0.0
  %648 = vmatpush2.msra.mxu0 0.0
  %649 = vmatprep.subr.mxu0 0.0
  %650 = vmatpush2.msra.mxu0 0.0
  %651 = vmatprep.mubr.f32.mxu0 0.0
  %652 = vmatmul.mubr.f32.gmra.mxu0 %v585
  %v653 = vpop.f32.mrf.mxu0
  %v654 = vadd.f32 0.0, %v653
  %v655 = vpop.f32.mrf.mxu0
  %656 = vdwg.mxu0
  %v657 = vpack.c.bf16 %v654, %v654
  %v660 = vunpack.c.l.b16 %v46
  %v661 = vunpack.c.l.b16 %v47
  %v662 = vpack.c.b16 %v661, %v660
  %v665 = vsel %vm54, %v657, 0
  %667 = vmatprep.subr.bf16.mxu0 0
  %668 = vmatpush1.bf16.msra.mxu0 0
  %669 = vmatprep.subr.bf16.mxu0 0
  %670 = vmatpush1.bf16.msra.mxu0 0
  %671 = vmatprep.subr.bf16.mxu0 0
  %672 = vmatpush1.bf16.msra.mxu0 0
  %673 = vmatprep.subr.bf16.mxu0 0
  %674 = vmatpush1.bf16.msra.mxu0 0
  %675 = vmatprep.subr.bf16.mxu0 0
  %676 = vmatpush1.bf16.msra.mxu0 0
  %677 = vmatprep.subr.bf16.mxu0 0
  %678 = vmatpush1.bf16.msra.mxu0 0
  %679 = vmatprep.subr.bf16.mxu0 0
  %680 = vmatpush1.bf16.msra.mxu0 0
  %681 = vmatprep.subr.bf16.mxu0 0
  %682 = vmatpush1.bf16.msra.mxu0 %v662
  %683 = vmatprep.subr.bf16.mxu0 0
  %684 = vmatpush2.bf16.msra.mxu0 0
  %685 = vmatprep.subr.bf16.mxu0 0
  %686 = vmatpush2.bf16.msra.mxu0 0
  %687 = vmatprep.subr.bf16.mxu0 0
  %688 = vmatpush2.bf16.msra.mxu0 0
  %689 = vmatprep.subr.bf16.mxu0 0
  %690 = vmatpush2.bf16.msra.mxu0 0
  %691 = vmatprep.subr.bf16.mxu0 0
  %692 = vmatpush2.bf16.msra.mxu0 0
  %693 = vmatprep.subr.bf16.mxu0 0
  %694 = vmatpush2.bf16.msra.mxu0 0
  %695 = vmatprep.subr.bf16.mxu0 0
  %696 = vmatpush2.bf16.msra.mxu0 0
  %697 = vmatprep.subr.bf16.mxu0 0
  %698 = vmatpush2.bf16.msra.mxu0 0
  %699 = vmatprep.mubr.bf16.mxu0 0
  %700 = vmatmul.mubr.bf16.gmra.mxu0 %v665
  %v701 = vpop.f32.mrf.mxu0
  %v702 = vadd.f32 0.0, %v701
  %v703 = vpop.f32.mrf.mxu0
  %v704 = vpop.f32.mrf.mxu0
  %v705 = vpop.f32.mrf.mxu0
  %706 = vdwg.mxu0
  %v707 = vadd.f32 %v476, %v702
  %708 = vrot.lane.b32.xlu0 %v37, 80
  %v709 = vpop.permute.xlu0 %708
  %v710 = vsel %vm54, %v709, 0
  %712 = vmatprep.subr.mxu0 0.0
  %713 = vmatpush1.xpose.msra.mxu0 0.0
  %714 = vmatprep.subr.mxu0 0.0
  %715 = vmatpush1.xpose.msra.mxu0 0.0
  %716 = vmatprep.subr.mxu0 0.0
  %717 = vmatpush1.xpose.msra.mxu0 0.0
  %718 = vmatprep.subr.mxu0 0.0
  %719 = vmatpush1.xpose.msra.mxu0 0.0
  %720 = vmatprep.subr.mxu0 0.0
  %721 = vmatpush1.xpose.msra.mxu0 0.0
  %722 = vmatprep.subr.mxu0 0.0
  %723 = vmatpush1.xpose.msra.mxu0 0.0
  %724 = vmatprep.subr.mxu0 0.0
  %725 = vmatpush1.xpose.msra.mxu0 0.0
  %726 = vmatprep.subr.mxu0 0.0
  %727 = vmatpush1.xpose.msra.mxu0 0.0
  %728 = vmatprep.subr.mxu0 0.0
  %729 = vmatpush1.xpose.msra.mxu0 0.0
  %730 = vmatprep.subr.mxu0 0.0
  %731 = vmatpush1.xpose.msra.mxu0 0.0
  %732 = vmatprep.subr.mxu0 0.0
  %733 = vmatpush1.xpose.msra.mxu0 0.0
  %734 = vmatprep.subr.mxu0 0.0
  %735 = vmatpush1.xpose.msra.mxu0 0.0
  %736 = vmatprep.subr.mxu0 0.0
  %737 = vmatpush1.xpose.msra.mxu0 0.0
  %738 = vmatprep.subr.mxu0 0.0
  %739 = vmatpush1.xpose.msra.mxu0 0.0
  %740 = vmatprep.subr.mxu0 0.0
  %741 = vmatpush1.xpose.msra.mxu0 %v491
  %742 = vmatprep.subr.mxu0 0.0
  %743 = vmatpush1.xpose.msra.mxu0 %v489
  %744 = vmatprep.subr.mxu0 0.0
  %745 = vmatpush2.xpose.msra.mxu0 0.0
  %746 = vmatprep.subr.mxu0 0.0
  %747 = vmatpush2.xpose.msra.mxu0 0.0
  %748 = vmatprep.subr.mxu0 0.0
  %749 = vmatpush2.xpose.msra.mxu0 0.0
  %750 = vmatprep.subr.mxu0 0.0
  %751 = vmatpush2.xpose.msra.mxu0 0.0
  %752 = vmatprep.subr.mxu0 0.0
  %753 = vmatpush2.xpose.msra.mxu0 0.0
  %754 = vmatprep.subr.mxu0 0.0
  %755 = vmatpush2.xpose.msra.mxu0 0.0
  %756 = vmatprep.subr.mxu0 0.0
  %757 = vmatpush2.xpose.msra.mxu0 0.0
  %758 = vmatprep.subr.mxu0 0.0
  %759 = vmatpush2.xpose.msra.mxu0 0.0
  %760 = vmatprep.subr.mxu0 0.0
  %761 = vmatpush2.xpose.msra.mxu0 0.0
  %762 = vmatprep.subr.mxu0 0.0
  %763 = vmatpush2.xpose.msra.mxu0 0.0
  %764 = vmatprep.subr.mxu0 0.0
  %765 = vmatpush2.xpose.msra.mxu0 0.0
  %766 = vmatprep.subr.mxu0 0.0
  %767 = vmatpush2.xpose.msra.mxu0 0.0
  %768 = vmatprep.subr.mxu0 0.0
  %769 = vmatpush2.xpose.msra.mxu0 0.0
  %770 = vmatprep.subr.mxu0 0.0
  %771 = vmatpush2.xpose.msra.mxu0 0.0
  %772 = vmatprep.subr.mxu0 0.0
  %773 = vmatpush2.xpose.msra.mxu0 0.0
  %774 = vmatprep.subr.mxu0 0.0
  %775 = vmatpush2.xpose.msra.mxu0 0.0
  %776 = vmatprep.mubr.f32.mxu0 0.0
  %777 = vmatmul.mubr.f32.gmra.mxu0 %v710
  %v778 = vpop.f32.mrf.mxu0
  %v779 = vadd.f32 0.0, %v778
  %v780 = vpop.f32.mrf.mxu0
  %781 = vdwg.mxu0
  %v782 = vmul.f32 %v779, 0.25
  %v783 = vsel %vm53, %v782, -1e+30
  %v784 = vsel %vm136, %v783, -inf
  %785 = vmax.xlane.f32.xlu0 %v784
  %v786 = vpop.xlane.xlu0 %785
  %v787 = vsub.f32 %v783, %v786
  %v788 = vmul.f32 %v787, 1.442695
  %v789 = vpow.pop %v788
  %v790 = vsel %vm136, %v789, 0.0
  %791 = vadd.xlane.f32.xlu0 %v790
  %v792 = vpop.xlane.xlu0 %791
  %v793 = vrcp.pop %v792
  %v794 = vmul.f32 %v789, %v793
  %v796 = vsel %vm54, %v794, 0
  %798 = vmatprep.subr.mxu0 0.0
  %799 = vmatpush1.msra.mxu0 0.0
  %800 = vmatprep.subr.mxu0 0.0
  %801 = vmatpush1.msra.mxu0 0.0
  %802 = vmatprep.subr.mxu0 0.0
  %803 = vmatpush1.msra.mxu0 0.0
  %804 = vmatprep.subr.mxu0 0.0
  %805 = vmatpush1.msra.mxu0 0.0
  %806 = vmatprep.subr.mxu0 0.0
  %807 = vmatpush1.msra.mxu0 0.0
  %808 = vmatprep.subr.mxu0 0.0
  %809 = vmatpush1.msra.mxu0 0.0
  %810 = vmatprep.subr.mxu0 0.0
  %811 = vmatpush1.msra.mxu0 0.0
  %812 = vmatprep.subr.mxu0 0.0
  %813 = vmatpush1.msra.mxu0 0.0
  %814 = vmatprep.subr.mxu0 0.0
  %815 = vmatpush1.msra.mxu0 0.0
  %816 = vmatprep.subr.mxu0 0.0
  %817 = vmatpush1.msra.mxu0 0.0
  %818 = vmatprep.subr.mxu0 0.0
  %819 = vmatpush1.msra.mxu0 0.0
  %820 = vmatprep.subr.mxu0 0.0
  %821 = vmatpush1.msra.mxu0 0.0
  %822 = vmatprep.subr.mxu0 0.0
  %823 = vmatpush1.msra.mxu0 0.0
  %824 = vmatprep.subr.mxu0 0.0
  %825 = vmatpush1.msra.mxu0 0.0
  %826 = vmatprep.subr.mxu0 0.0
  %827 = vmatpush1.msra.mxu0 %v581
  %828 = vmatprep.subr.mxu0 0.0
  %829 = vmatpush1.msra.mxu0 %v579
  %830 = vmatprep.subr.mxu0 0.0
  %831 = vmatpush2.msra.mxu0 0.0
  %832 = vmatprep.subr.mxu0 0.0
  %833 = vmatpush2.msra.mxu0 0.0
  %834 = vmatprep.subr.mxu0 0.0
  %835 = vmatpush2.msra.mxu0 0.0
  %836 = vmatprep.subr.mxu0 0.0
  %837 = vmatpush2.msra.mxu0 0.0
  %838 = vmatprep.subr.mxu0 0.0
  %839 = vmatpush2.msra.mxu0 0.0
  %840 = vmatprep.subr.mxu0 0.0
  %841 = vmatpush2.msra.mxu0 0.0
  %842 = vmatprep.subr.mxu0 0.0
  %843 = vmatpush2.msra.mxu0 0.0
  %844 = vmatprep.subr.mxu0 0.0
  %845 = vmatpush2.msra.mxu0 0.0
  %846 = vmatprep.subr.mxu0 0.0
  %847 = vmatpush2.msra.mxu0 0.0
  %848 = vmatprep.subr.mxu0 0.0
  %849 = vmatpush2.msra.mxu0 0.0
  %850 = vmatprep.subr.mxu0 0.0
  %851 = vmatpush2.msra.mxu0 0.0
  %852 = vmatprep.subr.mxu0 0.0
  %853 = vmatpush2.msra.mxu0 0.0
  %854 = vmatprep.subr.mxu0 0.0
  %855 = vmatpush2.msra.mxu0 0.0
  %856 = vmatprep.subr.mxu0 0.0
  %857 = vmatpush2.msra.mxu0 0.0
  %858 = vmatprep.subr.mxu0 0.0
  %859 = vmatpush2.msra.mxu0 0.0
  %860 = vmatprep.subr.mxu0 0.0
  %861 = vmatpush2.msra.mxu0 0.0
  %862 = vmatprep.mubr.f32.mxu0 0.0
  %863 = vmatmul.mubr.f32.gmra.mxu0 %v796
  %v864 = vpop.f32.mrf.mxu0
  %v865 = vadd.f32 0.0, %v864
  %v866 = vpop.f32.mrf.mxu0
  %867 = vdwg.mxu0
  %v868 = vpack.c.bf16 %v865, %v865
  %v871 = vunpack.c.l.b16 %v48
  %v872 = vunpack.c.l.b16 %v49
  %v873 = vpack.c.b16 %v872, %v871
  %v876 = vsel %vm54, %v868, 0
  %878 = vmatprep.subr.bf16.mxu0 0
  %879 = vmatpush1.bf16.msra.mxu0 0
  %880 = vmatprep.subr.bf16.mxu0 0
  %881 = vmatpush1.bf16.msra.mxu0 0
  %882 = vmatprep.subr.bf16.mxu0 0
  %883 = vmatpush1.bf16.msra.mxu0 0
  %884 = vmatprep.subr.bf16.mxu0 0
  %885 = vmatpush1.bf16.msra.mxu0 0
  %886 = vmatprep.subr.bf16.mxu0 0
  %887 = vmatpush1.bf16.msra.mxu0 0
  %888 = vmatprep.subr.bf16.mxu0 0
  %889 = vmatpush1.bf16.msra.mxu0 0
  %890 = vmatprep.subr.bf16.mxu0 0
  %891 = vmatpush1.bf16.msra.mxu0 0
  %892 = vmatprep.subr.bf16.mxu0 0
  %893 = vmatpush1.bf16.msra.mxu0 %v873
  %894 = vmatprep.subr.bf16.mxu0 0
  %895 = vmatpush2.bf16.msra.mxu0 0
  %896 = vmatprep.subr.bf16.mxu0 0
  %897 = vmatpush2.bf16.msra.mxu0 0
  %898 = vmatprep.subr.bf16.mxu0 0
  %899 = vmatpush2.bf16.msra.mxu0 0
  %900 = vmatprep.subr.bf16.mxu0 0
  %901 = vmatpush2.bf16.msra.mxu0 0
  %902 = vmatprep.subr.bf16.mxu0 0
  %903 = vmatpush2.bf16.msra.mxu0 0
  %904 = vmatprep.subr.bf16.mxu0 0
  %905 = vmatpush2.bf16.msra.mxu0 0
  %906 = vmatprep.subr.bf16.mxu0 0
  %907 = vmatpush2.bf16.msra.mxu0 0
  %908 = vmatprep.subr.bf16.mxu0 0
  %909 = vmatpush2.bf16.msra.mxu0 0
  %910 = vmatprep.mubr.bf16.mxu0 0
  %911 = vmatmul.mubr.bf16.gmra.mxu0 %v876
  %v912 = vpop.f32.mrf.mxu0
  %v913 = vadd.f32 0.0, %v912
  %v914 = vpop.f32.mrf.mxu0
  %v915 = vpop.f32.mrf.mxu0
  %v916 = vpop.f32.mrf.mxu0
  %917 = vdwg.mxu0
  %v918 = vadd.f32 %v707, %v913
  %v919 = vrot.slane %v37, 1
  %920 = vrot.lane.b32.xlu0 %v38, 96
  %v921 = vpop.permute.xlu0 %920
  %922 = vrot.lane.b32.xlu0 %v39, 96
  %v923 = vpop.permute.xlu0 %922
  %v924 = vsel %vm54, %v919, 0
  %v926 = vsel %vm54, %v921, 0
  %v928 = vsel %vm54, %v923, 0
  %930 = vmatprep.subr.mxu0 0.0
  %931 = vmatpush1.xpose.msra.mxu0 0.0
  %932 = vmatprep.subr.mxu0 0.0
  %933 = vmatpush1.xpose.msra.mxu0 0.0
  %934 = vmatprep.subr.mxu0 0.0
  %935 = vmatpush1.xpose.msra.mxu0 0.0
  %936 = vmatprep.subr.mxu0 0.0
  %937 = vmatpush1.xpose.msra.mxu0 0.0
  %938 = vmatprep.subr.mxu0 0.0
  %939 = vmatpush1.xpose.msra.mxu0 0.0
  %940 = vmatprep.subr.mxu0 0.0
  %941 = vmatpush1.xpose.msra.mxu0 0.0
  %942 = vmatprep.subr.mxu0 0.0
  %943 = vmatpush1.xpose.msra.mxu0 0.0
  %944 = vmatprep.subr.mxu0 0.0
  %945 = vmatpush1.xpose.msra.mxu0 0.0
  %946 = vmatprep.subr.mxu0 0.0
  %947 = vmatpush1.xpose.msra.mxu0 0.0
  %948 = vmatprep.subr.mxu0 0.0
  %949 = vmatpush1.xpose.msra.mxu0 0.0
  %950 = vmatprep.subr.mxu0 0.0
  %951 = vmatpush1.xpose.msra.mxu0 0.0
  %952 = vmatprep.subr.mxu0 0.0
  %953 = vmatpush1.xpose.msra.mxu0 0.0
  %954 = vmatprep.subr.mxu0 0.0
  %955 = vmatpush1.xpose.msra.mxu0 0.0
  %956 = vmatprep.subr.mxu0 0.0
  %957 = vmatpush1.xpose.msra.mxu0 0.0
  %958 = vmatprep.subr.mxu0 0.0
  %959 = vmatpush1.xpose.msra.mxu0 %v928
  %960 = vmatprep.subr.mxu0 0.0
  %961 = vmatpush1.xpose.msra.mxu0 %v926
  %962 = vmatprep.subr.mxu0 0.0
  %963 = vmatpush2.xpose.msra.mxu0 0.0
  %964 = vmatprep.subr.mxu0 0.0
  %965 = vmatpush2.xpose.msra.mxu0 0.0
  %966 = vmatprep.subr.mxu0 0.0
  %967 = vmatpush2.xpose.msra.mxu0 0.0
  %968 = vmatprep.subr.mxu0 0.0
  %969 = vmatpush2.xpose.msra.mxu0 0.0
  %970 = vmatprep.subr.mxu0 0.0
  %971 = vmatpush2.xpose.msra.mxu0 0.0
  %972 = vmatprep.subr.mxu0 0.0
  %973 = vmatpush2.xpose.msra.mxu0 0.0
  %974 = vmatprep.subr.mxu0 0.0
  %975 = vmatpush2.xpose.msra.mxu0 0.0
  %976 = vmatprep.subr.mxu0 0.0
  %977 = vmatpush2.xpose.msra.mxu0 0.0
  %978 = vmatprep.subr.mxu0 0.0
  %979 = vmatpush2.xpose.msra.mxu0 0.0
  %980 = vmatprep.subr.mxu0 0.0
  %981 = vmatpush2.xpose.msra.mxu0 0.0
  %982 = vmatprep.subr.mxu0 0.0
  %983 = vmatpush2.xpose.msra.mxu0 0.0
  %984 = vmatprep.subr.mxu0 0.0
  %985 = vmatpush2.xpose.msra.mxu0 0.0
  %986 = vmatprep.subr.mxu0 0.0
  %987 = vmatpush2.xpose.msra.mxu0 0.0
  %988 = vmatprep.subr.mxu0 0.0
  %989 = vmatpush2.xpose.msra.mxu0 0.0
  %990 = vmatprep.subr.mxu0 0.0
  %991 = vmatpush2.xpose.msra.mxu0 0.0
  %992 = vmatprep.subr.mxu0 0.0
  %993 = vmatpush2.xpose.msra.mxu0 0.0
  %994 = vmatprep.mubr.f32.mxu0 0.0
  %995 = vmatmul.mubr.f32.gmra.mxu0 %v924
  %v996 = vpop.f32.mrf.mxu0
  %v997 = vadd.f32 0.0, %v996
  %v998 = vpop.f32.mrf.mxu0
  %999 = vdwg.mxu0
  %v1000 = vmul.f32 %v997, 0.25
  %v1001 = vsel %vm53, %v1000, -1e+30
  %v1002 = vsel %vm136, %v1001, -inf
  %1003 = vmax.xlane.f32.xlu0 %v1002
  %v1004 = vpop.xlane.xlu0 %1003
  %v1005 = vsub.f32 %v1001, %v1004
  %v1006 = vmul.f32 %v1005, 1.442695
  %v1007 = vpow.pop %v1006
  %v1008 = vsel %vm136, %v1007, 0.0
  %1009 = vadd.xlane.f32.xlu0 %v1008
  %v1010 = vpop.xlane.xlu0 %1009
  %v1011 = vrcp.pop %v1010
  %v1012 = vmul.f32 %v1007, %v1011
  %1013 = vrot.lane.b32.xlu0 %v40, 96
  %v1014 = vpop.permute.xlu0 %1013
  %1015 = vrot.lane.b32.xlu0 %v41, 96
  %v1016 = vpop.permute.xlu0 %1015
  %v1020 = vsel %vm54, %v1012, 0
  %1022 = vmatprep.subr.mxu0 0.0
  %1023 = vmatpush1.msra.mxu0 0.0
  %1024 = vmatprep.subr.mxu0 0.0
  %1025 = vmatpush1.msra.mxu0 0.0
  %1026 = vmatprep.subr.mxu0 0.0
  %1027 = vmatpush1.msra.mxu0 0.0
  %1028 = vmatprep.subr.mxu0 0.0
  %1029 = vmatpush1.msra.mxu0 0.0
  %1030 = vmatprep.subr.mxu0 0.0
  %1031 = vmatpush1.msra.mxu0 0.0
  %1032 = vmatprep.subr.mxu0 0.0
  %1033 = vmatpush1.msra.mxu0 0.0
  %1034 = vmatprep.subr.mxu0 0.0
  %1035 = vmatpush1.msra.mxu0 0.0
  %1036 = vmatprep.subr.mxu0 0.0
  %1037 = vmatpush1.msra.mxu0 0.0
  %1038 = vmatprep.subr.mxu0 0.0
  %1039 = vmatpush1.msra.mxu0 0.0
  %1040 = vmatprep.subr.mxu0 0.0
  %1041 = vmatpush1.msra.mxu0 0.0
  %1042 = vmatprep.subr.mxu0 0.0
  %1043 = vmatpush1.msra.mxu0 0.0
  %1044 = vmatprep.subr.mxu0 0.0
  %1045 = vmatpush1.msra.mxu0 0.0
  %1046 = vmatprep.subr.mxu0 0.0
  %1047 = vmatpush1.msra.mxu0 0.0
  %1048 = vmatprep.subr.mxu0 0.0
  %1049 = vmatpush1.msra.mxu0 0.0
  %1050 = vmatprep.subr.mxu0 0.0
  %1051 = vmatpush1.msra.mxu0 %v1016
  %1052 = vmatprep.subr.mxu0 0.0
  %1053 = vmatpush1.msra.mxu0 %v1014
  %1054 = vmatprep.subr.mxu0 0.0
  %1055 = vmatpush2.msra.mxu0 0.0
  %1056 = vmatprep.subr.mxu0 0.0
  %1057 = vmatpush2.msra.mxu0 0.0
  %1058 = vmatprep.subr.mxu0 0.0
  %1059 = vmatpush2.msra.mxu0 0.0
  %1060 = vmatprep.subr.mxu0 0.0
  %1061 = vmatpush2.msra.mxu0 0.0
  %1062 = vmatprep.subr.mxu0 0.0
  %1063 = vmatpush2.msra.mxu0 0.0
  %1064 = vmatprep.subr.mxu0 0.0
  %1065 = vmatpush2.msra.mxu0 0.0
  %1066 = vmatprep.subr.mxu0 0.0
  %1067 = vmatpush2.msra.mxu0 0.0
  %1068 = vmatprep.subr.mxu0 0.0
  %1069 = vmatpush2.msra.mxu0 0.0
  %1070 = vmatprep.subr.mxu0 0.0
  %1071 = vmatpush2.msra.mxu0 0.0
  %1072 = vmatprep.subr.mxu0 0.0
  %1073 = vmatpush2.msra.mxu0 0.0
  %1074 = vmatprep.subr.mxu0 0.0
  %1075 = vmatpush2.msra.mxu0 0.0
  %1076 = vmatprep.subr.mxu0 0.0
  %1077 = vmatpush2.msra.mxu0 0.0
  %1078 = vmatprep.subr.mxu0 0.0
  %1079 = vmatpush2.msra.mxu0 0.0
  %1080 = vmatprep.subr.mxu0 0.0
  %1081 = vmatpush2.msra.mxu0 0.0
  %1082 = vmatprep.subr.mxu0 0.0
  %1083 = vmatpush2.msra.mxu0 0.0
  %1084 = vmatprep.subr.mxu0 0.0
  %1085 = vmatpush2.msra.mxu0 0.0
  %1086 = vmatprep.mubr.f32.mxu0 0.0
  %1087 = vmatmul.mubr.f32.gmra.mxu0 %v1020
  %v1088 = vpop.f32.mrf.mxu0
  %v1089 = vadd.f32 0.0, %v1088
  %v1090 = vpop.f32.mrf.mxu0
  %1091 = vdwg.mxu0
  %v1092 = vpack.c.bf16 %v1089, %v1089
  %1093 = vrot.lane.b32.xlu0 %v919, 112
  %v1094 = vpop.permute.xlu0 %1093
  %v1095 = vsel %vm54, %v1094, 0
  %1097 = vmatprep.subr.mxu0 0.0
  %1098 = vmatpush1.xpose.msra.mxu0 0.0
  %1099 = vmatprep.subr.mxu0 0.0
  %1100 = vmatpush1.xpose.msra.mxu0 0.0
  %1101 = vmatprep.subr.mxu0 0.0
  %1102 = vmatpush1.xpose.msra.mxu0 0.0
  %1103 = vmatprep.subr.mxu0 0.0
  %1104 = vmatpush1.xpose.msra.mxu0 0.0
  %1105 = vmatprep.subr.mxu0 0.0
  %1106 = vmatpush1.xpose.msra.mxu0 0.0
  %1107 = vmatprep.subr.mxu0 0.0
  %1108 = vmatpush1.xpose.msra.mxu0 0.0
  %1109 = vmatprep.subr.mxu0 0.0
  %1110 = vmatpush1.xpose.msra.mxu0 0.0
  %1111 = vmatprep.subr.mxu0 0.0
  %1112 = vmatpush1.xpose.msra.mxu0 0.0
  %1113 = vmatprep.subr.mxu0 0.0
  %1114 = vmatpush1.xpose.msra.mxu0 0.0
  %1115 = vmatprep.subr.mxu0 0.0
  %1116 = vmatpush1.xpose.msra.mxu0 0.0
  %1117 = vmatprep.subr.mxu0 0.0
  %1118 = vmatpush1.xpose.msra.mxu0 0.0
  %1119 = vmatprep.subr.mxu0 0.0
  %1120 = vmatpush1.xpose.msra.mxu0 0.0
  %1121 = vmatprep.subr.mxu0 0.0
  %1122 = vmatpush1.xpose.msra.mxu0 0.0
  %1123 = vmatprep.subr.mxu0 0.0
  %1124 = vmatpush1.xpose.msra.mxu0 0.0
  %1125 = vmatprep.subr.mxu0 0.0
  %1126 = vmatpush1.xpose.msra.mxu0 %v928
  %1127 = vmatprep.subr.mxu0 0.0
  %1128 = vmatpush1.xpose.msra.mxu0 %v926
  %1129 = vmatprep.subr.mxu0 0.0
  %1130 = vmatpush2.xpose.msra.mxu0 0.0
  %1131 = vmatprep.subr.mxu0 0.0
  %1132 = vmatpush2.xpose.msra.mxu0 0.0
  %1133 = vmatprep.subr.mxu0 0.0
  %1134 = vmatpush2.xpose.msra.mxu0 0.0
  %1135 = vmatprep.subr.mxu0 0.0
  %1136 = vmatpush2.xpose.msra.mxu0 0.0
  %1137 = vmatprep.subr.mxu0 0.0
  %1138 = vmatpush2.xpose.msra.mxu0 0.0
  %1139 = vmatprep.subr.mxu0 0.0
  %1140 = vmatpush2.xpose.msra.mxu0 0.0
  %1141 = vmatprep.subr.mxu0 0.0
  %1142 = vmatpush2.xpose.msra.mxu0 0.0
  %1143 = vmatprep.subr.mxu0 0.0
  %1144 = vmatpush2.xpose.msra.mxu0 0.0
  %1145 = vmatprep.subr.mxu0 0.0
  %1146 = vmatpush2.xpose.msra.mxu0 0.0
  %1147 = vmatprep.subr.mxu0 0.0
  %1148 = vmatpush2.xpose.msra.mxu0 0.0
  %1149 = vmatprep.subr.mxu0 0.0
  %1150 = vmatpush2.xpose.msra.mxu0 0.0
  %1151 = vmatprep.subr.mxu0 0.0
  %1152 = vmatpush2.xpose.msra.mxu0 0.0
  %1153 = vmatprep.subr.mxu0 0.0
  %1154 = vmatpush2.xpose.msra.mxu0 0.0
  %1155 = vmatprep.subr.mxu0 0.0
  %1156 = vmatpush2.xpose.msra.mxu0 0.0
  %1157 = vmatprep.subr.mxu0 0.0
  %1158 = vmatpush2.xpose.msra.mxu0 0.0
  %1159 = vmatprep.subr.mxu0 0.0
  %1160 = vmatpush2.xpose.msra.mxu0 0.0
  %1161 = vmatprep.mubr.f32.mxu0 0.0
  %1162 = vmatmul.mubr.f32.gmra.mxu0 %v1095
  %v1163 = vpop.f32.mrf.mxu0
  %v1164 = vadd.f32 0.0, %v1163
  %v1165 = vpop.f32.mrf.mxu0
  %1166 = vdwg.mxu0
  %v1167 = vmul.f32 %v1164, 0.25
  %v1168 = vsel %vm53, %v1167, -1e+30
  %v1169 = vsel %vm136, %v1168, -inf
  %1170 = vmax.xlane.f32.xlu0 %v1169
  %v1171 = vpop.xlane.xlu0 %1170
  %v1172 = vsub.f32 %v1168, %v1171
  %v1173 = vmul.f32 %v1172, 1.442695
  %v1174 = vpow.pop %v1173
  %v1175 = vsel %vm136, %v1174, 0.0
  %1176 = vadd.xlane.f32.xlu0 %v1175
  %v1177 = vpop.xlane.xlu0 %1176
  %v1178 = vrcp.pop %v1177
  %v1179 = vmul.f32 %v1174, %v1178
  %v1181 = vsel %vm54, %v1179, 0
  %1183 = vmatprep.subr.mxu0 0.0
  %1184 = vmatpush1.msra.mxu0 0.0
  %1185 = vmatprep.subr.mxu0 0.0
  %1186 = vmatpush1.msra.mxu0 0.0
  %1187 = vmatprep.subr.mxu0 0.0
  %1188 = vmatpush1.msra.mxu0 0.0
  %1189 = vmatprep.subr.mxu0 0.0
  %1190 = vmatpush1.msra.mxu0 0.0
  %1191 = vmatprep.subr.mxu0 0.0
  %1192 = vmatpush1.msra.mxu0 0.0
  %1193 = vmatprep.subr.mxu0 0.0
  %1194 = vmatpush1.msra.mxu0 0.0
  %1195 = vmatprep.subr.mxu0 0.0
  %1196 = vmatpush1.msra.mxu0 0.0
  %1197 = vmatprep.subr.mxu0 0.0
  %1198 = vmatpush1.msra.mxu0 0.0
  %1199 = vmatprep.subr.mxu0 0.0
  %1200 = vmatpush1.msra.mxu0 0.0
  %1201 = vmatprep.subr.mxu0 0.0
  %1202 = vmatpush1.msra.mxu0 0.0
  %1203 = vmatprep.subr.mxu0 0.0
  %1204 = vmatpush1.msra.mxu0 0.0
  %1205 = vmatprep.subr.mxu0 0.0
  %1206 = vmatpush1.msra.mxu0 0.0
  %1207 = vmatprep.subr.mxu0 0.0
  %1208 = vmatpush1.msra.mxu0 0.0
  %1209 = vmatprep.subr.mxu0 0.0
  %1210 = vmatpush1.msra.mxu0 0.0
  %1211 = vmatprep.subr.mxu0 0.0
  %1212 = vmatpush1.msra.mxu0 %v1016
  %1213 = vmatprep.subr.mxu0 0.0
  %1214 = vmatpush1.msra.mxu0 %v1014
  %1215 = vmatprep.subr.mxu0 0.0
  %1216 = vmatpush2.msra.mxu0 0.0
  %1217 = vmatprep.subr.mxu0 0.0
  %1218 = vmatpush2.msra.mxu0 0.0
  %1219 = vmatprep.subr.mxu0 0.0
  %1220 = vmatpush2.msra.mxu0 0.0
  %1221 = vmatprep.subr.mxu0 0.0
  %1222 = vmatpush2.msra.mxu0 0.0
  %1223 = vmatprep.subr.mxu0 0.0
  %1224 = vmatpush2.msra.mxu0 0.0
  %1225 = vmatprep.subr.mxu0 0.0
  %1226 = vmatpush2.msra.mxu0 0.0
  %1227 = vmatprep.subr.mxu0 0.0
  %1228 = vmatpush2.msra.mxu0 0.0
  %1229 = vmatprep.subr.mxu0 0.0
  %1230 = vmatpush2.msra.mxu0 0.0
  %1231 = vmatprep.subr.mxu0 0.0
  %1232 = vmatpush2.msra.mxu0 0.0
  %1233 = vmatprep.subr.mxu0 0.0
  %1234 = vmatpush2.msra.mxu0 0.0
  %1235 = vmatprep.subr.mxu0 0.0
  %1236 = vmatpush2.msra.mxu0 0.0
  %1237 = vmatprep.subr.mxu0 0.0
  %1238 = vmatpush2.msra.mxu0 0.0
  %1239 = vmatprep.subr.mxu0 0.0
  %1240 = vmatpush2.msra.mxu0 0.0
  %1241 = vmatprep.subr.mxu0 0.0
  %1242 = vmatpush2.msra.mxu0 0.0
  %1243 = vmatprep.subr.mxu0 0.0
  %1244 = vmatpush2.msra.mxu0 0.0
  %1245 = vmatprep.subr.mxu0 0.0
  %1246 = vmatpush2.msra.mxu0 0.0
  %1247 = vmatprep.mubr.f32.mxu0 0.0
  %1248 = vmatmul.mubr.f32.gmra.mxu0 %v1181
  %v1249 = vpop.f32.mrf.mxu0
  %v1250 = vadd.f32 0.0, %v1249
  %v1251 = vpop.f32.mrf.mxu0
  %1252 = vdwg.mxu0
  %v1253 = vpack.c.bf16 %v1250, %v1250
  %v1255 = vsel %vm54, %v1253, 0
  %1257 = vmatprep.subr.bf16.mxu0 0
  %1258 = vmatpush1.bf16.msra.mxu0 0
  %1259 = vmatprep.subr.bf16.mxu0 0
  %1260 = vmatpush1.bf16.msra.mxu0 0
  %1261 = vmatprep.subr.bf16.mxu0 0
  %1262 = vmatpush1.bf16.msra.mxu0 0
  %1263 = vmatprep.subr.bf16.mxu0 0
  %1264 = vmatpush1.bf16.msra.mxu0 0
  %1265 = vmatprep.subr.bf16.mxu0 0
  %1266 = vmatpush1.bf16.msra.mxu0 0
  %1267 = vmatprep.subr.bf16.mxu0 0
  %1268 = vmatpush1.bf16.msra.mxu0 0
  %1269 = vmatprep.subr.bf16.mxu0 0
  %1270 = vmatpush1.bf16.msra.mxu0 0
  %1271 = vmatprep.subr.bf16.mxu0 0
  %1272 = vmatpush1.bf16.msra.mxu0 %v387
  %1273 = vmatprep.subr.bf16.mxu0 0
  %1274 = vmatpush2.bf16.msra.mxu0 0
  %1275 = vmatprep.subr.bf16.mxu0 0
  %1276 = vmatpush2.bf16.msra.mxu0 0
  %1277 = vmatprep.subr.bf16.mxu0 0
  %1278 = vmatpush2.bf16.msra.mxu0 0
  %1279 = vmatprep.subr.bf16.mxu0 0
  %1280 = vmatpush2.bf16.msra.mxu0 0
  %1281 = vmatprep.subr.bf16.mxu0 0
  %1282 = vmatpush2.bf16.msra.mxu0 0
  %1283 = vmatprep.subr.bf16.mxu0 0
  %1284 = vmatpush2.bf16.msra.mxu0 0
  %1285 = vmatprep.subr.bf16.mxu0 0
  %1286 = vmatpush2.bf16.msra.mxu0 0
  %1287 = vmatprep.subr.bf16.mxu0 0
  %1288 = vmatpush2.bf16.msra.mxu0 0
  %1289 = vmatprep.mubr.bf16.mxu0 0
  %1290 = vmatmul.mubr.bf16.gmra.mxu0 %v1255
  %v1291 = vpop.f32.mrf.mxu0
  %v1292 = vadd.f32 0.0, %v1291
  %v1293 = vpop.f32.mrf.mxu0
  %v1294 = vpop.f32.mrf.mxu0
  %v1295 = vpop.f32.mrf.mxu0
  %1296 = vdwg.mxu0
  %v1298 = vsel %vm54, %v1092, 0
  %1300 = vmatprep.subr.bf16.mxu0 0
  %1301 = vmatpush1.bf16.msra.mxu0 0
  %1302 = vmatprep.subr.bf16.mxu0 0
  %1303 = vmatpush1.bf16.msra.mxu0 0
  %1304 = vmatprep.subr.bf16.mxu0 0
  %1305 = vmatpush1.bf16.msra.mxu0 0
  %1306 = vmatprep.subr.bf16.mxu0 0
  %1307 = vmatpush1.bf16.msra.mxu0 0
  %1308 = vmatprep.subr.bf16.mxu0 0
  %1309 = vmatpush1.bf16.msra.mxu0 0
  %1310 = vmatprep.subr.bf16.mxu0 0
  %1311 = vmatpush1.bf16.msra.mxu0 0
  %1312 = vmatprep.subr.bf16.mxu0 0
  %1313 = vmatpush1.bf16.msra.mxu0 0
  %1314 = vmatprep.subr.bf16.mxu0 0
  %1315 = vmatpush1.bf16.msra.mxu0 %v436
  %1316 = vmatprep.subr.bf16.mxu0 0
  %1317 = vmatpush2.bf16.msra.mxu0 0
  %1318 = vmatprep.subr.bf16.mxu0 0
  %1319 = vmatpush2.bf16.msra.mxu0 0
  %1320 = vmatprep.subr.bf16.mxu0 0
  %1321 = vmatpush2.bf16.msra.mxu0 0
  %1322 = vmatprep.subr.bf16.mxu0 0
  %1323 = vmatpush2.bf16.msra.mxu0 0
  %1324 = vmatprep.subr.bf16.mxu0 0
  %1325 = vmatpush2.bf16.msra.mxu0 0
  %1326 = vmatprep.subr.bf16.mxu0 0
  %1327 = vmatpush2.bf16.msra.mxu0 0
  %1328 = vmatprep.subr.bf16.mxu0 0
  %1329 = vmatpush2.bf16.msra.mxu0 0
  %1330 = vmatprep.subr.bf16.mxu0 0
  %1331 = vmatpush2.bf16.msra.mxu0 0
  %1332 = vmatprep.mubr.bf16.mxu0 0
  %1333 = vmatmul.mubr.bf16.gmra.mxu0 %v1298
  %v1334 = vpop.f32.mrf.mxu0
  %v1335 = vadd.f32 %v1292, %v1334
  %v1336 = vpop.f32.mrf.mxu0
  %v1337 = vpop.f32.mrf.mxu0
  %v1338 = vpop.f32.mrf.mxu0
  %1339 = vdwg.mxu0
  %1340 = vrot.lane.b32.xlu0 %v919, 96
  %v1341 = vpop.permute.xlu0 %1340
  %1342 = vrot.lane.b32.xlu0 %v38, 80
  %v1343 = vpop.permute.xlu0 %1342
  %1344 = vrot.lane.b32.xlu0 %v39, 80
  %v1345 = vpop.permute.xlu0 %1344
  %v1346 = vsel %vm54, %v1341, 0
  %v1348 = vsel %vm54, %v1343, 0
  %v1350 = vsel %vm54, %v1345, 0
  %1352 = vmatprep.subr.mxu0 0.0
  %1353 = vmatpush1.xpose.msra.mxu0 0.0
  %1354 = vmatprep.subr.mxu0 0.0
  %1355 = vmatpush1.xpose.msra.mxu0 0.0
  %1356 = vmatprep.subr.mxu0 0.0
  %1357 = vmatpush1.xpose.msra.mxu0 0.0
  %1358 = vmatprep.subr.mxu0 0.0
  %1359 = vmatpush1.xpose.msra.mxu0 0.0
  %1360 = vmatprep.subr.mxu0 0.0
  %1361 = vmatpush1.xpose.msra.mxu0 0.0
  %1362 = vmatprep.subr.mxu0 0.0
  %1363 = vmatpush1.xpose.msra.mxu0 0.0
  %1364 = vmatprep.subr.mxu0 0.0
  %1365 = vmatpush1.xpose.msra.mxu0 0.0
  %1366 = vmatprep.subr.mxu0 0.0
  %1367 = vmatpush1.xpose.msra.mxu0 0.0
  %1368 = vmatprep.subr.mxu0 0.0
  %1369 = vmatpush1.xpose.msra.mxu0 0.0
  %1370 = vmatprep.subr.mxu0 0.0
  %1371 = vmatpush1.xpose.msra.mxu0 0.0
  %1372 = vmatprep.subr.mxu0 0.0
  %1373 = vmatpush1.xpose.msra.mxu0 0.0
  %1374 = vmatprep.subr.mxu0 0.0
  %1375 = vmatpush1.xpose.msra.mxu0 0.0
  %1376 = vmatprep.subr.mxu0 0.0
  %1377 = vmatpush1.xpose.msra.mxu0 0.0
  %1378 = vmatprep.subr.mxu0 0.0
  %1379 = vmatpush1.xpose.msra.mxu0 0.0
  %1380 = vmatprep.subr.mxu0 0.0
  %1381 = vmatpush1.xpose.msra.mxu0 %v1350
  %1382 = vmatprep.subr.mxu0 0.0
  %1383 = vmatpush1.xpose.msra.mxu0 %v1348
  %1384 = vmatprep.subr.mxu0 0.0
  %1385 = vmatpush2.xpose.msra.mxu0 0.0
  %1386 = vmatprep.subr.mxu0 0.0
  %1387 = vmatpush2.xpose.msra.mxu0 0.0
  %1388 = vmatprep.subr.mxu0 0.0
  %1389 = vmatpush2.xpose.msra.mxu0 0.0
  %1390 = vmatprep.subr.mxu0 0.0
  %1391 = vmatpush2.xpose.msra.mxu0 0.0
  %1392 = vmatprep.subr.mxu0 0.0
  %1393 = vmatpush2.xpose.msra.mxu0 0.0
  %1394 = vmatprep.subr.mxu0 0.0
  %1395 = vmatpush2.xpose.msra.mxu0 0.0
  %1396 = vmatprep.subr.mxu0 0.0
  %1397 = vmatpush2.xpose.msra.mxu0 0.0
  %1398 = vmatprep.subr.mxu0 0.0
  %1399 = vmatpush2.xpose.msra.mxu0 0.0
  %1400 = vmatprep.subr.mxu0 0.0
  %1401 = vmatpush2.xpose.msra.mxu0 0.0
  %1402 = vmatprep.subr.mxu0 0.0
  %1403 = vmatpush2.xpose.msra.mxu0 0.0
  %1404 = vmatprep.subr.mxu0 0.0
  %1405 = vmatpush2.xpose.msra.mxu0 0.0
  %1406 = vmatprep.subr.mxu0 0.0
  %1407 = vmatpush2.xpose.msra.mxu0 0.0
  %1408 = vmatprep.subr.mxu0 0.0
  %1409 = vmatpush2.xpose.msra.mxu0 0.0
  %1410 = vmatprep.subr.mxu0 0.0
  %1411 = vmatpush2.xpose.msra.mxu0 0.0
  %1412 = vmatprep.subr.mxu0 0.0
  %1413 = vmatpush2.xpose.msra.mxu0 0.0
  %1414 = vmatprep.subr.mxu0 0.0
  %1415 = vmatpush2.xpose.msra.mxu0 0.0
  %1416 = vmatprep.mubr.f32.mxu0 0.0
  %1417 = vmatmul.mubr.f32.gmra.mxu0 %v1346
  %v1418 = vpop.f32.mrf.mxu0
  %v1419 = vadd.f32 0.0, %v1418
  %v1420 = vpop.f32.mrf.mxu0
  %1421 = vdwg.mxu0
  %v1422 = vmul.f32 %v1419, 0.25
  %v1423 = vsel %vm53, %v1422, -1e+30
  %v1424 = vsel %vm136, %v1423, -inf
  %1425 = vmax.xlane.f32.xlu0 %v1424
  %v1426 = vpop.xlane.xlu0 %1425
  %v1427 = vsub.f32 %v1423, %v1426
  %v1428 = vmul.f32 %v1427, 1.442695
  %v1429 = vpow.pop %v1428
  %v1430 = vsel %vm136, %v1429, 0.0
  %1431 = vadd.xlane.f32.xlu0 %v1430
  %v1432 = vpop.xlane.xlu0 %1431
  %v1433 = vrcp.pop %v1432
  %v1434 = vmul.f32 %v1429, %v1433
  %1435 = vrot.lane.b32.xlu0 %v40, 80
  %v1436 = vpop.permute.xlu0 %1435
  %1437 = vrot.lane.b32.xlu0 %v41, 80
  %v1438 = vpop.permute.xlu0 %1437
  %v1442 = vsel %vm54, %v1434, 0
  %1444 = vmatprep.subr.mxu0 0.0
  %1445 = vmatpush1.msra.mxu0 0.0
  %1446 = vmatprep.subr.mxu0 0.0
  %1447 = vmatpush1.msra.mxu0 0.0
  %1448 = vmatprep.subr.mxu0 0.0
  %1449 = vmatpush1.msra.mxu0 0.0
  %1450 = vmatprep.subr.mxu0 0.0
  %1451 = vmatpush1.msra.mxu0 0.0
  %1452 = vmatprep.subr.mxu0 0.0
  %1453 = vmatpush1.msra.mxu0 0.0
  %1454 = vmatprep.subr.mxu0 0.0
  %1455 = vmatpush1.msra.mxu0 0.0
  %1456 = vmatprep.subr.mxu0 0.0
  %1457 = vmatpush1.msra.mxu0 0.0
  %1458 = vmatprep.subr.mxu0 0.0
  %1459 = vmatpush1.msra.mxu0 0.0
  %1460 = vmatprep.subr.mxu0 0.0
  %1461 = vmatpush1.msra.mxu0 0.0
  %1462 = vmatprep.subr.mxu0 0.0
  %1463 = vmatpush1.msra.mxu0 0.0
  %1464 = vmatprep.subr.mxu0 0.0
  %1465 = vmatpush1.msra.mxu0 0.0
  %1466 = vmatprep.subr.mxu0 0.0
  %1467 = vmatpush1.msra.mxu0 0.0
  %1468 = vmatprep.subr.mxu0 0.0
  %1469 = vmatpush1.msra.mxu0 0.0
  %1470 = vmatprep.subr.mxu0 0.0
  %1471 = vmatpush1.msra.mxu0 0.0
  %1472 = vmatprep.subr.mxu0 0.0
  %1473 = vmatpush1.msra.mxu0 %v1438
  %1474 = vmatprep.subr.mxu0 0.0
  %1475 = vmatpush1.msra.mxu0 %v1436
  %1476 = vmatprep.subr.mxu0 0.0
  %1477 = vmatpush2.msra.mxu0 0.0
  %1478 = vmatprep.subr.mxu0 0.0
  %1479 = vmatpush2.msra.mxu0 0.0
  %1480 = vmatprep.subr.mxu0 0.0
  %1481 = vmatpush2.msra.mxu0 0.0
  %1482 = vmatprep.subr.mxu0 0.0
  %1483 = vmatpush2.msra.mxu0 0.0
  %1484 = vmatprep.subr.mxu0 0.0
  %1485 = vmatpush2.msra.mxu0 0.0
  %1486 = vmatprep.subr.mxu0 0.0
  %1487 = vmatpush2.msra.mxu0 0.0
  %1488 = vmatprep.subr.mxu0 0.0
  %1489 = vmatpush2.msra.mxu0 0.0
  %1490 = vmatprep.subr.mxu0 0.0
  %1491 = vmatpush2.msra.mxu0 0.0
  %1492 = vmatprep.subr.mxu0 0.0
  %1493 = vmatpush2.msra.mxu0 0.0
  %1494 = vmatprep.subr.mxu0 0.0
  %1495 = vmatpush2.msra.mxu0 0.0
  %1496 = vmatprep.subr.mxu0 0.0
  %1497 = vmatpush2.msra.mxu0 0.0
  %1498 = vmatprep.subr.mxu0 0.0
  %1499 = vmatpush2.msra.mxu0 0.0
  %1500 = vmatprep.subr.mxu0 0.0
  %1501 = vmatpush2.msra.mxu0 0.0
  %1502 = vmatprep.subr.mxu0 0.0
  %1503 = vmatpush2.msra.mxu0 0.0
  %1504 = vmatprep.subr.mxu0 0.0
  %1505 = vmatpush2.msra.mxu0 0.0
  %1506 = vmatprep.subr.mxu0 0.0
  %1507 = vmatpush2.msra.mxu0 0.0
  %1508 = vmatprep.mubr.f32.mxu0 0.0
  %1509 = vmatmul.mubr.f32.gmra.mxu0 %v1442
  %v1510 = vpop.f32.mrf.mxu0
  %v1511 = vadd.f32 0.0, %v1510
  %v1512 = vpop.f32.mrf.mxu0
  %1513 = vdwg.mxu0
  %v1514 = vpack.c.bf16 %v1511, %v1511
  %v1516 = vsel %vm54, %v1514, 0
  %1518 = vmatprep.subr.bf16.mxu0 0
  %1519 = vmatpush1.bf16.msra.mxu0 0
  %1520 = vmatprep.subr.bf16.mxu0 0
  %1521 = vmatpush1.bf16.msra.mxu0 0
  %1522 = vmatprep.subr.bf16.mxu0 0
  %1523 = vmatpush1.bf16.msra.mxu0 0
  %1524 = vmatprep.subr.bf16.mxu0 0
  %1525 = vmatpush1.bf16.msra.mxu0 0
  %1526 = vmatprep.subr.bf16.mxu0 0
  %1527 = vmatpush1.bf16.msra.mxu0 0
  %1528 = vmatprep.subr.bf16.mxu0 0
  %1529 = vmatpush1.bf16.msra.mxu0 0
  %1530 = vmatprep.subr.bf16.mxu0 0
  %1531 = vmatpush1.bf16.msra.mxu0 0
  %1532 = vmatprep.subr.bf16.mxu0 0
  %1533 = vmatpush1.bf16.msra.mxu0 %v662
  %1534 = vmatprep.subr.bf16.mxu0 0
  %1535 = vmatpush2.bf16.msra.mxu0 0
  %1536 = vmatprep.subr.bf16.mxu0 0
  %1537 = vmatpush2.bf16.msra.mxu0 0
  %1538 = vmatprep.subr.bf16.mxu0 0
  %1539 = vmatpush2.bf16.msra.mxu0 0
  %1540 = vmatprep.subr.bf16.mxu0 0
  %1541 = vmatpush2.bf16.msra.mxu0 0
  %1542 = vmatprep.subr.bf16.mxu0 0
  %1543 = vmatpush2.bf16.msra.mxu0 0
  %1544 = vmatprep.subr.bf16.mxu0 0
  %1545 = vmatpush2.bf16.msra.mxu0 0
  %1546 = vmatprep.subr.bf16.mxu0 0
  %1547 = vmatpush2.bf16.msra.mxu0 0
  %1548 = vmatprep.subr.bf16.mxu0 0
  %1549 = vmatpush2.bf16.msra.mxu0 0
  %1550 = vmatprep.mubr.bf16.mxu0 0
  %1551 = vmatmul.mubr.bf16.gmra.mxu0 %v1516
  %v1552 = vpop.f32.mrf.mxu0
  %v1553 = vadd.f32 0.0, %v1552
  %v1554 = vpop.f32.mrf.mxu0
  %v1555 = vpop.f32.mrf.mxu0
  %v1556 = vpop.f32.mrf.mxu0
  %1557 = vdwg.mxu0
  %v1558 = vadd.f32 %v1335, %v1553
  %1559 = vrot.lane.b32.xlu0 %v919, 80
  %v1560 = vpop.permute.xlu0 %1559
  %v1561 = vsel %vm54, %v1560, 0
  %1563 = vmatprep.subr.mxu0 0.0
  %1564 = vmatpush1.xpose.msra.mxu0 0.0
  %1565 = vmatprep.subr.mxu0 0.0
  %1566 = vmatpush1.xpose.msra.mxu0 0.0
  %1567 = vmatprep.subr.mxu0 0.0
  %1568 = vmatpush1.xpose.msra.mxu0 0.0
  %1569 = vmatprep.subr.mxu0 0.0
  %1570 = vmatpush1.xpose.msra.mxu0 0.0
  %1571 = vmatprep.subr.mxu0 0.0
  %1572 = vmatpush1.xpose.msra.mxu0 0.0
  %1573 = vmatprep.subr.mxu0 0.0
  %1574 = vmatpush1.xpose.msra.mxu0 0.0
  %1575 = vmatprep.subr.mxu0 0.0
  %1576 = vmatpush1.xpose.msra.mxu0 0.0
  %1577 = vmatprep.subr.mxu0 0.0
  %1578 = vmatpush1.xpose.msra.mxu0 0.0
  %1579 = vmatprep.subr.mxu0 0.0
  %1580 = vmatpush1.xpose.msra.mxu0 0.0
  %1581 = vmatprep.subr.mxu0 0.0
  %1582 = vmatpush1.xpose.msra.mxu0 0.0
  %1583 = vmatprep.subr.mxu0 0.0
  %1584 = vmatpush1.xpose.msra.mxu0 0.0
  %1585 = vmatprep.subr.mxu0 0.0
  %1586 = vmatpush1.xpose.msra.mxu0 0.0
  %1587 = vmatprep.subr.mxu0 0.0
  %1588 = vmatpush1.xpose.msra.mxu0 0.0
  %1589 = vmatprep.subr.mxu0 0.0
  %1590 = vmatpush1.xpose.msra.mxu0 0.0
  %1591 = vmatprep.subr.mxu0 0.0
  %1592 = vmatpush1.xpose.msra.mxu0 %v1350
  %1593 = vmatprep.subr.mxu0 0.0
  %1594 = vmatpush1.xpose.msra.mxu0 %v1348
  %1595 = vmatprep.subr.mxu0 0.0
  %1596 = vmatpush2.xpose.msra.mxu0 0.0
  %1597 = vmatprep.subr.mxu0 0.0
  %1598 = vmatpush2.xpose.msra.mxu0 0.0
  %1599 = vmatprep.subr.mxu0 0.0
  %1600 = vmatpush2.xpose.msra.mxu0 0.0
  %1601 = vmatprep.subr.mxu0 0.0
  %1602 = vmatpush2.xpose.msra.mxu0 0.0
  %1603 = vmatprep.subr.mxu0 0.0
  %1604 = vmatpush2.xpose.msra.mxu0 0.0
  %1605 = vmatprep.subr.mxu0 0.0
  %1606 = vmatpush2.xpose.msra.mxu0 0.0
  %1607 = vmatprep.subr.mxu0 0.0
  %1608 = vmatpush2.xpose.msra.mxu0 0.0
  %1609 = vmatprep.subr.mxu0 0.0
  %1610 = vmatpush2.xpose.msra.mxu0 0.0
  %1611 = vmatprep.subr.mxu0 0.0
  %1612 = vmatpush2.xpose.msra.mxu0 0.0
  %1613 = vmatprep.subr.mxu0 0.0
  %1614 = vmatpush2.xpose.msra.mxu0 0.0
  %1615 = vmatprep.subr.mxu0 0.0
  %1616 = vmatpush2.xpose.msra.mxu0 0.0
  %1617 = vmatprep.subr.mxu0 0.0
  %1618 = vmatpush2.xpose.msra.mxu0 0.0
  %1619 = vmatprep.subr.mxu0 0.0
  %1620 = vmatpush2.xpose.msra.mxu0 0.0
  %1621 = vmatprep.subr.mxu0 0.0
  %1622 = vmatpush2.xpose.msra.mxu0 0.0
  %1623 = vmatprep.subr.mxu0 0.0
  %1624 = vmatpush2.xpose.msra.mxu0 0.0
  %1625 = vmatprep.subr.mxu0 0.0
  %1626 = vmatpush2.xpose.msra.mxu0 0.0
  %1627 = vmatprep.mubr.f32.mxu0 0.0
  %1628 = vmatmul.mubr.f32.gmra.mxu0 %v1561
  %v1629 = vpop.f32.mrf.mxu0
  %v1630 = vadd.f32 0.0, %v1629
  %v1631 = vpop.f32.mrf.mxu0
  %1632 = vdwg.mxu0
  %v1633 = vmul.f32 %v1630, 0.25
  %v1634 = vsel %vm53, %v1633, -1e+30
  %v1635 = vsel %vm136, %v1634, -inf
  %1636 = vmax.xlane.f32.xlu0 %v1635
  %v1637 = vpop.xlane.xlu0 %1636
  %v1638 = vsub.f32 %v1634, %v1637
  %v1639 = vmul.f32 %v1638, 1.442695
  %v1640 = vpow.pop %v1639
  %v1641 = vsel %vm136, %v1640, 0.0
  %1642 = vadd.xlane.f32.xlu0 %v1641
  %v1643 = vpop.xlane.xlu0 %1642
  %v1644 = vrcp.pop %v1643
  %v1645 = vmul.f32 %v1640, %v1644
  %v1647 = vsel %vm54, %v1645, 0
  %1649 = vmatprep.subr.mxu0 0.0
  %1650 = vmatpush1.msra.mxu0 0.0
  %1651 = vmatprep.subr.mxu0 0.0
  %1652 = vmatpush1.msra.mxu0 0.0
  %1653 = vmatprep.subr.mxu0 0.0
  %1654 = vmatpush1.msra.mxu0 0.0
  %1655 = vmatprep.subr.mxu0 0.0
  %1656 = vmatpush1.msra.mxu0 0.0
  %1657 = vmatprep.subr.mxu0 0.0
  %1658 = vmatpush1.msra.mxu0 0.0
  %1659 = vmatprep.subr.mxu0 0.0
  %1660 = vmatpush1.msra.mxu0 0.0
  %1661 = vmatprep.subr.mxu0 0.0
  %1662 = vmatpush1.msra.mxu0 0.0
  %1663 = vmatprep.subr.mxu0 0.0
  %1664 = vmatpush1.msra.mxu0 0.0
  %1665 = vmatprep.subr.mxu0 0.0
  %1666 = vmatpush1.msra.mxu0 0.0
  %1667 = vmatprep.subr.mxu0 0.0
  %1668 = vmatpush1.msra.mxu0 0.0
  %1669 = vmatprep.subr.mxu0 0.0
  %1670 = vmatpush1.msra.mxu0 0.0
  %1671 = vmatprep.subr.mxu0 0.0
  %1672 = vmatpush1.msra.mxu0 0.0
  %1673 = vmatprep.subr.mxu0 0.0
  %1674 = vmatpush1.msra.mxu0 0.0
  %1675 = vmatprep.subr.mxu0 0.0
  %1676 = vmatpush1.msra.mxu0 0.0
  %1677 = vmatprep.subr.mxu0 0.0
  %1678 = vmatpush1.msra.mxu0 %v1438
  %1679 = vmatprep.subr.mxu0 0.0
  %1680 = vmatpush1.msra.mxu0 %v1436
  %1681 = vmatprep.subr.mxu0 0.0
  %1682 = vmatpush2.msra.mxu0 0.0
  %1683 = vmatprep.subr.mxu0 0.0
  %1684 = vmatpush2.msra.mxu0 0.0
  %1685 = vmatprep.subr.mxu0 0.0
  %1686 = vmatpush2.msra.mxu0 0.0
  %1687 = vmatprep.subr.mxu0 0.0
  %1688 = vmatpush2.msra.mxu0 0.0
  %1689 = vmatprep.subr.mxu0 0.0
  %1690 = vmatpush2.msra.mxu0 0.0
  %1691 = vmatprep.subr.mxu0 0.0
  %1692 = vmatpush2.msra.mxu0 0.0
  %1693 = vmatprep.subr.mxu0 0.0
  %1694 = vmatpush2.msra.mxu0 0.0
  %1695 = vmatprep.subr.mxu0 0.0
  %1696 = vmatpush2.msra.mxu0 0.0
  %1697 = vmatprep.subr.mxu0 0.0
  %1698 = vmatpush2.msra.mxu0 0.0
  %1699 = vmatprep.subr.mxu0 0.0
  %1700 = vmatpush2.msra.mxu0 0.0
  %1701 = vmatprep.subr.mxu0 0.0
  %1702 = vmatpush2.msra.mxu0 0.0
  %1703 = vmatprep.subr.mxu0 0.0
  %1704 = vmatpush2.msra.mxu0 0.0
  %1705 = vmatprep.subr.mxu0 0.0
  %1706 = vmatpush2.msra.mxu0 0.0
  %1707 = vmatprep.subr.mxu0 0.0
  %1708 = vmatpush2.msra.mxu0 0.0
  %1709 = vmatprep.subr.mxu0 0.0
  %1710 = vmatpush2.msra.mxu0 0.0
  %1711 = vmatprep.subr.mxu0 0.0
  %1712 = vmatpush2.msra.mxu0 0.0
  %1713 = vmatprep.mubr.f32.mxu0 0.0
  %1714 = vmatmul.mubr.f32.gmra.mxu0 %v1647
  %v1715 = vpop.f32.mrf.mxu0
  %v1716 = vadd.f32 0.0, %v1715
  %v1717 = vpop.f32.mrf.mxu0
  %1718 = vdwg.mxu0
  %v1719 = vpack.c.bf16 %v1716, %v1716
  %v1721 = vsel %vm54, %v1719, 0
  %1723 = vmatprep.subr.bf16.mxu0 0
  %1724 = vmatpush1.bf16.msra.mxu0 0
  %1725 = vmatprep.subr.bf16.mxu0 0
  %1726 = vmatpush1.bf16.msra.mxu0 0
  %1727 = vmatprep.subr.bf16.mxu0 0
  %1728 = vmatpush1.bf16.msra.mxu0 0
  %1729 = vmatprep.subr.bf16.mxu0 0
  %1730 = vmatpush1.bf16.msra.mxu0 0
  %1731 = vmatprep.subr.bf16.mxu0 0
  %1732 = vmatpush1.bf16.msra.mxu0 0
  %1733 = vmatprep.subr.bf16.mxu0 0
  %1734 = vmatpush1.bf16.msra.mxu0 0
  %1735 = vmatprep.subr.bf16.mxu0 0
  %1736 = vmatpush1.bf16.msra.mxu0 0
  %1737 = vmatprep.subr.bf16.mxu0 0
  %1738 = vmatpush1.bf16.msra.mxu0 %v873
  %1739 = vmatprep.subr.bf16.mxu0 0
  %1740 = vmatpush2.bf16.msra.mxu0 0
  %1741 = vmatprep.subr.bf16.mxu0 0
  %1742 = vmatpush2.bf16.msra.mxu0 0
  %1743 = vmatprep.subr.bf16.mxu0 0
  %1744 = vmatpush2.bf16.msra.mxu0 0
  %1745 = vmatprep.subr.bf16.mxu0 0
  %1746 = vmatpush2.bf16.msra.mxu0 0
  %1747 = vmatprep.subr.bf16.mxu0 0
  %1748 = vmatpush2.bf16.msra.mxu0 0
  %1749 = vmatprep.subr.bf16.mxu0 0
  %1750 = vmatpush2.bf16.msra.mxu0 0
  %1751 = vmatprep.subr.bf16.mxu0 0
  %1752 = vmatpush2.bf16.msra.mxu0 0
  %1753 = vmatprep.subr.bf16.mxu0 0
  %1754 = vmatpush2.bf16.msra.mxu0 0
  %1755 = vmatprep.mubr.bf16.mxu0 0
  %1756 = vmatmul.mubr.bf16.gmra.mxu0 %v1721
  %v1757 = vpop.f32.mrf.mxu0
  %v1758 = vadd.f32 0.0, %v1757
  %v1759 = vpop.f32.mrf.mxu0
  %v1760 = vpop.f32.mrf.mxu0
  %v1761 = vpop.f32.mrf.mxu0
  %1762 = vdwg.mxu0
  %v1763 = vadd.f32 %v1558, %v1758
  %v1765 = vrot.slane %v1763, 7
  %vm1767 = vcmask 1040384
  %v1768 = vsel %vm1767, %v918, %v1765
  %v1769 = vadd.f32 %v36, %v1768
  %v1770 = vld [vmem:[%s6] sm:$0x1]
  %v1771 = vmul.f32 %v1769, %v1769
  %vm1772 = vcmask 517120
  %v1773 = vsel %vm1772, %v1771, 0.0
  %1774 = vadd.xlane.f32.xlu0 %v1773
  %v1775 = vpop.xlane.xlu0 %1774
  %v1776 = vrcp.pop 64.0
  %v1777 = vmul.f32 %v1775, %v1776
  %v1778 = vadd.f32 %v1777, 1e-05
  %v1779 = vrsqrt.pop %v1778
  %v1780 = vmul.f32 %v1769, %v1779
  %v1782 = vlaneseq
  %v1783 = vshrl.u32 %v1782, 7
  %v1784 = vsub.s32 0, %v1783
  %v1785 = vrot.slane %v1770, %v1784
  %v1787 = vmul.f32 %v1780, %v1785
  %v1788 = vpack.c.bf16 %v1787, %v1787
  %v1789 = vld [vmem:[%s7] sm:$0xff]
  %v1790 = vld [vmem:[%s7 + $0x8] sm:$0xff]
  %v1791 = vld [vmem:[%s7 + $0x10] sm:$0xff]
  %v1792 = vld [vmem:[%s7 + $0x18] sm:$0xff]
  %v1793 = vld [vmem:[%s7 + $0x20] sm:$0xff]
  %v1794 = vld [vmem:[%s7 + $0x28] sm:$0xff]
  %v1795 = vld [vmem:[%s7 + $0x30] sm:$0xff]
  %v1796 = vld [vmem:[%s7 + $0x38] sm:$0xff]
  %v1805 = vunpack.c.l.b16 %v1789
  %v1806 = vunpack.c.h.b16 %v1789
  %v1807 = vunpack.c.l.b16 %v1790
  %v1808 = vunpack.c.h.b16 %v1790
  %v1809 = vunpack.c.l.b16 %v1791
  %v1810 = vunpack.c.h.b16 %v1791
  %v1811 = vunpack.c.l.b16 %v1792
  %v1812 = vunpack.c.h.b16 %v1792
  %v1813 = vunpack.c.l.b16 %v1793
  %v1814 = vunpack.c.h.b16 %v1793
  %v1815 = vunpack.c.l.b16 %v1794
  %v1816 = vunpack.c.h.b16 %v1794
  %v1817 = vunpack.c.l.b16 %v1795
  %v1818 = vunpack.c.h.b16 %v1795
  %v1819 = vunpack.c.l.b16 %v1796
  %v1820 = vunpack.c.h.b16 %v1796
  %v1821 = vpack.c.b16 %v1807, %v1805
  %v1822 = vpack.c.b16 %v1808, %v1806
  %v1823 = vpack.c.b16 %v1811, %v1809
  %v1824 = vpack.c.b16 %v1812, %v1810
  %v1825 = vpack.c.b16 %v1815, %v1813
  %v1826 = vpack.c.b16 %v1816, %v1814
  %v1827 = vpack.c.b16 %v1819, %v1817
  %v1828 = vpack.c.b16 %v1820, %v1818
  %vm1837 = vcmask 523264
  %v1839 = vsel %vm1837, %v1788, 0
  %1841 = vmatprep.subr.bf16.mxu0 0
  %1842 = vmatpush1.bf16.msra.mxu0 0
  %1843 = vmatprep.subr.bf16.mxu0 0
  %1844 = vmatpush1.bf16.msra.mxu0 0
  %1845 = vmatprep.subr.bf16.mxu0 0
  %1846 = vmatpush1.bf16.msra.mxu0 0
  %1847 = vmatprep.subr.bf16.mxu0 0
  %1848 = vmatpush1.bf16.msra.mxu0 0
  %1849 = vmatprep.subr.bf16.mxu0 %v1828
  %1850 = vmatpush1.bf16.msra.mxu0 %v1827
  %1851 = vmatprep.subr.bf16.mxu0 %v1826
  %1852 = vmatpush1.bf16.msra.mxu0 %v1825
  %1853 = vmatprep.subr.bf16.mxu0 %v1824
  %1854 = vmatpush1.bf16.msra.mxu0 %v1823
  %1855 = vmatprep.subr.bf16.mxu0 %v1822
  %1856 = vmatpush1.bf16.msra.mxu0 %v1821
  %1857 = vmatprep.subr.bf16.mxu0 0
  %1858 = vmatpush2.bf16.msra.mxu0 0
  %1859 = vmatprep.subr.bf16.mxu0 0
  %1860 = vmatpush2.bf16.msra.mxu0 0
  %1861 = vmatprep.subr.bf16.mxu0 0
  %1862 = vmatpush2.bf16.msra.mxu0 0
  %1863 = vmatprep.subr.bf16.mxu0 0
  %1864 = vmatpush2.bf16.msra.mxu0 0
  %1865 = vmatprep.subr.bf16.mxu0 0
  %1866 = vmatpush2.bf16.msra.mxu0 0
  %1867 = vmatprep.subr.bf16.mxu0 0
  %1868 = vmatpush2.bf16.msra.mxu0 0
  %1869 = vmatprep.subr.bf16.mxu0 0
  %1870 = vmatpush2.bf16.msra.mxu0 0
  %1871 = vmatprep.subr.bf16.mxu0 0
  %1872 = vmatpush2.bf16.msra.mxu0 0
  %1873 = vmatprep.mubr.bf16.mxu0 0
  %1874 = vmatmul.mubr.bf16.gmra.mxu0 %v1839
  %v1875 = vpop.f32.mrf.mxu0
  %v1876 = vadd.f32 0.0, %v1875
  %v1877 = vpop.f32.mrf.mxu0
  %v1878 = vadd.f32 0.0, %v1877
  %v1879 = vpop.f32.mrf.mxu0
  %v1880 = vpop.f32.mrf.mxu0
  %1881 = vdwg.mxu0
  %v1882 = vld [vmem:[%s8] sm:$0xff]
  %v1883 = vld [vmem:[%s8 + $0x8] sm:$0xff]
  %v1884 = vld [vmem:[%s8 + $0x10] sm:$0xff]
  %v1885 = vld [vmem:[%s8 + $0x18] sm:$0xff]
  %v1886 = vld [vmem:[%s8 + $0x20] sm:$0xff]
  %v1887 = vld [vmem:[%s8 + $0x28] sm:$0xff]
  %v1888 = vld [vmem:[%s8 + $0x30] sm:$0xff]
  %v1889 = vld [vmem:[%s8 + $0x38] sm:$0xff]
  %v1898 = vunpack.c.l.b16 %v1882
  %v1899 = vunpack.c.h.b16 %v1882
  %v1900 = vunpack.c.l.b16 %v1883
  %v1901 = vunpack.c.h.b16 %v1883
  %v1902 = vunpack.c.l.b16 %v1884
  %v1903 = vunpack.c.h.b16 %v1884
  %v1904 = vunpack.c.l.b16 %v1885
  %v1905 = vunpack.c.h.b16 %v1885
  %v1906 = vunpack.c.l.b16 %v1886
  %v1907 = vunpack.c.h.b16 %v1886
  %v1908 = vunpack.c.l.b16 %v1887
  %v1909 = vunpack.c.h.b16 %v1887
  %v1910 = vunpack.c.l.b16 %v1888
  %v1911 = vunpack.c.h.b16 %v1888
  %v1912 = vunpack.c.l.b16 %v1889
  %v1913 = vunpack.c.h.b16 %v1889
  %v1914 = vpack.c.b16 %v1900, %v1898
  %v1915 = vpack.c.b16 %v1901, %v1899
  %v1916 = vpack.c.b16 %v1904, %v1902
  %v1917 = vpack.c.b16 %v1905, %v1903
  %v1918 = vpack.c.b16 %v1908, %v1906
  %v1919 = vpack.c.b16 %v1909, %v1907
  %v1920 = vpack.c.b16 %v1912, %v1910
  %v1921 = vpack.c.b16 %v1913, %v1911
  %1930 = vmatprep.subr.bf16.mxu0 0
  %1931 = vmatpush1.bf16.msra.mxu0 0
  %1932 = vmatprep.subr.bf16.mxu0 0
  %1933 = vmatpush1.bf16.msra.mxu0 0
  %1934 = vmatprep.subr.bf16.mxu0 0
  %1935 = vmatpush1.bf16.msra.mxu0 0
  %1936 = vmatprep.subr.bf16.mxu0 0
  %1937 = vmatpush1.bf16.msra.mxu0 0
  %1938 = vmatprep.subr.bf16.mxu0 %v1921
  %1939 = vmatpush1.bf16.msra.mxu0 %v1920
  %1940 = vmatprep.subr.bf16.mxu0 %v1919
  %1941 = vmatpush1.bf16.msra.mxu0 %v1918
  %1942 = vmatprep.subr.bf16.mxu0 %v1917
  %1943 = vmatpush1.bf16.msra.mxu0 %v1916
  %1944 = vmatprep.subr.bf16.mxu0 %v1915
  %1945 = vmatpush1.bf16.msra.mxu0 %v1914
  %1946 = vmatprep.subr.bf16.mxu0 0
  %1947 = vmatpush2.bf16.msra.mxu0 0
  %1948 = vmatprep.subr.bf16.mxu0 0
  %1949 = vmatpush2.bf16.msra.mxu0 0
  %1950 = vmatprep.subr.bf16.mxu0 0
  %1951 = vmatpush2.bf16.msra.mxu0 0
  %1952 = vmatprep.subr.bf16.mxu0 0
  %1953 = vmatpush2.bf16.msra.mxu0 0
  %1954 = vmatprep.subr.bf16.mxu0 0
  %1955 = vmatpush2.bf16.msra.mxu0 0
  %1956 = vmatprep.subr.bf16.mxu0 0
  %1957 = vmatpush2.bf16.msra.mxu0 0
  %1958 = vmatprep.subr.bf16.mxu0 0
  %1959 = vmatpush2.bf16.msra.mxu0 0
  %1960 = vmatprep.subr.bf16.mxu0 0
  %1961 = vmatpush2.bf16.msra.mxu0 0
  %1962 = vmatprep.mubr.bf16.mxu0 0
  %1963 = vmatmul.mubr.bf16.gmra.mxu0 %v1839
  %v1964 = vpop.f32.mrf.mxu0
  %v1965 = vadd.f32 0.0, %v1964
  %v1966 = vpop.f32.mrf.mxu0
  %v1967 = vadd.f32 0.0, %v1966
  %v1968 = vpop.f32.mrf.mxu0
  %v1969 = vpop.f32.mrf.mxu0
  %1970 = vdwg.mxu0
  %v1971 = vsub.f32 0.0, %v1876
  %v1972 = vsub.f32 0.0, %v1878
  %v1973 = vmul.f32 %v1971, 1.442695
  %v1974 = vpow.pop %v1973
  %v1975 = vmul.f32 %v1972, 1.442695
  %v1976 = vpow.pop %v1975
  %v1977 = vadd.f32 %v1974, 1.0
  %v1978 = vadd.f32 %v1976, 1.0
  %v1979 = vrcp.pop %v1977
  %v1980 = vrcp.pop %v1978
  %v1981 = vmul.f32 %v1876, %v1979
  %v1982 = vmul.f32 %v1878, %v1980
  %v1983 = vmul.f32 %v1981, %v1965
  %v1984 = vmul.f32 %v1982, %v1967
  %v1985 = vpack.c.bf16 %v1983, %v1983
  %v1986 = vpack.c.bf16 %v1984, %v1984
  %v1987 = vld [vmem:[%s9] sm:$0xf]
  %v1988 = vld [vmem:[%s9 + $0x4] sm:$0xf]
  %v1989 = vld [vmem:[%s9 + $0x8] sm:$0xf]
  %v1990 = vld [vmem:[%s9 + $0xc] sm:$0xf]
  %v1991 = vld [vmem:[%s9 + $0x10] sm:$0xf]
  %v1992 = vld [vmem:[%s9 + $0x14] sm:$0xf]
  %v1993 = vld [vmem:[%s9 + $0x18] sm:$0xf]
  %v1994 = vld [vmem:[%s9 + $0x1c] sm:$0xf]
  %v1995 = vld [vmem:[%s9 + $0x20] sm:$0xf]
  %v1996 = vld [vmem:[%s9 + $0x24] sm:$0xf]
  %v1997 = vld [vmem:[%s9 + $0x28] sm:$0xf]
  %v1998 = vld [vmem:[%s9 + $0x2c] sm:$0xf]
  %v1999 = vld [vmem:[%s9 + $0x30] sm:$0xf]
  %v2000 = vld [vmem:[%s9 + $0x34] sm:$0xf]
  %v2001 = vld [vmem:[%s9 + $0x38] sm:$0xf]
  %v2002 = vld [vmem:[%s9 + $0x3c] sm:$0xf]
  %v2003 = vld [vmem:[%s9 + $0x40] sm:$0xf]
  %v2004 = vld [vmem:[%s9 + $0x44] sm:$0xf]
  %v2005 = vld [vmem:[%s9 + $0x48] sm:$0xf]
  %v2006 = vld [vmem:[%s9 + $0x4c] sm:$0xf]
  %v2007 = vld [vmem:[%s9 + $0x50] sm:$0xf]
  %v2008 = vld [vmem:[%s9 + $0x54] sm:$0xf]
  %v2009 = vld [vmem:[%s9 + $0x58] sm:$0xf]
  %v2010 = vld [vmem:[%s9 + $0x5c] sm:$0xf]
  %v2035 = vunpack.c.l.b16 %v1987
  %v2036 = vunpack.c.l.b16 %v1988
  %v2037 = vunpack.c.l.b16 %v1989
  %v2038 = vunpack.c.l.b16 %v1990
  %v2039 = vunpack.c.l.b16 %v1991
  %v2040 = vunpack.c.l.b16 %v1992
  %v2041 = vunpack.c.l.b16 %v1993
  %v2042 = vunpack.c.l.b16 %v1994
  %v2043 = vunpack.c.l.b16 %v1995
  %v2044 = vunpack.c.l.b16 %v1996
  %v2045 = vunpack.c.l.b16 %v1997
  %v2046 = vunpack.c.l.b16 %v1998
  %v2047 = vunpack.c.l.b16 %v1999
  %v2048 = vunpack.c.l.b16 %v2000
  %v2049 = vunpack.c.l.b16 %v2001
  %v2050 = vunpack.c.l.b16 %v2002
  %v2051 = vunpack.c.l.b16 %v2003
  %v2052 = vunpack.c.l.b16 %v2004
  %v2053 = vunpack.c.l.b16 %v2005
  %v2054 = vunpack.c.l.b16 %v2006
  %v2055 = vunpack.c.l.b16 %v2007
  %v2056 = vunpack.c.l.b16 %v2008
  %v2057 = vunpack.c.l.b16 %v2009
  %v2058 = vunpack.c.l.b16 %v2010
  %v2059 = vpack.c.b16 %v2036, %v2035
  %v2060 = vpack.c.b16 %v2038, %v2037
  %v2061 = vpack.c.b16 %v2040, %v2039
  %v2062 = vpack.c.b16 %v2042, %v2041
  %v2063 = vpack.c.b16 %v2044, %v2043
  %v2064 = vpack.c.b16 %v2046, %v2045
  %v2065 = vpack.c.b16 %v2048, %v2047
  %v2066 = vpack.c.b16 %v2050, %v2049
  %v2067 = vpack.c.b16 %v2052, %v2051
  %v2068 = vpack.c.b16 %v2054, %v2053
  %v2069 = vpack.c.b16 %v2056, %v2055
  %v2070 = vpack.c.b16 %v2058, %v2057
  %v2084 = vsel %vm1837, %v1986, 0
  %2086 = vmatprep.subr.bf16.mxu0 0
  %2087 = vmatpush1.bf16.msra.mxu0 %v2066
  %2088 = vmatprep.subr.bf16.mxu0 0
  %2089 = vmatpush1.bf16.msra.mxu0 %v2065
  %2090 = vmatprep.subr.bf16.mxu0 0
  %2091 = vmatpush1.bf16.msra.mxu0 %v2064
  %2092 = vmatprep.subr.bf16.mxu0 0
  %2093 = vmatpush1.bf16.msra.mxu0 %v2063
  %2094 = vmatprep.subr.bf16.mxu0 0
  %2095 = vmatpush1.bf16.msra.mxu0 %v2062
  %2096 = vmatprep.subr.bf16.mxu0 0
  %2097 = vmatpush1.bf16.msra.mxu0 %v2061
  %2098 = vmatprep.subr.bf16.mxu0 0
  %2099 = vmatpush1.bf16.msra.mxu0 %v2060
  %2100 = vmatprep.subr.bf16.mxu0 0
  %2101 = vmatpush1.bf16.msra.mxu0 %v2059
  %2102 = vmatprep.subr.bf16.mxu0 0
  %2103 = vmatpush2.bf16.msra.mxu0 0
  %2104 = vmatprep.subr.bf16.mxu0 0
  %2105 = vmatpush2.bf16.msra.mxu0 0
  %2106 = vmatprep.subr.bf16.mxu0 0
  %2107 = vmatpush2.bf16.msra.mxu0 0
  %2108 = vmatprep.subr.bf16.mxu0 0
  %2109 = vmatpush2.bf16.msra.mxu0 0
  %2110 = vmatprep.subr.bf16.mxu0 0
  %2111 = vmatpush2.bf16.msra.mxu0 %v2070
  %2112 = vmatprep.subr.bf16.mxu0 0
  %2113 = vmatpush2.bf16.msra.mxu0 %v2069
  %2114 = vmatprep.subr.bf16.mxu0 0
  %2115 = vmatpush2.bf16.msra.mxu0 %v2068
  %2116 = vmatprep.subr.bf16.mxu0 0
  %2117 = vmatpush2.bf16.msra.mxu0 %v2067
  %2118 = vmatprep.mubr.bf16.mxu0 %v2084
  %2119 = vmatmul.mubr.bf16.gmra.mxu0 %v1985
  %v2120 = vpop.f32.mrf.mxu0
  %v2121 = vadd.f32 0.0, %v2120
  %v2122 = vpop.f32.mrf.mxu0
  %v2123 = vpop.f32.mrf.mxu0
  %v2124 = vpop.f32.mrf.mxu0
  %2125 = vdwg.mxu0
  %v2126 = vadd.f32 %v1769, %v2121
  %2127 = vst.msk [vmem:[%s10] sm:$0x3] %vm1772, %v2126
  // Predicated region
  $region38: #{transformer_forward.6} parent=0 // pred_check
    _
  $region39: #{transformer_forward.6} parent=0 // pred_check_branch
    %2129 = sbr.rel (0) target = $region41
  $region40: #{transformer_forward.6} parent=0 // pred_region
    _
  $region41: #{transformer_forward.6} parent=0 // pred_fallthru
    _
  // Predicated region
  $region42: #{transformer_forward.6} parent=0 // pred_check
    _
  $region43: #{transformer_forward.6} parent=0 // pred_check_branch
    %2131 = sbr.rel (0) target = $region45
  $region44: #{transformer_forward.6} parent=0 // pred_region
    _
  $region45: #{transformer_forward.6} parent=0 // pred_fallthru
    _

</llo_original>
